<compile_context>
chip_gen: v7x
topology: tpu7x:2x2x1
jax: 0.10.0
libtpu: 0.0.40
codegen_flags: <defaults>
</compile_context>

<pallas_src>
import numpy as np
import jax
import jax.numpy as jnp
from jax.experimental import pallas as pl
from jax.experimental.pallas import tpu as pltpu

# ---- static problem sizes (derived from the chosen irreps) ----
D_IN = 4 + 4 * 3            # "4x0e + 4x1o" = 16
D_OUT = 4 + 4 * 3           # "4x0e + 4x1o" = 16
N_SCAL = 4                  # gate "scalars"  (SiLU)
N_GATE = 4                  # gate "gates"    (sigmoid)
N_GATED_MUL = 4             # gated "4x1o"
NODES_PER_ROW = 8           # 8 nodes * 16 features = 128 lanes
LANES = NODES_PER_ROW * D_IN            # 128


# e3nn's Gate wraps SiLU / sigmoid in normalize2mom (scale so E[f(z)^2]=1, z~N(0,1)).
# e3nn estimates the constant with a torch-seeded 1e6-sample MC draw; here we use deterministic
# 128-point Gauss-Hermite quadrature (the infinite-sample limit of the same estimator).
# TODO(synk): not bit-identical to torch's seeded MC constant (agrees to ~1e-3).
def _norm2mom_const(f):
    zs, ws = np.polynomial.hermite.hermgauss(128)
    z = np.sqrt(2.0) * zs
    second_moment = float(np.sum(ws * f(z) ** 2) / np.sqrt(np.pi))
    return float(1.0 / np.sqrt(second_moment))


_np_sigmoid = lambda z: 1.0 / (1.0 + np.exp(-z))
C_SILU = _norm2mom_const(lambda z: z * _np_sigmoid(z))
C_SIG = _norm2mom_const(_np_sigmoid)


def build_fused_constants(w0, w1, bias):
    """Fuse TP weights + gate structure into node-packed 128-lane constant matrices.

    w0: (4, 8)  0e x 0e -> 8x0e path weights (cols 0:4 scalars, 4:8 gates)
    w1: (4, 4)  1o x 0e -> 4x1o path weights
    bias: (8,)  biases for the 8 scalar (0e) outputs of the gate irreps
    Returns m_comb (128,256), e_comb (128,128), bias_row (1,256) as f32 jnp arrays.
    """
    w0 = np.asarray(w0, np.float32)
    w1 = np.asarray(w1, np.float32)
    bias = np.asarray(bias, np.float32)

    # Per-node main map A (16 out, 16 in): [4 scalar pre-acts ; 12 gated 1o comps].
    A = np.zeros((D_IN, D_IN), np.float32)
    A[0:N_SCAL, 0:N_SCAL] = w0[:, 0:N_SCAL].T
    A[N_SCAL:, N_SCAL:] = np.kron(w1.T, np.eye(3, dtype=np.float32))

    # Per-node gate-path map Gp (16 out, 16 in): rows 0:4 scalar pre-acts (for SiLU's sigmoid),
    # rows 4:8 gate pre-acts, rows 8:16 zero pad.
    Gp = np.zeros((D_IN, D_IN), np.float32)
    Gp[0:N_SCAL, 0:N_SCAL] = w0[:, 0:N_SCAL].T
    Gp[N_SCAL:N_SCAL + N_GATE, 0:N_SCAL] = w0[:, N_SCAL:N_SCAL + N_GATE].T

    # Gate-expansion ME (16 sigma-lane l, 16 out-lane c) with normalize2mom constants baked in:
    #   out c in 0:4  = y_main[c] * C_SILU * sigma(s_c)           (l = c)
    #   out c in 4:16 = y_main[c] * C_SIG  * sigma(g_w), w=(c-4)//3 (l = 4 + w)
    ME = np.zeros((D_IN, D_IN), np.float32)
    for o in range(N_SCAL):
        ME[o, o] = C_SILU
    for w in range(N_GATED_MUL):
        for k in range(3):
            ME[N_SCAL + w, N_SCAL + 3 * w + k] = C_SIG
    # Pad sigma-lanes (sigma(0)=0.5) must not leak into the output: their rows stay exactly zero.
    assert np.all(ME[N_SCAL + N_GATE:, :] == 0.0)

    I8 = np.eye(NODES_PER_ROW, dtype=np.float32)
    m_comb = np.zeros((LANES, 2 * LANES), np.float32)
    m_comb[:, 0:LANES] = np.kron(I8, A.T)
    m_comb[:, LANES:] = np.kron(I8, Gp.T)
    e_comb = np.kron(I8, ME)

    # Bias: e3nn only biases scalar (0e) irreps -> every gated / pad lane must stay exactly zero.
    b_main = np.zeros(D_IN, np.float32)
    b_main[0:N_SCAL] = bias[0:N_SCAL]
    b_gate = np.zeros(D_IN, np.float32)
    b_gate[0:N_SCAL] = bias[0:N_SCAL]
    b_gate[N_SCAL:N_SCAL + N_GATE] = bias[N_SCAL:N_SCAL + N_GATE]
    assert np.all(b_main[N_SCAL:] == 0.0) and np.all(b_gate[N_SCAL + N_GATE:] == 0.0)
    bias_row = np.concatenate([np.tile(b_main, NODES_PER_ROW),
                               np.tile(b_gate, NODES_PER_ROW)])[None, :]

    return jnp.asarray(m_comb), jnp.asarray(e_comb), jnp.asarray(bias_row)


def o3_tp_swish_gate_kernel(x_ref, m_ref, e_ref, b_ref, o_ref):
    """Node-packed, lane-dense tile.

    x: (rows, 128)  8 nodes per row, 16 features per node
    m: (128, 256)   [:, :128] main path kron(I8, A^T); [:, 128:] gate path kron(I8, Gp^T)
    e: (128, 128)   gate broadcast kron(I8, ME) with normalize2mom constants baked in
    b: (1, 256)     per-lane bias (0e irreps only), tiled over the 8 packed nodes
    o: (rows, 128)  final e3nn layout [4 scalars ; 12 gated 1o comps] per node
    """
    y = jnp.dot(x_ref[...], m_ref[...], preferred_element_type=jnp.float32) + b_ref[...]
    sig = jax.nn.sigmoid(y[:, LANES:])                       # one sigmoid: scalar + gate pre-acts
    gate = jnp.dot(sig, e_ref[...], preferred_element_type=jnp.float32)
    o_ref[...] = y[:, :LANES] * gate                         # single full unmasked store


def _choose_block_rows(n_rows, max_rows=4096, min_rows=1024, target_steps=16):
    """Rows (of 8 packed nodes each) per grid step.

    Large inputs: cap at 32K nodes/step, but keep >= ~target_steps steps so both v7x
    TensorCores stream; never below ~8K nodes/step so per-step DMA (>= ~1 MB) amortises the
    ~0.35us pipeline overhead.  Small inputs: one full-extent block.
    """
    rows = max(min_rows, min(max_rows, n_rows // target_steps))
    rows = max(8, (rows // 8) * 8)
    return n_rows if rows >= n_rows else rows


def o3_tensor_product_swish_gate(x, m_comb, e_comb, bias_row, *, block_rows=None):
    """x: (N, 16) node-major e3nn layout. Returns (N, 16) in the same layout."""
    n, d = x.shape
    assert d == D_IN
    # (N, 16) row-major is bit-identical to (N/8, 128): the repack is free (no HBM traffic).
    pad = (-n) % NODES_PER_ROW
    if pad:   # rare fallback: one small copy; the grid itself never pads to a tile multiple
        x = jnp.pad(x, ((0, pad), (0, 0)))
    n_rows = (n + pad) // NODES_PER_ROW
    x2 = x.reshape(n_rows, LANES)

    if block_rows is None:
        block_rows = _choose_block_rows(n_rows)
    if block_rows >= n_rows:
        block_rows = n_rows                      # full extent: always a legal block shape
    else:
        block_rows = max(8, (block_rows // 8) * 8)
    grid = (int(pl.cdiv(n_rows, block_rows)),)   # ragged last block allowed (writes are masked)

    block_bytes = 4 * block_rows * LANES
    const_bytes = 4 * (LANES * 2 * LANES + LANES * LANES + 2 * LANES)
    # Double-buffered in+out blocks + resident constants; clamp inside every generation's
    # scoped VMEM (16 MiB v5e default .. <=48 MiB on v7x).
    vmem_limit = int(min(max(4 * block_bytes + 2 * const_bytes + (4 << 20), 16 << 20), 48 << 20))

    cost = pl.CostEstimate(
        flops=int(n_rows * (2 * LANES * 2 * LANES + 2 * LANES * LANES + 3 * LANES)),
        transcendentals=int(n_rows * LANES),
        bytes_accessed=int(2 * 4 * n_rows * LANES + const_bytes),
    )

    out2 = pl.pallas_call(
        o3_tp_swish_gate_kernel,
        out_shape=jax.ShapeDtypeStruct((n_rows, LANES), jnp.float32),
        grid=grid,
        in_specs=[
            pl.BlockSpec((block_rows, LANES), lambda i: (i, 0)),      # packed node block
            pl.BlockSpec((LANES, 2 * LANES), lambda i: (0, 0)),       # fused weights (resident)
            pl.BlockSpec((LANES, LANES), lambda i: (0, 0)),           # gate expansion (resident)
            pl.BlockSpec((1, 2 * LANES), lambda i: (0, 0)),           # bias (resident)
        ],
        out_specs=pl.BlockSpec((block_rows, LANES), lambda i: (i, 0)),
        compiler_params=pltpu.CompilerParams(
            dimension_semantics=("parallel",),
            vmem_limit_bytes=vmem_limit,
        ),
        cost_estimate=cost,
    )(x2, m_comb, e_comb, bias_row)

    out = out2.reshape(n_rows * NODES_PER_ROW, D_OUT)
    return out[:n] if pad else out


def reference_np(x, w0, w1, bias):
    """Float64 numpy reference of the same forward semantics (no XLA matmul-precision ambiguity)."""
    x = np.asarray(x, np.float64)
    w0 = np.asarray(w0, np.float64)
    w1 = np.asarray(w1, np.float64)
    bias = np.asarray(bias, np.float64)
    xs, xv = x[:, :N_SCAL], x[:, N_SCAL:].reshape(-1, N_GATED_MUL, 3)
    ys = xs @ w0 + bias                                    # (N, 8) scalar + gate pre-acts
    yv = np.einsum("nuk,uw->nwk", xv, w1)                  # (N, 4, 3)
    s_act = C_SILU * ys[:, :N_SCAL] * _np_sigmoid(ys[:, :N_SCAL])
    g_act = C_SIG * _np_sigmoid(ys[:, N_SCAL:N_SCAL + N_GATE])
    gated = yv * g_act[:, :, None]
    return np.concatenate([s_act, gated.reshape(-1, 3 * N_GATED_MUL)], axis=-1)


if __name__ == "__main__":
    key = jax.random.PRNGKey(0)
    k1, k2, k3 = jax.random.split(key, 3)

    # Small graph: 20_000 nodes (multiple of 8 -> zero-copy repack), 16 features each.
    # Values are snapped to bf16-representable floats so the correctness check is independent
    # of the MXU's f32 pass-precision mode (products are then exact in f32 on any generation).
    N = 20_000
    x = jax.random.normal(k1, (N, D_IN), jnp.float32).astype(jnp.bfloat16).astype(jnp.float32)

    # Tensor-product path weights, 'uvw' path shapes (mul1, mul2=1, mul_out):
    #   0e x 0e -> 0e : (4, 1, 8)   ;   1o x 0e -> 1o : (4, 1, 4)
    # Synthetic kaiming-uniform-style init (fan_in = mul1*mul2 = 4); module inits 0e biases to 0.
    bound = float(np.sqrt(3.0 / 4.0))
    w0 = jax.random.uniform(k2, (4, 8), jnp.float32, -bound, bound)
    w0 = w0.astype(jnp.bfloat16).astype(jnp.float32)       # cols 0:4 -> scalars, 4:8 -> gates
    w1 = jax.random.uniform(k3, (4, 4), jnp.float32, -bound, bound)
    w1 = w1.astype(jnp.bfloat16).astype(jnp.float32)
    bias = jnp.zeros((8,), jnp.float32)

    m_comb, e_comb, bias_row = build_fused_constants(w0, w1, bias)

    fwd = jax.jit(lambda xx: o3_tensor_product_swish_gate(xx, m_comb, e_comb, bias_row))
    out = jax.block_until_ready(fwd(x))

    ref = reference_np(x, w0, w1, bias)
    assert out.shape == (N, D_OUT)
    err = float(np.max(np.abs(np.asarray(out, np.float64) - ref)))
    assert err < 2e-4, f"kernel vs float64 reference mismatch: max abs err {err}"
    print("KERNEL_OK")
</pallas_src>

<mosaic_0001>
module attributes {stable_mosaic.version = 11 : i64} {
  func.func @o3_tp_swish_gate_kernel(%arg0: i32, %arg1: memref<1024x128xf32, #tpu.memory_space<vmem>>, %arg2: memref<128x256xf32, #tpu.memory_space<vmem>>, %arg3: memref<128x128xf32, #tpu.memory_space<vmem>>, %arg4: memref<1x256xf32, #tpu.memory_space<vmem>>, %arg5: memref<1024x128xf32, #tpu.memory_space<vmem>>) attributes {dimension_semantics = [#tpu.dimension_semantics<parallel>], iteration_bounds = array<i64: 3>, scalar_prefetch = 0 : i64, scratch_operands = 0 : i64, tpu.core_type = #tpu.core_type<tc>, window_params = [{transform_indices = @transform_0, window_bounds = array<i64: 1024, 128>}, {pipeline_mode = #tpu.pipeline_mode<synchronous>, transform_indices = @transform_1, window_bounds = array<i64: 128, 256>}, {pipeline_mode = #tpu.pipeline_mode<synchronous>, transform_indices = @transform_2, window_bounds = array<i64: 128, 128>}, {pipeline_mode = #tpu.pipeline_mode<synchronous>, transform_indices = @transform_3, window_bounds = array<i64: 1, 256>}, {transform_indices = @transform_4, window_bounds = array<i64: 1024, 128>}]} {
    %c0 = arith.constant 0 : index
    %c0_0 = arith.constant 0 : index
    %0 = vector.load %arg1[%c0, %c0_0] : memref<1024x128xf32, #tpu.memory_space<vmem>>, vector<1024x128xf32>
    %c0_1 = arith.constant 0 : index
    %c0_2 = arith.constant 0 : index
    %1 = vector.load %arg2[%c0_1, %c0_2] : memref<128x256xf32, #tpu.memory_space<vmem>>, vector<128x256xf32>
    %cst = arith.constant dense<0.000000e+00> : vector<1024x256xf32>
    %2 = tpu.matmul %0, %1, %cst {dimension_numbers = #tpu.dot_dimension_numbers<[1], [0], [0], [1], [0, 0, 1, 1], [], []>} : vector<1024x128xf32>, vector<128x256xf32>, vector<1024x256xf32> -> vector<1024x256xf32>
    %c0_3 = arith.constant 0 : index
    %c0_4 = arith.constant 0 : index
    %3 = vector.load %arg4[%c0_3, %c0_4] : memref<1x256xf32, #tpu.memory_space<vmem>>, vector<1x256xf32>
    %4 = vector.broadcast %3 : vector<1x256xf32> to vector<1024x256xf32>
    %5 = arith.addf %2, %4 : vector<1024x256xf32>
    %6 = vector.extract_strided_slice %5 {offsets = [0, 128], sizes = [1024, 128], strides = [1, 1]} : vector<1024x256xf32> to vector<1024x128xf32>
    %7 = arith.negf %6 : vector<1024x128xf32>
    %8 = math.exp %7 : vector<1024x128xf32>
    %cst_5 = arith.constant 1.000000e+00 : f32
    %9 = vector.broadcast %cst_5 : f32 to vector<1024x128xf32>
    %10 = arith.addf %9, %8 : vector<1024x128xf32>
    %11 = arith.divf %9, %10 : vector<1024x128xf32>
    %c0_6 = arith.constant 0 : index
    %c0_7 = arith.constant 0 : index
    %12 = vector.load %arg3[%c0_6, %c0_7] : memref<128x128xf32, #tpu.memory_space<vmem>>, vector<128x128xf32>
    %cst_8 = arith.constant dense<0.000000e+00> : vector<1024x128xf32>
    %13 = tpu.matmul %11, %12, %cst_8 {dimension_numbers = #tpu.dot_dimension_numbers<[1], [0], [0], [1], [0, 0, 1, 1], [], []>} : vector<1024x128xf32>, vector<128x128xf32>, vector<1024x128xf32> -> vector<1024x128xf32>
    %14 = vector.extract_strided_slice %5 {offsets = [0, 0], sizes = [1024, 128], strides = [1, 1]} : vector<1024x256xf32> to vector<1024x128xf32>
    %15 = arith.mulf %14, %13 : vector<1024x128xf32>
    %c0_9 = arith.constant 0 : index
    %c0_10 = arith.constant 0 : index
    %16 = vector.load %arg5[%c0_9, %c0_10] : memref<1024x128xf32, #tpu.memory_space<vmem>>, vector<1024x128xf32>
    tpu.vector_store %arg5[%c0_9, %c0_10], %15 {strides = array<i32>} : memref<1024x128xf32, #tpu.memory_space<vmem>>, vector<1024x128xf32>,
    return
  }
  func.func @transform_0(%arg0: i32) -> (i32, i32) {
    %c0_i32 = arith.constant 0 : i32
    %c0_i32_0 = arith.constant 0 : i32
    return %arg0, %c0_i32 : i32, i32
  }
  func.func @transform_1(%arg0: i32) -> (i32, i32) {
    %c0_i32 = arith.constant 0 : i32
    %c0_i32_0 = arith.constant 0 : i32
    %c0_i32_1 = arith.constant 0 : i32
    return %c0_i32, %c0_i32_0 : i32, i32
  }
  func.func @transform_2(%arg0: i32) -> (i32, i32) {
    %c0_i32 = arith.constant 0 : i32
    %c0_i32_0 = arith.constant 0 : i32
    %c0_i32_1 = arith.constant 0 : i32
    return %c0_i32, %c0_i32_0 : i32, i32
  }
  func.func @transform_3(%arg0: i32) -> (i32, i32) {
    %c0_i32 = arith.constant 0 : i32
    %c0_i32_0 = arith.constant 0 : i32
    %c0_i32_1 = arith.constant 0 : i32
    return %c0_i32, %c0_i32_0 : i32, i32
  }
  func.func @transform_4(%arg0: i32) -> (i32, i32) {
    %c0_i32 = arith.constant 0 : i32
    %c0_i32_0 = arith.constant 0 : i32
    return %arg0, %c0_i32 : i32, i32
  }
}

</mosaic_0001>

<llo_original>
// kernel: _lambda_.1
$region0: #{_lambda_.1}
  #allocation0 [shape = 'u32[]', space=smem, size = 0x4, offset = 0x4, fixed_abs, tag = 'smem constant byte address 0x4 - core index']
  #allocation1 [shape = 'u32[144,128]{1,0:T(1,128)}', space=vmem, size = 0x12000, scoped, tag = 'internal scratch']
  %s0 = inlined_call_operand.vmem [shape: f32[2500,128], index: 0, kind: input, shape index: {}]
  %s1 = inlined_call_operand.vmem [shape: f32[128,256], index: 1, kind: input, shape index: {}]
  %s2 = inlined_call_operand.vmem [shape: f32[128,128], index: 2, kind: input, shape index: {}]
  %s3 = inlined_call_operand.vmem [shape: f32[1,256], index: 3, kind: input, shape index: {}]
  %s4 = inlined_call_operand.vmem [shape: f32[2500,128], index: 4, kind: output, shape index: {}]
  %s5 = sld [smem:[#allocation0]]
  $region97: #{_lambda_.1} parent=0
    _
  %s7 = ssub.s32 1, %s5
  %s8 = scalar_select 0, %s7, %s5
  $region1: #{_lambda_.1} parent=0
    #allocation2 [shape = 'u8[1048576]{0}', space=vmem, size = 0x100000, scoped, tag = 'output window, operand 0']
    loop: start=0, step=1, limit=5
    $region2: #{_lambda_.1} parent=1 // loop_pre_header
      _
    $region3: #{_lambda_.1} parent=1 // loop_header
      %s10 = sphi 0, %s14
      %p11 = scmp.ge.s32.totalorder %s10, 5
      %s20 = sphi 0, %s22
      %s23 = sphi 0, %s20
      %s24 = sphi 0, %s23
      %s40 = sphi 0, %s24
      %s44 = sphi 0, %s44
      %s46 = sphi 0, %s44
      %s47 = sphi 0, %s46
      %s61 = sphi 0, %s47
      %s65 = sphi 0, %s65
      %s67 = sphi 0, %s65
      %s68 = sphi 0, %s67
      %s82 = sphi 0, %s68
      %s86 = sphi 0, %s86
      %s88 = sphi 0, %s86
      %s89 = sphi 0, %s88
      %s103 = sphi 0, %s89
      %s109 = sphi 0, %s111
      %s112 = sphi 0, %s109
      %s113 = sphi 0, %s112
      %s129 = sphi 0, %s113
    $region4: #{_lambda_.1} parent=1 // loop_header_branch
      %13 = sbr.rel (%p11) target = $region8
    $region5: #{_lambda_.1} parent=1 // loop_body
      %s15 = ssub.s32 %s10, 1
      %s16 = ssub.s32 %s10, 2
      %s17 = sadd.s32 %s10, 1
      %s18 = ssub.s32 %s10, %s17
      %p19 = scmp.eq.s32.totalorder %s18, 0
      %s21 = sadd.s32 %s20, 1
      %s22 = scalar_select %p19, %s20, %s21
      %p25 = pneg %p19
      %p26 = scmp.eq.s32.totalorder %s10, 2
      %p27 = por %p25, %p26
      %p28 = scmp.ne.s32.totalorder %s20, %s23
      %p29 = scmp.eq.s32.totalorder %s10, 0
      %p30 = por %p28, %p29
      %p31 = scmp.ne.s32.totalorder %s20, %s23
      %p32 = scmp.eq.s32.totalorder %s15, 2
      %p33 = por %p31, %p32
      %p34 = scmp.ne.s32.totalorder %s23, %s24
      %p35 = scmp.eq.s32.totalorder %s15, 0
      %p36 = por %p34, %p35
      %p37 = scmp.ne.s32.totalorder %s23, %s24
      %p38 = scmp.eq.s32.totalorder %s16, 2
      %p39 = por %p37, %p38
      %p41 = scmp.ne.s32.totalorder %s24, %s40
      %p42 = scmp.eq.s32.totalorder %s16, 0
      %p43 = por %p41, %p42
      %s45 = sadd.s32 %s44, 1
      %p48 = scmp.eq.s32.totalorder %s10, 2
      %p49 = scmp.ne.s32.totalorder %s44, %s46
      %p50 = scmp.eq.s32.totalorder %s10, 0
      %p51 = por %p49, %p50
      %p52 = scmp.ne.s32.totalorder %s44, %s46
      %p53 = scmp.eq.s32.totalorder %s15, 2
      %p54 = por %p52, %p53
      %p55 = scmp.ne.s32.totalorder %s46, %s47
      %p56 = scmp.eq.s32.totalorder %s15, 0
      %p57 = por %p55, %p56
      %p58 = scmp.ne.s32.totalorder %s46, %s47
      %p59 = scmp.eq.s32.totalorder %s16, 2
      %p60 = por %p58, %p59
      %p62 = scmp.ne.s32.totalorder %s47, %s61
      %p63 = scmp.eq.s32.totalorder %s16, 0
      %p64 = por %p62, %p63
      %s66 = sadd.s32 %s65, 1
      %p69 = scmp.eq.s32.totalorder %s10, 2
      %p70 = scmp.ne.s32.totalorder %s65, %s67
      %p71 = scmp.eq.s32.totalorder %s10, 0
      %p72 = por %p70, %p71
      %p73 = scmp.ne.s32.totalorder %s65, %s67
      %p74 = scmp.eq.s32.totalorder %s15, 2
      %p75 = por %p73, %p74
      %p76 = scmp.ne.s32.totalorder %s67, %s68
      %p77 = scmp.eq.s32.totalorder %s15, 0
      %p78 = por %p76, %p77
      %p79 = scmp.ne.s32.totalorder %s67, %s68
      %p80 = scmp.eq.s32.totalorder %s16, 2
      %p81 = por %p79, %p80
      %p83 = scmp.ne.s32.totalorder %s68, %s82
      %p84 = scmp.eq.s32.totalorder %s16, 0
      %p85 = por %p83, %p84
      %s87 = sadd.s32 %s86, 1
      %p90 = scmp.eq.s32.totalorder %s10, 2
      %p91 = scmp.ne.s32.totalorder %s86, %s88
      %p92 = scmp.eq.s32.totalorder %s10, 0
      %p93 = por %p91, %p92
      %p94 = scmp.ne.s32.totalorder %s86, %s88
      %p95 = scmp.eq.s32.totalorder %s15, 2
      %p96 = por %p94, %p95
      %p97 = scmp.ne.s32.totalorder %s88, %s89
      %p98 = scmp.eq.s32.totalorder %s15, 0
      %p99 = por %p97, %p98
      %p100 = scmp.ne.s32.totalorder %s88, %s89
      %p101 = scmp.eq.s32.totalorder %s16, 2
      %p102 = por %p100, %p101
      %p104 = scmp.ne.s32.totalorder %s89, %s103
      %p105 = scmp.eq.s32.totalorder %s16, 0
      %p106 = por %p104, %p105
      %s107 = ssub.s32 %s10, %s17
      %p108 = scmp.eq.s32.totalorder %s107, 0
      %s110 = sadd.s32 %s109, 1
      %s111 = scalar_select %p108, %s109, %s110
      %p114 = pneg %p108
      %p115 = scmp.eq.s32.totalorder %s10, 2
      %p116 = por %p114, %p115
      %p117 = scmp.ne.s32.totalorder %s109, %s112
      %p118 = scmp.eq.s32.totalorder %s10, 0
      %p119 = por %p117, %p118
      %p120 = scmp.ne.s32.totalorder %s109, %s112
      %p121 = scmp.eq.s32.totalorder %s15, 2
      %p122 = por %p120, %p121
      %p123 = scmp.ne.s32.totalorder %s112, %s113
      %p124 = scmp.eq.s32.totalorder %s15, 0
      %p125 = por %p123, %p124
      %p126 = scmp.ne.s32.totalorder %s112, %s113
      %p127 = scmp.eq.s32.totalorder %s16, 2
      %p128 = por %p126, %p127
      %p130 = scmp.ne.s32.totalorder %s113, %s129
      %p131 = scmp.eq.s32.totalorder %s16, 0
      %p132 = por %p130, %p131
      %p133 = scmp.le.s32.totalorder 1, %s10
      %p134 = scmp.lt.s32.totalorder %s10, 4
      %p135 = pnand %p133, %p134
      %p136 = pneg %p135
      // Predicated region
      $region9: #{_lambda_.1} parent=5 // pred_check
        _
      $region10: #{_lambda_.1} parent=5 // pred_check_branch
        %138 = sbr.rel (%p135) target = $region12
      $region11: #{_lambda_.1} parent=5 // pred_region
        %s139 = ssub.s32 %s10, 1
        // Predicated region
        $region13: #{_lambda_.1} parent=11 // pred_check
          %p140 = pneg %p57
        $region14: #{_lambda_.1} parent=11 // pred_check_branch
          %142 = sbr.rel (%p140) target = $region16
        $region15: #{_lambda_.1} parent=11 // pred_region
          _
        $region16: #{_lambda_.1} parent=11 // pred_fallthru
          _
        // Predicated region
        $region17: #{_lambda_.1} parent=11 // pred_check
          %p143 = pneg %p78
        $region18: #{_lambda_.1} parent=11 // pred_check_branch
          %145 = sbr.rel (%p143) target = $region20
        $region19: #{_lambda_.1} parent=11 // pred_region
          _
        $region20: #{_lambda_.1} parent=11 // pred_fallthru
          _
        // Predicated region
        $region21: #{_lambda_.1} parent=11 // pred_check
          %p146 = pneg %p99
        $region22: #{_lambda_.1} parent=11 // pred_check_branch
          %148 = sbr.rel (%p146) target = $region24
        $region23: #{_lambda_.1} parent=11 // pred_region
          _
        $region24: #{_lambda_.1} parent=11 // pred_fallthru
          _
      $region12: #{_lambda_.1} parent=5 // pred_fallthru
        _
      %p149 = scmp.lt.s32.totalorder %s10, 3
      // Predicated region
      $region25: #{_lambda_.1} parent=5 // pred_check
        %p150 = pneg %p149
      $region26: #{_lambda_.1} parent=5 // pred_check_branch
        %152 = sbr.rel (%p150) target = $region28
      $region27: #{_lambda_.1} parent=5 // pred_region
        // Predicated region
        $region29: #{_lambda_.1} parent=27 // pred_check
          %p153 = pneg %p30
        $region30: #{_lambda_.1} parent=27 // pred_check_branch
          %155 = sbr.rel (%p153) target = $region32
        $region31: #{_lambda_.1} parent=27 // pred_region
          %s156 = smul.u32 128, %s10
          %s157 = ssub.s32 313, %s156
          %p158 = scmp.lt.s32.totalorder %s157, 128
          %s159 = scalar_select %p158, %s157, 128
          %s160 = smul.u32 128, %s159
          %p161 = scmp.lt.s32.totalorder %s156, 312
          %s162 = scalar_select %p161, %s156, 312
          %s163 = smul.addr %s162, 8
          %s164 = scalar_lea.vmem %s0, %s163
          %s165 = smul.u32 128, %s10
          %s166 = ssub.s32 313, %s165
          %p167 = scmp.lt.s32.totalorder %s166, 128
          %s168 = scalar_select %p167, %s166, 128
          %s169 = smul.u32 128, %s168
        $region32: #{_lambda_.1} parent=27 // pred_fallthru
          _
      $region28: #{_lambda_.1} parent=5 // pred_fallthru
        _
      %p170 = scmp.le.s32.totalorder 1, %s10
      %p171 = scmp.lt.s32.totalorder %s10, 4
      %p172 = pnand %p170, %p171
      %p173 = pneg %p172
      // Predicated region
      $region33: #{_lambda_.1} parent=5 // pred_check
        _
      $region34: #{_lambda_.1} parent=5 // pred_check_branch
        %175 = sbr.rel (%p172) target = $region36
      $region35: #{_lambda_.1} parent=5 // pred_region
        %s176 = ssub.s32 %s10, 1
        %s177 = smul.u32 128, %s15
        %s178 = ssub.s32 313, %s177
        %p179 = scmp.lt.s32.totalorder %s178, 128
        %s180 = scalar_select %p179, %s178, 128
        %s181 = smul.u32 128, %s180
        %p182 = scmp.lt.s32.totalorder %s177, 312
        %s183 = scalar_select %p182, %s177, 312
        %s184 = smul.addr %s183, 8
        %s185 = scalar_lea.vmem %s0, %s184
        %p186 = pneg %p36
        %p187 = pneg %p33
        %p188 = pneg %p57
        %p189 = pneg %p54
        %p190 = pneg %p78
        %p191 = pneg %p75
        %p192 = pneg %p99
        %p193 = pneg %p96
        %p194 = pneg %p125
        %p195 = pneg %p122
        %s196 = sand.u32 %s112, 1
        %s197 = sand.u32 %s112, 1
        %s198 = smul.addr %s197, 1024
        %s199 = scalar_lea.vmem [#allocation2], %s198
        %s200 = smul.u32 128, %s15
        %s201 = ssub.s32 313, %s200
        %p202 = scmp.lt.s32.totalorder %s201, 128
        %s203 = scalar_select %p202, %s201, 128
        %s204 = smul.u32 128, %s203
        %p205 = scmp.lt.s32.totalorder %s200, 312
        %s206 = scalar_select %p205, %s200, 312
        %s207 = smul.addr %s206, 8
        %s208 = scalar_lea.vmem %s0, %s207
        %s209 = smul.u32 128, %s15
        %s210 = ssub.s32 313, %s209
        %p211 = scmp.lt.s32.totalorder %s210, 128
        %s212 = scalar_select %p211, %s210, 128
        %s213 = smul.u32 128, %s212
        %s214 = smul.u32 128, %s15
        %s215 = ssub.s32 313, %s214
        %p216 = scmp.lt.s32.totalorder %s215, 128
        %s217 = scalar_select %p216, %s215, 128
        %s218 = smul.u32 128, %s217
        %v219 = vld [vmem:[%s208] sm:$0xff]
        %v220 = vld [vmem:[%s208 + $0x8] sm:$0xff]
        %v221 = vld [vmem:[%s208 + $0x10] sm:$0xff]
        %v222 = vld [vmem:[%s208 + $0x18] sm:$0xff]
        %v223 = vld [vmem:[%s208 + $0x20] sm:$0xff]
        %v224 = vld [vmem:[%s208 + $0x28] sm:$0xff]
        %v225 = vld [vmem:[%s208 + $0x30] sm:$0xff]
        %v226 = vld [vmem:[%s208 + $0x38] sm:$0xff]
        %v227 = vld [vmem:[%s208 + $0x40] sm:$0xff]
        %v228 = vld [vmem:[%s208 + $0x48] sm:$0xff]
        %v229 = vld [vmem:[%s208 + $0x50] sm:$0xff]
        %v230 = vld [vmem:[%s208 + $0x58] sm:$0xff]
        %v231 = vld [vmem:[%s208 + $0x60] sm:$0xff]
        %v232 = vld [vmem:[%s208 + $0x68] sm:$0xff]
        %v233 = vld [vmem:[%s208 + $0x70] sm:$0xff]
        %v234 = vld [vmem:[%s208 + $0x78] sm:$0xff]
        %v235 = vld [vmem:[%s208 + $0x80] sm:$0xff]
        %v236 = vld [vmem:[%s208 + $0x88] sm:$0xff]
        %v237 = vld [vmem:[%s208 + $0x90] sm:$0xff]
        %v238 = vld [vmem:[%s208 + $0x98] sm:$0xff]
        %v239 = vld [vmem:[%s208 + $0xa0] sm:$0xff]
        %v240 = vld [vmem:[%s208 + $0xa8] sm:$0xff]
        %v241 = vld [vmem:[%s208 + $0xb0] sm:$0xff]
        %v242 = vld [vmem:[%s208 + $0xb8] sm:$0xff]
        %v243 = vld [vmem:[%s208 + $0xc0] sm:$0xff]
        %v244 = vld [vmem:[%s208 + $0xc8] sm:$0xff]
        %v245 = vld [vmem:[%s208 + $0xd0] sm:$0xff]
        %v246 = vld [vmem:[%s208 + $0xd8] sm:$0xff]
        %v247 = vld [vmem:[%s208 + $0xe0] sm:$0xff]
        %v248 = vld [vmem:[%s208 + $0xe8] sm:$0xff]
        %v249 = vld [vmem:[%s208 + $0xf0] sm:$0xff]
        %v250 = vld [vmem:[%s208 + $0xf8] sm:$0xff]
        %v251 = vld [vmem:[%s208 + $0x100] sm:$0xff]
        %v252 = vld [vmem:[%s208 + $0x108] sm:$0xff]
        %v253 = vld [vmem:[%s208 + $0x110] sm:$0xff]
        %v254 = vld [vmem:[%s208 + $0x118] sm:$0xff]
        %v255 = vld [vmem:[%s208 + $0x120] sm:$0xff]
        %v256 = vld [vmem:[%s208 + $0x128] sm:$0xff]
        %v257 = vld [vmem:[%s208 + $0x130] sm:$0xff]
        %v258 = vld [vmem:[%s208 + $0x138] sm:$0xff]
        %v259 = vld [vmem:[%s208 + $0x140] sm:$0xff]
        %v260 = vld [vmem:[%s208 + $0x148] sm:$0xff]
        %v261 = vld [vmem:[%s208 + $0x150] sm:$0xff]
        %v262 = vld [vmem:[%s208 + $0x158] sm:$0xff]
        %v263 = vld [vmem:[%s208 + $0x160] sm:$0xff]
        %v264 = vld [vmem:[%s208 + $0x168] sm:$0xff]
        %v265 = vld [vmem:[%s208 + $0x170] sm:$0xff]
        %v266 = vld [vmem:[%s208 + $0x178] sm:$0xff]
        %v267 = vld [vmem:[%s208 + $0x180] sm:$0xff]
        %v268 = vld [vmem:[%s208 + $0x188] sm:$0xff]
        %v269 = vld [vmem:[%s208 + $0x190] sm:$0xff]
        %v270 = vld [vmem:[%s208 + $0x198] sm:$0xff]
        %v271 = vld [vmem:[%s208 + $0x1a0] sm:$0xff]
        %v272 = vld [vmem:[%s208 + $0x1a8] sm:$0xff]
        %v273 = vld [vmem:[%s208 + $0x1b0] sm:$0xff]
        %v274 = vld [vmem:[%s208 + $0x1b8] sm:$0xff]
        %v275 = vld [vmem:[%s208 + $0x1c0] sm:$0xff]
        %v276 = vld [vmem:[%s208 + $0x1c8] sm:$0xff]
        %v277 = vld [vmem:[%s208 + $0x1d0] sm:$0xff]
        %v278 = vld [vmem:[%s208 + $0x1d8] sm:$0xff]
        %v279 = vld [vmem:[%s208 + $0x1e0] sm:$0xff]
        %v280 = vld [vmem:[%s208 + $0x1e8] sm:$0xff]
        %v281 = vld [vmem:[%s208 + $0x1f0] sm:$0xff]
        %v282 = vld [vmem:[%s208 + $0x1f8] sm:$0xff]
        %v283 = vld [vmem:[%s208 + $0x200] sm:$0xff]
        %v284 = vld [vmem:[%s208 + $0x208] sm:$0xff]
        %v285 = vld [vmem:[%s208 + $0x210] sm:$0xff]
        %v286 = vld [vmem:[%s208 + $0x218] sm:$0xff]
        %v287 = vld [vmem:[%s208 + $0x220] sm:$0xff]
        %v288 = vld [vmem:[%s208 + $0x228] sm:$0xff]
        %v289 = vld [vmem:[%s208 + $0x230] sm:$0xff]
        %v290 = vld [vmem:[%s208 + $0x238] sm:$0xff]
        %v291 = vld [vmem:[%s208 + $0x240] sm:$0xff]
        %v292 = vld [vmem:[%s208 + $0x248] sm:$0xff]
        %v293 = vld [vmem:[%s208 + $0x250] sm:$0xff]
        %v294 = vld [vmem:[%s208 + $0x258] sm:$0xff]
        %v295 = vld [vmem:[%s208 + $0x260] sm:$0xff]
        %v296 = vld [vmem:[%s208 + $0x268] sm:$0xff]
        %v297 = vld [vmem:[%s208 + $0x270] sm:$0xff]
        %v298 = vld [vmem:[%s208 + $0x278] sm:$0xff]
        %v299 = vld [vmem:[%s208 + $0x280] sm:$0xff]
        %v300 = vld [vmem:[%s208 + $0x288] sm:$0xff]
        %v301 = vld [vmem:[%s208 + $0x290] sm:$0xff]
        %v302 = vld [vmem:[%s208 + $0x298] sm:$0xff]
        %v303 = vld [vmem:[%s208 + $0x2a0] sm:$0xff]
        %v304 = vld [vmem:[%s208 + $0x2a8] sm:$0xff]
        %v305 = vld [vmem:[%s208 + $0x2b0] sm:$0xff]
        %v306 = vld [vmem:[%s208 + $0x2b8] sm:$0xff]
        %v307 = vld [vmem:[%s208 + $0x2c0] sm:$0xff]
        %v308 = vld [vmem:[%s208 + $0x2c8] sm:$0xff]
        %v309 = vld [vmem:[%s208 + $0x2d0] sm:$0xff]
        %v310 = vld [vmem:[%s208 + $0x2d8] sm:$0xff]
        %v311 = vld [vmem:[%s208 + $0x2e0] sm:$0xff]
        %v312 = vld [vmem:[%s208 + $0x2e8] sm:$0xff]
        %v313 = vld [vmem:[%s208 + $0x2f0] sm:$0xff]
        %v314 = vld [vmem:[%s208 + $0x2f8] sm:$0xff]
        %v315 = vld [vmem:[%s208 + $0x300] sm:$0xff]
        %v316 = vld [vmem:[%s208 + $0x308] sm:$0xff]
        %v317 = vld [vmem:[%s208 + $0x310] sm:$0xff]
        %v318 = vld [vmem:[%s208 + $0x318] sm:$0xff]
        %v319 = vld [vmem:[%s208 + $0x320] sm:$0xff]
        %v320 = vld [vmem:[%s208 + $0x328] sm:$0xff]
        %v321 = vld [vmem:[%s208 + $0x330] sm:$0xff]
        %v322 = vld [vmem:[%s208 + $0x338] sm:$0xff]
        %v323 = vld [vmem:[%s208 + $0x340] sm:$0xff]
        %v324 = vld [vmem:[%s208 + $0x348] sm:$0xff]
        %v325 = vld [vmem:[%s208 + $0x350] sm:$0xff]
        %v326 = vld [vmem:[%s208 + $0x358] sm:$0xff]
        %v327 = vld [vmem:[%s208 + $0x360] sm:$0xff]
        %v328 = vld [vmem:[%s208 + $0x368] sm:$0xff]
        %v329 = vld [vmem:[%s208 + $0x370] sm:$0xff]
        %v330 = vld [vmem:[%s208 + $0x378] sm:$0xff]
        %v331 = vld [vmem:[%s208 + $0x380] sm:$0xff]
        %v332 = vld [vmem:[%s208 + $0x388] sm:$0xff]
        %v333 = vld [vmem:[%s208 + $0x390] sm:$0xff]
        %v334 = vld [vmem:[%s208 + $0x398] sm:$0xff]
        %v335 = vld [vmem:[%s208 + $0x3a0] sm:$0xff]
        %v336 = vld [vmem:[%s208 + $0x3a8] sm:$0xff]
        %v337 = vld [vmem:[%s208 + $0x3b0] sm:$0xff]
        %v338 = vld [vmem:[%s208 + $0x3b8] sm:$0xff]
        %v339 = vld [vmem:[%s208 + $0x3c0] sm:$0xff]
        %v340 = vld [vmem:[%s208 + $0x3c8] sm:$0xff]
        %v341 = vld [vmem:[%s208 + $0x3d0] sm:$0xff]
        %v342 = vld [vmem:[%s208 + $0x3d8] sm:$0xff]
        %v343 = vld [vmem:[%s208 + $0x3e0] sm:$0xff]
        %v344 = vld [vmem:[%s208 + $0x3e8] sm:$0xff]
        %v345 = vld [vmem:[%s208 + $0x3f0] sm:$0xff]
        %v346 = vld [vmem:[%s208 + $0x3f8] sm:$0xff]
        %v347 = vld [vmem:[%s1] sm:$0xff]
        %v348 = vld [vmem:[%s1 + $0x8] sm:$0xff]
        %v349 = vld [vmem:[%s1 + $0x10] sm:$0xff]
        %v350 = vld [vmem:[%s1 + $0x18] sm:$0xff]
        %v351 = vld [vmem:[%s1 + $0x20] sm:$0xff]
        %v352 = vld [vmem:[%s1 + $0x28] sm:$0xff]
        %v353 = vld [vmem:[%s1 + $0x30] sm:$0xff]
        %v354 = vld [vmem:[%s1 + $0x38] sm:$0xff]
        %v355 = vld [vmem:[%s1 + $0x40] sm:$0xff]
        %v356 = vld [vmem:[%s1 + $0x48] sm:$0xff]
        %v357 = vld [vmem:[%s1 + $0x50] sm:$0xff]
        %v358 = vld [vmem:[%s1 + $0x58] sm:$0xff]
        %v359 = vld [vmem:[%s1 + $0x60] sm:$0xff]
        %v360 = vld [vmem:[%s1 + $0x68] sm:$0xff]
        %v361 = vld [vmem:[%s1 + $0x70] sm:$0xff]
        %v362 = vld [vmem:[%s1 + $0x78] sm:$0xff]
        %v363 = vld [vmem:[%s1 + $0x80] sm:$0xff]
        %v364 = vld [vmem:[%s1 + $0x88] sm:$0xff]
        %v365 = vld [vmem:[%s1 + $0x90] sm:$0xff]
        %v366 = vld [vmem:[%s1 + $0x98] sm:$0xff]
        %v367 = vld [vmem:[%s1 + $0xa0] sm:$0xff]
        %v368 = vld [vmem:[%s1 + $0xa8] sm:$0xff]
        %v369 = vld [vmem:[%s1 + $0xb0] sm:$0xff]
        %v370 = vld [vmem:[%s1 + $0xb8] sm:$0xff]
        %v371 = vld [vmem:[%s1 + $0xc0] sm:$0xff]
        %v372 = vld [vmem:[%s1 + $0xc8] sm:$0xff]
        %v373 = vld [vmem:[%s1 + $0xd0] sm:$0xff]
        %v374 = vld [vmem:[%s1 + $0xd8] sm:$0xff]
        %v375 = vld [vmem:[%s1 + $0xe0] sm:$0xff]
        %v376 = vld [vmem:[%s1 + $0xe8] sm:$0xff]
        %v377 = vld [vmem:[%s1 + $0xf0] sm:$0xff]
        %v378 = vld [vmem:[%s1 + $0xf8] sm:$0xff]
        %v379 = vld [vmem:[%s3] sm:$0x3]
        %v381 = vlaneseq
        %v382 = vshrl.u32 %v381, 7
        %v383 = vsub.s32 0, %v382
        %v384 = vrot.slane %v379, %v383
        %v385 = vlaneseq
        %v386 = vshrl.u32 %v385, 7
        %v387 = vsub.s32 1, %v386
        %v388 = vrot.slane %v379, %v387
        %391 = vmatprep.subr.mxu0 %v348
        %392 = vmatpush1.msra.mxu0 %v347
        %393 = vmatprep.subr.mxu0 %v350
        %394 = vmatpush1.msra.mxu0 %v349
        %395 = vmatprep.subr.mxu0 %v352
        %396 = vmatpush1.msra.mxu0 %v351
        %397 = vmatprep.subr.mxu0 %v354
        %398 = vmatpush1.msra.mxu0 %v353
        %399 = vmatprep.subr.mxu0 %v356
        %400 = vmatpush1.msra.mxu0 %v355
        %401 = vmatprep.subr.mxu0 %v358
        %402 = vmatpush1.msra.mxu0 %v357
        %403 = vmatprep.subr.mxu0 %v360
        %404 = vmatpush1.msra.mxu0 %v359
        %405 = vmatprep.subr.mxu0 %v362
        %406 = vmatpush1.msra.mxu0 %v361
        %407 = vmatprep.subr.mxu0 %v364
        %408 = vmatpush1.msra.mxu0 %v363
        %409 = vmatprep.subr.mxu0 %v366
        %410 = vmatpush1.msra.mxu0 %v365
        %411 = vmatprep.subr.mxu0 %v368
        %412 = vmatpush1.msra.mxu0 %v367
        %413 = vmatprep.subr.mxu0 %v370
        %414 = vmatpush1.msra.mxu0 %v369
        %415 = vmatprep.subr.mxu0 %v372
        %416 = vmatpush1.msra.mxu0 %v371
        %417 = vmatprep.subr.mxu0 %v374
        %418 = vmatpush1.msra.mxu0 %v373
        %419 = vmatprep.subr.mxu0 %v376
        %420 = vmatpush1.msra.mxu0 %v375
        %421 = vmatprep.subr.mxu0 %v378
        %422 = vmatpush1.msra.mxu0 %v377
        %423 = vmatprep.subr.mxu0 0.0
        %424 = vmatpush1.msra.mxu0 0.0
        %425 = vmatprep.subr.mxu0 0.0
        %426 = vmatpush1.msra.mxu0 0.0
        %427 = vmatprep.subr.mxu0 0.0
        %428 = vmatpush1.msra.mxu0 0.0
        %429 = vmatprep.subr.mxu0 0.0
        %430 = vmatpush1.msra.mxu0 0.0
        %431 = vmatprep.subr.mxu0 0.0
        %432 = vmatpush1.msra.mxu0 0.0
        %433 = vmatprep.subr.mxu0 0.0
        %434 = vmatpush1.msra.mxu0 0.0
        %435 = vmatprep.subr.mxu0 0.0
        %436 = vmatpush1.msra.mxu0 0.0
        %437 = vmatprep.subr.mxu0 0.0
        %438 = vmatpush1.msra.mxu0 0.0
        %439 = vmatprep.subr.mxu0 0.0
        %440 = vmatpush1.msra.mxu0 0.0
        %441 = vmatprep.subr.mxu0 0.0
        %442 = vmatpush1.msra.mxu0 0.0
        %443 = vmatprep.subr.mxu0 0.0
        %444 = vmatpush1.msra.mxu0 0.0
        %445 = vmatprep.subr.mxu0 0.0
        %446 = vmatpush1.msra.mxu0 0.0
        %447 = vmatprep.subr.mxu0 0.0
        %448 = vmatpush1.msra.mxu0 0.0
        %449 = vmatprep.subr.mxu0 0.0
        %450 = vmatpush1.msra.mxu0 0.0
        %451 = vmatprep.subr.mxu0 0.0
        %452 = vmatpush1.msra.mxu0 0.0
        %453 = vmatprep.subr.mxu0 0.0
        %454 = vmatpush1.msra.mxu0 0.0
        %455 = vmatprep.mubr.f32.mxu0 0.0
        %456 = vmatmul.mubr.f32.gmra.mrb[0].mxu0 %v219
        %v457 = vpop.f32.mrb[0].mxu0
        %v458 = vadd.f32 %v384, %v457
        %v459 = vpop.f32.mrb[0].mxu0
        %v460 = vadd.f32 %v388, %v459
        %461 = vmatprep.mubr.f32.mxu0 0.0
        %462 = vmatmul.mubr.f32.gmra.mrb[0].mxu0 %v220
        %v463 = vpop.f32.mrb[0].mxu0
        %v464 = vadd.f32 %v384, %v463
        %v465 = vpop.f32.mrb[0].mxu0
        %v466 = vadd.f32 %v388, %v465
        %467 = vmatprep.mubr.f32.mxu0 0.0
        %468 = vmatmul.mubr.f32.gmra.mrb[0].mxu0 %v221
        %v469 = vpop.f32.mrb[0].mxu0
        %v470 = vadd.f32 %v384, %v469
        %v471 = vpop.f32.mrb[0].mxu0
        %v472 = vadd.f32 %v388, %v471
        %473 = vmatprep.mubr.f32.mxu0 0.0
        %474 = vmatmul.mubr.f32.gmra.mrb[0].mxu0 %v222
        %v475 = vpop.f32.mrb[0].mxu0
        %v476 = vadd.f32 %v384, %v475
        %v477 = vpop.f32.mrb[0].mxu0
        %v478 = vadd.f32 %v388, %v477
        %479 = vmatprep.mubr.f32.mxu0 0.0
        %480 = vmatmul.mubr.f32.gmra.mrb[0].mxu0 %v223
        %v481 = vpop.f32.mrb[0].mxu0
        %v482 = vadd.f32 %v384, %v481
        %v483 = vpop.f32.mrb[0].mxu0
        %v484 = vadd.f32 %v388, %v483
        %485 = vmatprep.mubr.f32.mxu0 0.0
        %486 = vmatmul.mubr.f32.gmra.mrb[0].mxu0 %v224
        %v487 = vpop.f32.mrb[0].mxu0
        %v488 = vadd.f32 %v384, %v487
        %v489 = vpop.f32.mrb[0].mxu0
        %v490 = vadd.f32 %v388, %v489
        %491 = vmatprep.mubr.f32.mxu0 0.0
        %492 = vmatmul.mubr.f32.gmra.mrb[0].mxu0 %v225
        %v493 = vpop.f32.mrb[0].mxu0
        %v494 = vadd.f32 %v384, %v493
        %v495 = vpop.f32.mrb[0].mxu0
        %v496 = vadd.f32 %v388, %v495
        %497 = vmatprep.mubr.f32.mxu0 0.0
        %498 = vmatmul.mubr.f32.gmra.mrb[0].mxu0 %v226
        %v499 = vpop.f32.mrb[0].mxu0
        %v500 = vadd.f32 %v384, %v499
        %v501 = vpop.f32.mrb[0].mxu0
        %v502 = vadd.f32 %v388, %v501
        %503 = vmatprep.mubr.f32.mxu0 0.0
        %504 = vmatmul.mubr.f32.gmra.mrb[0].mxu0 %v227
        %v505 = vpop.f32.mrb[0].mxu0
        %v506 = vadd.f32 %v384, %v505
        %v507 = vpop.f32.mrb[0].mxu0
        %v508 = vadd.f32 %v388, %v507
        %509 = vmatprep.mubr.f32.mxu0 0.0
        %510 = vmatmul.mubr.f32.gmra.mrb[0].mxu0 %v228
        %v511 = vpop.f32.mrb[0].mxu0
        %v512 = vadd.f32 %v384, %v511
        %v513 = vpop.f32.mrb[0].mxu0
        %v514 = vadd.f32 %v388, %v513
        %515 = vmatprep.mubr.f32.mxu0 0.0
        %516 = vmatmul.mubr.f32.gmra.mrb[0].mxu0 %v229
        %v517 = vpop.f32.mrb[0].mxu0
        %v518 = vadd.f32 %v384, %v517
        %v519 = vpop.f32.mrb[0].mxu0
        %v520 = vadd.f32 %v388, %v519
        %521 = vmatprep.mubr.f32.mxu0 0.0
        %522 = vmatmul.mubr.f32.gmra.mrb[0].mxu0 %v230
        %v523 = vpop.f32.mrb[0].mxu0
        %v524 = vadd.f32 %v384, %v523
        %v525 = vpop.f32.mrb[0].mxu0
        %v526 = vadd.f32 %v388, %v525
        %527 = vmatprep.mubr.f32.mxu0 0.0
        %528 = vmatmul.mubr.f32.gmra.mrb[0].mxu0 %v231
        %v529 = vpop.f32.mrb[0].mxu0
        %v530 = vadd.f32 %v384, %v529
        %v531 = vpop.f32.mrb[0].mxu0
        %v532 = vadd.f32 %v388, %v531
        %533 = vmatprep.mubr.f32.mxu0 0.0
        %534 = vmatmul.mubr.f32.gmra.mrb[0].mxu0 %v232
        %v535 = vpop.f32.mrb[0].mxu0
        %v536 = vadd.f32 %v384, %v535
        %v537 = vpop.f32.mrb[0].mxu0
        %v538 = vadd.f32 %v388, %v537
        %539 = vmatprep.mubr.f32.mxu0 0.0
        %540 = vmatmul.mubr.f32.gmra.mrb[0].mxu0 %v233
        %v541 = vpop.f32.mrb[0].mxu0
        %v542 = vadd.f32 %v384, %v541
        %v543 = vpop.f32.mrb[0].mxu0
        %v544 = vadd.f32 %v388, %v543
        %545 = vmatprep.mubr.f32.mxu0 0.0
        %546 = vmatmul.mubr.f32.gmra.mrb[0].mxu0 %v234
        %v547 = vpop.f32.mrb[0].mxu0
        %v548 = vadd.f32 %v384, %v547
        %v549 = vpop.f32.mrb[0].mxu0
        %v550 = vadd.f32 %v388, %v549
        %551 = vmatprep.mubr.f32.mxu0 0.0
        %552 = vmatmul.mubr.f32.gmra.mrb[0].mxu0 %v235
        %v553 = vpop.f32.mrb[0].mxu0
        %v554 = vadd.f32 %v384, %v553
        %v555 = vpop.f32.mrb[0].mxu0
        %v556 = vadd.f32 %v388, %v555
        %557 = vmatprep.mubr.f32.mxu0 0.0
        %558 = vmatmul.mubr.f32.gmra.mrb[0].mxu0 %v236
        %v559 = vpop.f32.mrb[0].mxu0
        %v560 = vadd.f32 %v384, %v559
        %v561 = vpop.f32.mrb[0].mxu0
        %v562 = vadd.f32 %v388, %v561
        %563 = vmatprep.mubr.f32.mxu0 0.0
        %564 = vmatmul.mubr.f32.gmra.mrb[0].mxu0 %v237
        %v565 = vpop.f32.mrb[0].mxu0
        %v566 = vadd.f32 %v384, %v565
        %v567 = vpop.f32.mrb[0].mxu0
        %v568 = vadd.f32 %v388, %v567
        %569 = vmatprep.mubr.f32.mxu0 0.0
        %570 = vmatmul.mubr.f32.gmra.mrb[0].mxu0 %v238
        %v571 = vpop.f32.mrb[0].mxu0
        %v572 = vadd.f32 %v384, %v571
        %v573 = vpop.f32.mrb[0].mxu0
        %v574 = vadd.f32 %v388, %v573
        %575 = vmatprep.mubr.f32.mxu0 0.0
        %576 = vmatmul.mubr.f32.gmra.mrb[0].mxu0 %v239
        %v577 = vpop.f32.mrb[0].mxu0
        %v578 = vadd.f32 %v384, %v577
        %v579 = vpop.f32.mrb[0].mxu0
        %v580 = vadd.f32 %v388, %v579
        %581 = vmatprep.mubr.f32.mxu0 0.0
        %582 = vmatmul.mubr.f32.gmra.mrb[0].mxu0 %v240
        %v583 = vpop.f32.mrb[0].mxu0
        %v584 = vadd.f32 %v384, %v583
        %v585 = vpop.f32.mrb[0].mxu0
        %v586 = vadd.f32 %v388, %v585
        %587 = vmatprep.mubr.f32.mxu0 0.0
        %588 = vmatmul.mubr.f32.gmra.mrb[0].mxu0 %v241
        %v589 = vpop.f32.mrb[0].mxu0
        %v590 = vadd.f32 %v384, %v589
        %v591 = vpop.f32.mrb[0].mxu0
        %v592 = vadd.f32 %v388, %v591
        %593 = vmatprep.mubr.f32.mxu0 0.0
        %594 = vmatmul.mubr.f32.gmra.mrb[0].mxu0 %v242
        %v595 = vpop.f32.mrb[0].mxu0
        %v596 = vadd.f32 %v384, %v595
        %v597 = vpop.f32.mrb[0].mxu0
        %v598 = vadd.f32 %v388, %v597
        %599 = vmatprep.mubr.f32.mxu0 0.0
        %600 = vmatmul.mubr.f32.gmra.mrb[0].mxu0 %v243
        %v601 = vpop.f32.mrb[0].mxu0
        %v602 = vadd.f32 %v384, %v601
        %v603 = vpop.f32.mrb[0].mxu0
        %v604 = vadd.f32 %v388, %v603
        %605 = vmatprep.mubr.f32.mxu0 0.0
        %606 = vmatmul.mubr.f32.gmra.mrb[0].mxu0 %v244
        %v607 = vpop.f32.mrb[0].mxu0
        %v608 = vadd.f32 %v384, %v607
        %v609 = vpop.f32.mrb[0].mxu0
        %v610 = vadd.f32 %v388, %v609
        %611 = vmatprep.mubr.f32.mxu0 0.0
        %612 = vmatmul.mubr.f32.gmra.mrb[0].mxu0 %v245
        %v613 = vpop.f32.mrb[0].mxu0
        %v614 = vadd.f32 %v384, %v613
        %v615 = vpop.f32.mrb[0].mxu0
        %v616 = vadd.f32 %v388, %v615
        %617 = vmatprep.mubr.f32.mxu0 0.0
        %618 = vmatmul.mubr.f32.gmra.mrb[0].mxu0 %v246
        %v619 = vpop.f32.mrb[0].mxu0
        %v620 = vadd.f32 %v384, %v619
        %v621 = vpop.f32.mrb[0].mxu0
        %v622 = vadd.f32 %v388, %v621
        %623 = vmatprep.mubr.f32.mxu0 0.0
        %624 = vmatmul.mubr.f32.gmra.mrb[0].mxu0 %v247
        %v625 = vpop.f32.mrb[0].mxu0
        %v626 = vadd.f32 %v384, %v625
        %v627 = vpop.f32.mrb[0].mxu0
        %v628 = vadd.f32 %v388, %v627
        %629 = vmatprep.mubr.f32.mxu0 0.0
        %630 = vmatmul.mubr.f32.gmra.mrb[0].mxu0 %v248
        %v631 = vpop.f32.mrb[0].mxu0
        %v632 = vadd.f32 %v384, %v631
        %v633 = vpop.f32.mrb[0].mxu0
        %v634 = vadd.f32 %v388, %v633
        %635 = vmatprep.mubr.f32.mxu0 0.0
        %636 = vmatmul.mubr.f32.gmra.mrb[0].mxu0 %v249
        %v637 = vpop.f32.mrb[0].mxu0
        %v638 = vadd.f32 %v384, %v637
        %v639 = vpop.f32.mrb[0].mxu0
        %v640 = vadd.f32 %v388, %v639
        %641 = vmatprep.mubr.f32.mxu0 0.0
        %642 = vmatmul.mubr.f32.gmra.mrb[0].mxu0 %v250
        %v643 = vpop.f32.mrb[0].mxu0
        %v644 = vadd.f32 %v384, %v643
        %v645 = vpop.f32.mrb[0].mxu0
        %v646 = vadd.f32 %v388, %v645
        %647 = vmatprep.mubr.f32.mxu0 0.0
        %648 = vmatmul.mubr.f32.gmra.mrb[0].mxu0 %v251
        %v649 = vpop.f32.mrb[0].mxu0
        %v650 = vadd.f32 %v384, %v649
        %v651 = vpop.f32.mrb[0].mxu0
        %v652 = vadd.f32 %v388, %v651
        %653 = vmatprep.mubr.f32.mxu0 0.0
        %654 = vmatmul.mubr.f32.gmra.mrb[0].mxu0 %v252
        %v655 = vpop.f32.mrb[0].mxu0
        %v656 = vadd.f32 %v384, %v655
        %v657 = vpop.f32.mrb[0].mxu0
        %v658 = vadd.f32 %v388, %v657
        %659 = vmatprep.mubr.f32.mxu0 0.0
        %660 = vmatmul.mubr.f32.gmra.mrb[0].mxu0 %v253
        %v661 = vpop.f32.mrb[0].mxu0
        %v662 = vadd.f32 %v384, %v661
        %v663 = vpop.f32.mrb[0].mxu0
        %v664 = vadd.f32 %v388, %v663
        %665 = vmatprep.mubr.f32.mxu0 0.0
        %666 = vmatmul.mubr.f32.gmra.mrb[0].mxu0 %v254
        %v667 = vpop.f32.mrb[0].mxu0
        %v668 = vadd.f32 %v384, %v667
        %v669 = vpop.f32.mrb[0].mxu0
        %v670 = vadd.f32 %v388, %v669
        %671 = vmatprep.mubr.f32.mxu0 0.0
        %672 = vmatmul.mubr.f32.gmra.mrb[0].mxu0 %v255
        %v673 = vpop.f32.mrb[0].mxu0
        %v674 = vadd.f32 %v384, %v673
        %v675 = vpop.f32.mrb[0].mxu0
        %v676 = vadd.f32 %v388, %v675
        %677 = vmatprep.mubr.f32.mxu0 0.0
        %678 = vmatmul.mubr.f32.gmra.mrb[0].mxu0 %v256
        %v679 = vpop.f32.mrb[0].mxu0
        %v680 = vadd.f32 %v384, %v679
        %v681 = vpop.f32.mrb[0].mxu0
        %v682 = vadd.f32 %v388, %v681
        %683 = vmatprep.mubr.f32.mxu0 0.0
        %684 = vmatmul.mubr.f32.gmra.mrb[0].mxu0 %v257
        %v685 = vpop.f32.mrb[0].mxu0
        %v686 = vadd.f32 %v384, %v685
        %v687 = vpop.f32.mrb[0].mxu0
        %v688 = vadd.f32 %v388, %v687
        %689 = vmatprep.mubr.f32.mxu0 0.0
        %690 = vmatmul.mubr.f32.gmra.mrb[0].mxu0 %v258
        %v691 = vpop.f32.mrb[0].mxu0
        %v692 = vadd.f32 %v384, %v691
        %v693 = vpop.f32.mrb[0].mxu0
        %v694 = vadd.f32 %v388, %v693
        %695 = vmatprep.mubr.f32.mxu0 0.0
        %696 = vmatmul.mubr.f32.gmra.mrb[0].mxu0 %v259
        %v697 = vpop.f32.mrb[0].mxu0
        %v698 = vadd.f32 %v384, %v697
        %v699 = vpop.f32.mrb[0].mxu0
        %v700 = vadd.f32 %v388, %v699
        %701 = vmatprep.mubr.f32.mxu0 0.0
        %702 = vmatmul.mubr.f32.gmra.mrb[0].mxu0 %v260
        %v703 = vpop.f32.mrb[0].mxu0
        %v704 = vadd.f32 %v384, %v703
        %v705 = vpop.f32.mrb[0].mxu0
        %v706 = vadd.f32 %v388, %v705
        %707 = vmatprep.mubr.f32.mxu0 0.0
        %708 = vmatmul.mubr.f32.gmra.mrb[0].mxu0 %v261
        %v709 = vpop.f32.mrb[0].mxu0
        %v710 = vadd.f32 %v384, %v709
        %v711 = vpop.f32.mrb[0].mxu0
        %v712 = vadd.f32 %v388, %v711
        %713 = vmatprep.mubr.f32.mxu0 0.0
        %714 = vmatmul.mubr.f32.gmra.mrb[0].mxu0 %v262
        %v715 = vpop.f32.mrb[0].mxu0
        %v716 = vadd.f32 %v384, %v715
        %v717 = vpop.f32.mrb[0].mxu0
        %v718 = vadd.f32 %v388, %v717
        %719 = vmatprep.mubr.f32.mxu0 0.0
        %720 = vmatmul.mubr.f32.gmra.mrb[0].mxu0 %v263
        %v721 = vpop.f32.mrb[0].mxu0
        %v722 = vadd.f32 %v384, %v721
        %v723 = vpop.f32.mrb[0].mxu0
        %v724 = vadd.f32 %v388, %v723
        %725 = vmatprep.mubr.f32.mxu0 0.0
        %726 = vmatmul.mubr.f32.gmra.mrb[0].mxu0 %v264
        %v727 = vpop.f32.mrb[0].mxu0
        %v728 = vadd.f32 %v384, %v727
        %v729 = vpop.f32.mrb[0].mxu0
        %v730 = vadd.f32 %v388, %v729
        %731 = vmatprep.mubr.f32.mxu0 0.0
        %732 = vmatmul.mubr.f32.gmra.mrb[0].mxu0 %v265
        %v733 = vpop.f32.mrb[0].mxu0
        %v734 = vadd.f32 %v384, %v733
        %v735 = vpop.f32.mrb[0].mxu0
        %v736 = vadd.f32 %v388, %v735
        %737 = vmatprep.mubr.f32.mxu0 0.0
        %738 = vmatmul.mubr.f32.gmra.mrb[0].mxu0 %v266
        %v739 = vpop.f32.mrb[0].mxu0
        %v740 = vadd.f32 %v384, %v739
        %v741 = vpop.f32.mrb[0].mxu0
        %v742 = vadd.f32 %v388, %v741
        %743 = vmatprep.mubr.f32.mxu0 0.0
        %744 = vmatmul.mubr.f32.gmra.mrb[0].mxu0 %v267
        %v745 = vpop.f32.mrb[0].mxu0
        %v746 = vadd.f32 %v384, %v745
        %v747 = vpop.f32.mrb[0].mxu0
        %v748 = vadd.f32 %v388, %v747
        %749 = vmatprep.mubr.f32.mxu0 0.0
        %750 = vmatmul.mubr.f32.gmra.mrb[0].mxu0 %v268
        %v751 = vpop.f32.mrb[0].mxu0
        %v752 = vadd.f32 %v384, %v751
        %v753 = vpop.f32.mrb[0].mxu0
        %v754 = vadd.f32 %v388, %v753
        %755 = vmatprep.mubr.f32.mxu0 0.0
        %756 = vmatmul.mubr.f32.gmra.mrb[0].mxu0 %v269
        %v757 = vpop.f32.mrb[0].mxu0
        %v758 = vadd.f32 %v384, %v757
        %v759 = vpop.f32.mrb[0].mxu0
        %v760 = vadd.f32 %v388, %v759
        %761 = vmatprep.mubr.f32.mxu0 0.0
        %762 = vmatmul.mubr.f32.gmra.mrb[0].mxu0 %v270
        %v763 = vpop.f32.mrb[0].mxu0
        %v764 = vadd.f32 %v384, %v763
        %v765 = vpop.f32.mrb[0].mxu0
        %v766 = vadd.f32 %v388, %v765
        %767 = vmatprep.mubr.f32.mxu0 0.0
        %768 = vmatmul.mubr.f32.gmra.mrb[0].mxu0 %v271
        %v769 = vpop.f32.mrb[0].mxu0
        %v770 = vadd.f32 %v384, %v769
        %v771 = vpop.f32.mrb[0].mxu0
        %v772 = vadd.f32 %v388, %v771
        %773 = vmatprep.mubr.f32.mxu0 0.0
        %774 = vmatmul.mubr.f32.gmra.mrb[0].mxu0 %v272
        %v775 = vpop.f32.mrb[0].mxu0
        %v776 = vadd.f32 %v384, %v775
        %v777 = vpop.f32.mrb[0].mxu0
        %v778 = vadd.f32 %v388, %v777
        %779 = vmatprep.mubr.f32.mxu0 0.0
        %780 = vmatmul.mubr.f32.gmra.mrb[0].mxu0 %v273
        %v781 = vpop.f32.mrb[0].mxu0
        %v782 = vadd.f32 %v384, %v781
        %v783 = vpop.f32.mrb[0].mxu0
        %v784 = vadd.f32 %v388, %v783
        %785 = vmatprep.mubr.f32.mxu0 0.0
        %786 = vmatmul.mubr.f32.gmra.mrb[0].mxu0 %v274
        %v787 = vpop.f32.mrb[0].mxu0
        %v788 = vadd.f32 %v384, %v787
        %v789 = vpop.f32.mrb[0].mxu0
        %v790 = vadd.f32 %v388, %v789
        %791 = vmatprep.mubr.f32.mxu0 0.0
        %792 = vmatmul.mubr.f32.gmra.mrb[0].mxu0 %v275
        %v793 = vpop.f32.mrb[0].mxu0
        %v794 = vadd.f32 %v384, %v793
        %v795 = vpop.f32.mrb[0].mxu0
        %v796 = vadd.f32 %v388, %v795
        %797 = vmatprep.mubr.f32.mxu0 0.0
        %798 = vmatmul.mubr.f32.gmra.mrb[0].mxu0 %v276
        %v799 = vpop.f32.mrb[0].mxu0
        %v800 = vadd.f32 %v384, %v799
        %v801 = vpop.f32.mrb[0].mxu0
        %v802 = vadd.f32 %v388, %v801
        %803 = vmatprep.mubr.f32.mxu0 0.0
        %804 = vmatmul.mubr.f32.gmra.mrb[0].mxu0 %v277
        %v805 = vpop.f32.mrb[0].mxu0
        %v806 = vadd.f32 %v384, %v805
        %v807 = vpop.f32.mrb[0].mxu0
        %v808 = vadd.f32 %v388, %v807
        %809 = vmatprep.mubr.f32.mxu0 0.0
        %810 = vmatmul.mubr.f32.gmra.mrb[0].mxu0 %v278
        %v811 = vpop.f32.mrb[0].mxu0
        %v812 = vadd.f32 %v384, %v811
        %v813 = vpop.f32.mrb[0].mxu0
        %v814 = vadd.f32 %v388, %v813
        %815 = vmatprep.mubr.f32.mxu0 0.0
        %816 = vmatmul.mubr.f32.gmra.mrb[0].mxu0 %v279
        %v817 = vpop.f32.mrb[0].mxu0
        %v818 = vadd.f32 %v384, %v817
        %v819 = vpop.f32.mrb[0].mxu0
        %v820 = vadd.f32 %v388, %v819
        %821 = vmatprep.mubr.f32.mxu0 0.0
        %822 = vmatmul.mubr.f32.gmra.mrb[0].mxu0 %v280
        %v823 = vpop.f32.mrb[0].mxu0
        %v824 = vadd.f32 %v384, %v823
        %v825 = vpop.f32.mrb[0].mxu0
        %v826 = vadd.f32 %v388, %v825
        %827 = vmatprep.mubr.f32.mxu0 0.0
        %828 = vmatmul.mubr.f32.gmra.mrb[0].mxu0 %v281
        %v829 = vpop.f32.mrb[0].mxu0
        %v830 = vadd.f32 %v384, %v829
        %v831 = vpop.f32.mrb[0].mxu0
        %v832 = vadd.f32 %v388, %v831
        %833 = vmatprep.mubr.f32.mxu0 0.0
        %834 = vmatmul.mubr.f32.gmra.mrb[0].mxu0 %v282
        %v835 = vpop.f32.mrb[0].mxu0
        %v836 = vadd.f32 %v384, %v835
        %v837 = vpop.f32.mrb[0].mxu0
        %v838 = vadd.f32 %v388, %v837
        %839 = vmatprep.mubr.f32.mxu0 0.0
        %840 = vmatmul.mubr.f32.gmra.mrb[0].mxu0 %v283
        %v841 = vpop.f32.mrb[0].mxu0
        %v842 = vadd.f32 %v384, %v841
        %v843 = vpop.f32.mrb[0].mxu0
        %v844 = vadd.f32 %v388, %v843
        %845 = vmatprep.mubr.f32.mxu0 0.0
        %846 = vmatmul.mubr.f32.gmra.mrb[0].mxu0 %v284
        %v847 = vpop.f32.mrb[0].mxu0
        %v848 = vadd.f32 %v384, %v847
        %v849 = vpop.f32.mrb[0].mxu0
        %v850 = vadd.f32 %v388, %v849
        %851 = vmatprep.mubr.f32.mxu0 0.0
        %852 = vmatmul.mubr.f32.gmra.mrb[0].mxu0 %v285
        %v853 = vpop.f32.mrb[0].mxu0
        %v854 = vadd.f32 %v384, %v853
        %v855 = vpop.f32.mrb[0].mxu0
        %v856 = vadd.f32 %v388, %v855
        %857 = vmatprep.mubr.f32.mxu0 0.0
        %858 = vmatmul.mubr.f32.gmra.mrb[0].mxu0 %v286
        %v859 = vpop.f32.mrb[0].mxu0
        %v860 = vadd.f32 %v384, %v859
        %v861 = vpop.f32.mrb[0].mxu0
        %v862 = vadd.f32 %v388, %v861
        %863 = vmatprep.mubr.f32.mxu0 0.0
        %864 = vmatmul.mubr.f32.gmra.mrb[0].mxu0 %v287
        %v865 = vpop.f32.mrb[0].mxu0
        %v866 = vadd.f32 %v384, %v865
        %v867 = vpop.f32.mrb[0].mxu0
        %v868 = vadd.f32 %v388, %v867
        %869 = vmatprep.mubr.f32.mxu0 0.0
        %870 = vmatmul.mubr.f32.gmra.mrb[0].mxu0 %v288
        %v871 = vpop.f32.mrb[0].mxu0
        %v872 = vadd.f32 %v384, %v871
        %v873 = vpop.f32.mrb[0].mxu0
        %v874 = vadd.f32 %v388, %v873
        %875 = vmatprep.mubr.f32.mxu0 0.0
        %876 = vmatmul.mubr.f32.gmra.mrb[0].mxu0 %v289
        %v877 = vpop.f32.mrb[0].mxu0
        %v878 = vadd.f32 %v384, %v877
        %v879 = vpop.f32.mrb[0].mxu0
        %v880 = vadd.f32 %v388, %v879
        %881 = vmatprep.mubr.f32.mxu0 0.0
        %882 = vmatmul.mubr.f32.gmra.mrb[0].mxu0 %v290
        %v883 = vpop.f32.mrb[0].mxu0
        %v884 = vadd.f32 %v384, %v883
        %v885 = vpop.f32.mrb[0].mxu0
        %v886 = vadd.f32 %v388, %v885
        %887 = vmatprep.mubr.f32.mxu0 0.0
        %888 = vmatmul.mubr.f32.gmra.mrb[0].mxu0 %v291
        %v889 = vpop.f32.mrb[0].mxu0
        %v890 = vadd.f32 %v384, %v889
        %v891 = vpop.f32.mrb[0].mxu0
        %v892 = vadd.f32 %v388, %v891
        %893 = vmatprep.mubr.f32.mxu0 0.0
        %894 = vmatmul.mubr.f32.gmra.mrb[0].mxu0 %v292
        %v895 = vpop.f32.mrb[0].mxu0
        %v896 = vadd.f32 %v384, %v895
        %v897 = vpop.f32.mrb[0].mxu0
        %v898 = vadd.f32 %v388, %v897
        %899 = vmatprep.mubr.f32.mxu0 0.0
        %900 = vmatmul.mubr.f32.gmra.mrb[0].mxu0 %v293
        %v901 = vpop.f32.mrb[0].mxu0
        %v902 = vadd.f32 %v384, %v901
        %v903 = vpop.f32.mrb[0].mxu0
        %v904 = vadd.f32 %v388, %v903
        %905 = vmatprep.mubr.f32.mxu0 0.0
        %906 = vmatmul.mubr.f32.gmra.mrb[0].mxu0 %v294
        %v907 = vpop.f32.mrb[0].mxu0
        %v908 = vadd.f32 %v384, %v907
        %v909 = vpop.f32.mrb[0].mxu0
        %v910 = vadd.f32 %v388, %v909
        %911 = vmatprep.mubr.f32.mxu0 0.0
        %912 = vmatmul.mubr.f32.gmra.mrb[0].mxu0 %v295
        %v913 = vpop.f32.mrb[0].mxu0
        %v914 = vadd.f32 %v384, %v913
        %v915 = vpop.f32.mrb[0].mxu0
        %v916 = vadd.f32 %v388, %v915
        %917 = vmatprep.mubr.f32.mxu0 0.0
        %918 = vmatmul.mubr.f32.gmra.mrb[0].mxu0 %v296
        %v919 = vpop.f32.mrb[0].mxu0
        %v920 = vadd.f32 %v384, %v919
        %v921 = vpop.f32.mrb[0].mxu0
        %v922 = vadd.f32 %v388, %v921
        %923 = vmatprep.mubr.f32.mxu0 0.0
        %924 = vmatmul.mubr.f32.gmra.mrb[0].mxu0 %v297
        %v925 = vpop.f32.mrb[0].mxu0
        %v926 = vadd.f32 %v384, %v925
        %v927 = vpop.f32.mrb[0].mxu0
        %v928 = vadd.f32 %v388, %v927
        %929 = vmatprep.mubr.f32.mxu0 0.0
        %930 = vmatmul.mubr.f32.gmra.mrb[0].mxu0 %v298
        %v931 = vpop.f32.mrb[0].mxu0
        %v932 = vadd.f32 %v384, %v931
        %v933 = vpop.f32.mrb[0].mxu0
        %v934 = vadd.f32 %v388, %v933
        %935 = vmatprep.mubr.f32.mxu0 0.0
        %936 = vmatmul.mubr.f32.gmra.mrb[0].mxu0 %v299
        %v937 = vpop.f32.mrb[0].mxu0
        %v938 = vadd.f32 %v384, %v937
        %v939 = vpop.f32.mrb[0].mxu0
        %v940 = vadd.f32 %v388, %v939
        %941 = vmatprep.mubr.f32.mxu0 0.0
        %942 = vmatmul.mubr.f32.gmra.mrb[0].mxu0 %v300
        %v943 = vpop.f32.mrb[0].mxu0
        %v944 = vadd.f32 %v384, %v943
        %v945 = vpop.f32.mrb[0].mxu0
        %v946 = vadd.f32 %v388, %v945
        %947 = vmatprep.mubr.f32.mxu0 0.0
        %948 = vmatmul.mubr.f32.gmra.mrb[0].mxu0 %v301
        %v949 = vpop.f32.mrb[0].mxu0
        %v950 = vadd.f32 %v384, %v949
        %v951 = vpop.f32.mrb[0].mxu0
        %v952 = vadd.f32 %v388, %v951
        %953 = vmatprep.mubr.f32.mxu0 0.0
        %954 = vmatmul.mubr.f32.gmra.mrb[0].mxu0 %v302
        %v955 = vpop.f32.mrb[0].mxu0
        %v956 = vadd.f32 %v384, %v955
        %v957 = vpop.f32.mrb[0].mxu0
        %v958 = vadd.f32 %v388, %v957
        %959 = vmatprep.mubr.f32.mxu0 0.0
        %960 = vmatmul.mubr.f32.gmra.mrb[0].mxu0 %v303
        %v961 = vpop.f32.mrb[0].mxu0
        %v962 = vadd.f32 %v384, %v961
        %v963 = vpop.f32.mrb[0].mxu0
        %v964 = vadd.f32 %v388, %v963
        %965 = vmatprep.mubr.f32.mxu0 0.0
        %966 = vmatmul.mubr.f32.gmra.mrb[0].mxu0 %v304
        %v967 = vpop.f32.mrb[0].mxu0
        %v968 = vadd.f32 %v384, %v967
        %v969 = vpop.f32.mrb[0].mxu0
        %v970 = vadd.f32 %v388, %v969
        %971 = vmatprep.mubr.f32.mxu0 0.0
        %972 = vmatmul.mubr.f32.gmra.mrb[0].mxu0 %v305
        %v973 = vpop.f32.mrb[0].mxu0
        %v974 = vadd.f32 %v384, %v973
        %v975 = vpop.f32.mrb[0].mxu0
        %v976 = vadd.f32 %v388, %v975
        %977 = vmatprep.mubr.f32.mxu0 0.0
        %978 = vmatmul.mubr.f32.gmra.mrb[0].mxu0 %v306
        %v979 = vpop.f32.mrb[0].mxu0
        %v980 = vadd.f32 %v384, %v979
        %v981 = vpop.f32.mrb[0].mxu0
        %v982 = vadd.f32 %v388, %v981
        %983 = vmatprep.mubr.f32.mxu0 0.0
        %984 = vmatmul.mubr.f32.gmra.mrb[0].mxu0 %v307
        %v985 = vpop.f32.mrb[0].mxu0
        %v986 = vadd.f32 %v384, %v985
        %v987 = vpop.f32.mrb[0].mxu0
        %v988 = vadd.f32 %v388, %v987
        %989 = vmatprep.mubr.f32.mxu0 0.0
        %990 = vmatmul.mubr.f32.gmra.mrb[0].mxu0 %v308
        %v991 = vpop.f32.mrb[0].mxu0
        %v992 = vadd.f32 %v384, %v991
        %v993 = vpop.f32.mrb[0].mxu0
        %v994 = vadd.f32 %v388, %v993
        %995 = vmatprep.mubr.f32.mxu0 0.0
        %996 = vmatmul.mubr.f32.gmra.mrb[0].mxu0 %v309
        %v997 = vpop.f32.mrb[0].mxu0
        %v998 = vadd.f32 %v384, %v997
        %v999 = vpop.f32.mrb[0].mxu0
        %v1000 = vadd.f32 %v388, %v999
        %1001 = vmatprep.mubr.f32.mxu0 0.0
        %1002 = vmatmul.mubr.f32.gmra.mrb[0].mxu0 %v310
        %v1003 = vpop.f32.mrb[0].mxu0
        %v1004 = vadd.f32 %v384, %v1003
        %v1005 = vpop.f32.mrb[0].mxu0
        %v1006 = vadd.f32 %v388, %v1005
        %1007 = vmatprep.mubr.f32.mxu0 0.0
        %1008 = vmatmul.mubr.f32.gmra.mrb[0].mxu0 %v311
        %v1009 = vpop.f32.mrb[0].mxu0
        %v1010 = vadd.f32 %v384, %v1009
        %v1011 = vpop.f32.mrb[0].mxu0
        %v1012 = vadd.f32 %v388, %v1011
        %1013 = vmatprep.mubr.f32.mxu0 0.0
        %1014 = vmatmul.mubr.f32.gmra.mrb[0].mxu0 %v312
        %v1015 = vpop.f32.mrb[0].mxu0
        %v1016 = vadd.f32 %v384, %v1015
        %v1017 = vpop.f32.mrb[0].mxu0
        %v1018 = vadd.f32 %v388, %v1017
        %1019 = vmatprep.mubr.f32.mxu0 0.0
        %1020 = vmatmul.mubr.f32.gmra.mrb[0].mxu0 %v313
        %v1021 = vpop.f32.mrb[0].mxu0
        %v1022 = vadd.f32 %v384, %v1021
        %v1023 = vpop.f32.mrb[0].mxu0
        %v1024 = vadd.f32 %v388, %v1023
        %1025 = vmatprep.mubr.f32.mxu0 0.0
        %1026 = vmatmul.mubr.f32.gmra.mrb[0].mxu0 %v314
        %v1027 = vpop.f32.mrb[0].mxu0
        %v1028 = vadd.f32 %v384, %v1027
        %v1029 = vpop.f32.mrb[0].mxu0
        %v1030 = vadd.f32 %v388, %v1029
        %1031 = vmatprep.mubr.f32.mxu0 0.0
        %1032 = vmatmul.mubr.f32.gmra.mrb[0].mxu0 %v315
        %v1033 = vpop.f32.mrb[0].mxu0
        %v1034 = vadd.f32 %v384, %v1033
        %v1035 = vpop.f32.mrb[0].mxu0
        %v1036 = vadd.f32 %v388, %v1035
        %1037 = vmatprep.mubr.f32.mxu0 0.0
        %1038 = vmatmul.mubr.f32.gmra.mrb[0].mxu0 %v316
        %v1039 = vpop.f32.mrb[0].mxu0
        %v1040 = vadd.f32 %v384, %v1039
        %v1041 = vpop.f32.mrb[0].mxu0
        %v1042 = vadd.f32 %v388, %v1041
        %1043 = vmatprep.mubr.f32.mxu0 0.0
        %1044 = vmatmul.mubr.f32.gmra.mrb[0].mxu0 %v317
        %v1045 = vpop.f32.mrb[0].mxu0
        %v1046 = vadd.f32 %v384, %v1045
        %v1047 = vpop.f32.mrb[0].mxu0
        %v1048 = vadd.f32 %v388, %v1047
        %1049 = vmatprep.mubr.f32.mxu0 0.0
        %1050 = vmatmul.mubr.f32.gmra.mrb[0].mxu0 %v318
        %v1051 = vpop.f32.mrb[0].mxu0
        %v1052 = vadd.f32 %v384, %v1051
        %v1053 = vpop.f32.mrb[0].mxu0
        %v1054 = vadd.f32 %v388, %v1053
        %1055 = vmatprep.mubr.f32.mxu0 0.0
        %1056 = vmatmul.mubr.f32.gmra.mrb[0].mxu0 %v319
        %v1057 = vpop.f32.mrb[0].mxu0
        %v1058 = vadd.f32 %v384, %v1057
        %v1059 = vpop.f32.mrb[0].mxu0
        %v1060 = vadd.f32 %v388, %v1059
        %1061 = vmatprep.mubr.f32.mxu0 0.0
        %1062 = vmatmul.mubr.f32.gmra.mrb[0].mxu0 %v320
        %v1063 = vpop.f32.mrb[0].mxu0
        %v1064 = vadd.f32 %v384, %v1063
        %v1065 = vpop.f32.mrb[0].mxu0
        %v1066 = vadd.f32 %v388, %v1065
        %1067 = vmatprep.mubr.f32.mxu0 0.0
        %1068 = vmatmul.mubr.f32.gmra.mrb[0].mxu0 %v321
        %v1069 = vpop.f32.mrb[0].mxu0
        %v1070 = vadd.f32 %v384, %v1069
        %v1071 = vpop.f32.mrb[0].mxu0
        %v1072 = vadd.f32 %v388, %v1071
        %1073 = vmatprep.mubr.f32.mxu0 0.0
        %1074 = vmatmul.mubr.f32.gmra.mrb[0].mxu0 %v322
        %v1075 = vpop.f32.mrb[0].mxu0
        %v1076 = vadd.f32 %v384, %v1075
        %v1077 = vpop.f32.mrb[0].mxu0
        %v1078 = vadd.f32 %v388, %v1077
        %1079 = vmatprep.mubr.f32.mxu0 0.0
        %1080 = vmatmul.mubr.f32.gmra.mrb[0].mxu0 %v323
        %v1081 = vpop.f32.mrb[0].mxu0
        %v1082 = vadd.f32 %v384, %v1081
        %v1083 = vpop.f32.mrb[0].mxu0
        %v1084 = vadd.f32 %v388, %v1083
        %1085 = vmatprep.mubr.f32.mxu0 0.0
        %1086 = vmatmul.mubr.f32.gmra.mrb[0].mxu0 %v324
        %v1087 = vpop.f32.mrb[0].mxu0
        %v1088 = vadd.f32 %v384, %v1087
        %v1089 = vpop.f32.mrb[0].mxu0
        %v1090 = vadd.f32 %v388, %v1089
        %1091 = vmatprep.mubr.f32.mxu0 0.0
        %1092 = vmatmul.mubr.f32.gmra.mrb[0].mxu0 %v325
        %v1093 = vpop.f32.mrb[0].mxu0
        %v1094 = vadd.f32 %v384, %v1093
        %v1095 = vpop.f32.mrb[0].mxu0
        %v1096 = vadd.f32 %v388, %v1095
        %1097 = vmatprep.mubr.f32.mxu0 0.0
        %1098 = vmatmul.mubr.f32.gmra.mrb[0].mxu0 %v326
        %v1099 = vpop.f32.mrb[0].mxu0
        %v1100 = vadd.f32 %v384, %v1099
        %v1101 = vpop.f32.mrb[0].mxu0
        %v1102 = vadd.f32 %v388, %v1101
        %1103 = vmatprep.mubr.f32.mxu0 0.0
        %1104 = vmatmul.mubr.f32.gmra.mrb[0].mxu0 %v327
        %v1105 = vpop.f32.mrb[0].mxu0
        %v1106 = vadd.f32 %v384, %v1105
        %v1107 = vpop.f32.mrb[0].mxu0
        %v1108 = vadd.f32 %v388, %v1107
        %1109 = vmatprep.mubr.f32.mxu0 0.0
        %1110 = vmatmul.mubr.f32.gmra.mrb[0].mxu0 %v328
        %v1111 = vpop.f32.mrb[0].mxu0
        %v1112 = vadd.f32 %v384, %v1111
        %v1113 = vpop.f32.mrb[0].mxu0
        %v1114 = vadd.f32 %v388, %v1113
        %1115 = vmatprep.mubr.f32.mxu0 0.0
        %1116 = vmatmul.mubr.f32.gmra.mrb[0].mxu0 %v329
        %v1117 = vpop.f32.mrb[0].mxu0
        %v1118 = vadd.f32 %v384, %v1117
        %v1119 = vpop.f32.mrb[0].mxu0
        %v1120 = vadd.f32 %v388, %v1119
        %1121 = vmatprep.mubr.f32.mxu0 0.0
        %1122 = vmatmul.mubr.f32.gmra.mrb[0].mxu0 %v330
        %v1123 = vpop.f32.mrb[0].mxu0
        %v1124 = vadd.f32 %v384, %v1123
        %v1125 = vpop.f32.mrb[0].mxu0
        %v1126 = vadd.f32 %v388, %v1125
        %1127 = vmatprep.mubr.f32.mxu0 0.0
        %1128 = vmatmul.mubr.f32.gmra.mrb[0].mxu0 %v331
        %v1129 = vpop.f32.mrb[0].mxu0
        %v1130 = vadd.f32 %v384, %v1129
        %v1131 = vpop.f32.mrb[0].mxu0
        %v1132 = vadd.f32 %v388, %v1131
        %1133 = vmatprep.mubr.f32.mxu0 0.0
        %1134 = vmatmul.mubr.f32.gmra.mrb[0].mxu0 %v332
        %v1135 = vpop.f32.mrb[0].mxu0
        %v1136 = vadd.f32 %v384, %v1135
        %v1137 = vpop.f32.mrb[0].mxu0
        %v1138 = vadd.f32 %v388, %v1137
        %1139 = vmatprep.mubr.f32.mxu0 0.0
        %1140 = vmatmul.mubr.f32.gmra.mrb[0].mxu0 %v333
        %v1141 = vpop.f32.mrb[0].mxu0
        %v1142 = vadd.f32 %v384, %v1141
        %v1143 = vpop.f32.mrb[0].mxu0
        %v1144 = vadd.f32 %v388, %v1143
        %1145 = vmatprep.mubr.f32.mxu0 0.0
        %1146 = vmatmul.mubr.f32.gmra.mrb[0].mxu0 %v334
        %v1147 = vpop.f32.mrb[0].mxu0
        %v1148 = vadd.f32 %v384, %v1147
        %v1149 = vpop.f32.mrb[0].mxu0
        %v1150 = vadd.f32 %v388, %v1149
        %1151 = vmatprep.mubr.f32.mxu0 0.0
        %1152 = vmatmul.mubr.f32.gmra.mrb[0].mxu0 %v335
        %v1153 = vpop.f32.mrb[0].mxu0
        %v1154 = vadd.f32 %v384, %v1153
        %v1155 = vpop.f32.mrb[0].mxu0
        %v1156 = vadd.f32 %v388, %v1155
        %1157 = vmatprep.mubr.f32.mxu0 0.0
        %1158 = vmatmul.mubr.f32.gmra.mrb[0].mxu0 %v336
        %v1159 = vpop.f32.mrb[0].mxu0
        %v1160 = vadd.f32 %v384, %v1159
        %v1161 = vpop.f32.mrb[0].mxu0
        %v1162 = vadd.f32 %v388, %v1161
        %1163 = vmatprep.mubr.f32.mxu0 0.0
        %1164 = vmatmul.mubr.f32.gmra.mrb[0].mxu0 %v337
        %v1165 = vpop.f32.mrb[0].mxu0
        %v1166 = vadd.f32 %v384, %v1165
        %v1167 = vpop.f32.mrb[0].mxu0
        %v1168 = vadd.f32 %v388, %v1167
        %1169 = vmatprep.mubr.f32.mxu0 0.0
        %1170 = vmatmul.mubr.f32.gmra.mrb[0].mxu0 %v338
        %v1171 = vpop.f32.mrb[0].mxu0
        %v1172 = vadd.f32 %v384, %v1171
        %v1173 = vpop.f32.mrb[0].mxu0
        %v1174 = vadd.f32 %v388, %v1173
        %1175 = vmatprep.mubr.f32.mxu0 0.0
        %1176 = vmatmul.mubr.f32.gmra.mrb[0].mxu0 %v339
        %v1177 = vpop.f32.mrb[0].mxu0
        %v1178 = vadd.f32 %v384, %v1177
        %v1179 = vpop.f32.mrb[0].mxu0
        %v1180 = vadd.f32 %v388, %v1179
        %1181 = vmatprep.mubr.f32.mxu0 0.0
        %1182 = vmatmul.mubr.f32.gmra.mrb[0].mxu0 %v340
        %v1183 = vpop.f32.mrb[0].mxu0
        %v1184 = vadd.f32 %v384, %v1183
        %v1185 = vpop.f32.mrb[0].mxu0
        %v1186 = vadd.f32 %v388, %v1185
        %1187 = vmatprep.mubr.f32.mxu0 0.0
        %1188 = vmatmul.mubr.f32.gmra.mrb[0].mxu0 %v341
        %v1189 = vpop.f32.mrb[0].mxu0
        %v1190 = vadd.f32 %v384, %v1189
        %v1191 = vpop.f32.mrb[0].mxu0
        %v1192 = vadd.f32 %v388, %v1191
        %1193 = vmatprep.mubr.f32.mxu0 0.0
        %1194 = vmatmul.mubr.f32.gmra.mrb[0].mxu0 %v342
        %v1195 = vpop.f32.mrb[0].mxu0
        %v1196 = vadd.f32 %v384, %v1195
        %v1197 = vpop.f32.mrb[0].mxu0
        %v1198 = vadd.f32 %v388, %v1197
        %1199 = vmatprep.mubr.f32.mxu0 0.0
        %1200 = vmatmul.mubr.f32.gmra.mrb[0].mxu0 %v343
        %v1201 = vpop.f32.mrb[0].mxu0
        %v1202 = vadd.f32 %v384, %v1201
        %v1203 = vpop.f32.mrb[0].mxu0
        %v1204 = vadd.f32 %v388, %v1203
        %1205 = vmatprep.mubr.f32.mxu0 0.0
        %1206 = vmatmul.mubr.f32.gmra.mrb[0].mxu0 %v344
        %v1207 = vpop.f32.mrb[0].mxu0
        %v1208 = vadd.f32 %v384, %v1207
        %v1209 = vpop.f32.mrb[0].mxu0
        %v1210 = vadd.f32 %v388, %v1209
        %1211 = vmatprep.mubr.f32.mxu0 0.0
        %1212 = vmatmul.mubr.f32.gmra.mrb[0].mxu0 %v345
        %v1213 = vpop.f32.mrb[0].mxu0
        %v1214 = vadd.f32 %v384, %v1213
        %v1215 = vpop.f32.mrb[0].mxu0
        %v1216 = vadd.f32 %v388, %v1215
        %1217 = vmatprep.mubr.f32.mxu0 0.0
        %1218 = vmatmul.mubr.f32.gmra.mrb[0].mxu0 %v346
        %v1219 = vpop.f32.mrb[0].mxu0
        %v1220 = vadd.f32 %v384, %v1219
        %v1221 = vpop.f32.mrb[0].mxu0
        %v1222 = vadd.f32 %v388, %v1221
        %1223 = vdwg.mxu0
        %v1224 = vxor.u32 %v460, 2147483648
        %v1225 = vxor.u32 %v466, 2147483648
        %v1226 = vxor.u32 %v472, 2147483648
        %v1227 = vxor.u32 %v478, 2147483648
        %v1228 = vxor.u32 %v484, 2147483648
        %v1229 = vxor.u32 %v490, 2147483648
        %v1230 = vxor.u32 %v496, 2147483648
        %v1231 = vxor.u32 %v502, 2147483648
        %v1232 = vxor.u32 %v508, 2147483648
        %v1233 = vxor.u32 %v514, 2147483648
        %v1234 = vxor.u32 %v520, 2147483648
        %v1235 = vxor.u32 %v526, 2147483648
        %v1236 = vxor.u32 %v532, 2147483648
        %v1237 = vxor.u32 %v538, 2147483648
        %v1238 = vxor.u32 %v544, 2147483648
        %v1239 = vxor.u32 %v550, 2147483648
        %v1240 = vxor.u32 %v556, 2147483648
        %v1241 = vxor.u32 %v562, 2147483648
        %v1242 = vxor.u32 %v568, 2147483648
        %v1243 = vxor.u32 %v574, 2147483648
        %v1244 = vxor.u32 %v580, 2147483648
        %v1245 = vxor.u32 %v586, 2147483648
        %v1246 = vxor.u32 %v592, 2147483648
        %v1247 = vxor.u32 %v598, 2147483648
        %v1248 = vxor.u32 %v604, 2147483648
        %v1249 = vxor.u32 %v610, 2147483648
        %v1250 = vxor.u32 %v616, 2147483648
        %v1251 = vxor.u32 %v622, 2147483648
        %v1252 = vxor.u32 %v628, 2147483648
        %v1253 = vxor.u32 %v634, 2147483648
        %v1254 = vxor.u32 %v640, 2147483648
        %v1255 = vxor.u32 %v646, 2147483648
        %v1256 = vxor.u32 %v652, 2147483648
        %v1257 = vxor.u32 %v658, 2147483648
        %v1258 = vxor.u32 %v664, 2147483648
        %v1259 = vxor.u32 %v670, 2147483648
        %v1260 = vxor.u32 %v676, 2147483648
        %v1261 = vxor.u32 %v682, 2147483648
        %v1262 = vxor.u32 %v688, 2147483648
        %v1263 = vxor.u32 %v694, 2147483648
        %v1264 = vxor.u32 %v700, 2147483648
        %v1265 = vxor.u32 %v706, 2147483648
        %v1266 = vxor.u32 %v712, 2147483648
        %v1267 = vxor.u32 %v718, 2147483648
        %v1268 = vxor.u32 %v724, 2147483648
        %v1269 = vxor.u32 %v730, 2147483648
        %v1270 = vxor.u32 %v736, 2147483648
        %v1271 = vxor.u32 %v742, 2147483648
        %v1272 = vxor.u32 %v748, 2147483648
        %v1273 = vxor.u32 %v754, 2147483648
        %v1274 = vxor.u32 %v760, 2147483648
        %v1275 = vxor.u32 %v766, 2147483648
        %v1276 = vxor.u32 %v772, 2147483648
        %v1277 = vxor.u32 %v778, 2147483648
        %v1278 = vxor.u32 %v784, 2147483648
        %v1279 = vxor.u32 %v790, 2147483648
        %v1280 = vxor.u32 %v796, 2147483648
        %v1281 = vxor.u32 %v802, 2147483648
        %v1282 = vxor.u32 %v808, 2147483648
        %v1283 = vxor.u32 %v814, 2147483648
        %v1284 = vxor.u32 %v820, 2147483648
        %v1285 = vxor.u32 %v826, 2147483648
        %v1286 = vxor.u32 %v832, 2147483648
        %v1287 = vxor.u32 %v838, 2147483648
        %v1288 = vxor.u32 %v844, 2147483648
        %v1289 = vxor.u32 %v850, 2147483648
        %v1290 = vxor.u32 %v856, 2147483648
        %v1291 = vxor.u32 %v862, 2147483648
        %v1292 = vxor.u32 %v868, 2147483648
        %v1293 = vxor.u32 %v874, 2147483648
        %v1294 = vxor.u32 %v880, 2147483648
        %v1295 = vxor.u32 %v886, 2147483648
        %v1296 = vxor.u32 %v892, 2147483648
        %v1297 = vxor.u32 %v898, 2147483648
        %v1298 = vxor.u32 %v904, 2147483648
        %v1299 = vxor.u32 %v910, 2147483648
        %v1300 = vxor.u32 %v916, 2147483648
        %v1301 = vxor.u32 %v922, 2147483648
        %v1302 = vxor.u32 %v928, 2147483648
        %v1303 = vxor.u32 %v934, 2147483648
        %v1304 = vxor.u32 %v940, 2147483648
        %v1305 = vxor.u32 %v946, 2147483648
        %v1306 = vxor.u32 %v952, 2147483648
        %v1307 = vxor.u32 %v958, 2147483648
        %v1308 = vxor.u32 %v964, 2147483648
        %v1309 = vxor.u32 %v970, 2147483648
        %v1310 = vxor.u32 %v976, 2147483648
        %v1311 = vxor.u32 %v982, 2147483648
        %v1312 = vxor.u32 %v988, 2147483648
        %v1313 = vxor.u32 %v994, 2147483648
        %v1314 = vxor.u32 %v1000, 2147483648
        %v1315 = vxor.u32 %v1006, 2147483648
        %v1316 = vxor.u32 %v1012, 2147483648
        %v1317 = vxor.u32 %v1018, 2147483648
        %v1318 = vxor.u32 %v1024, 2147483648
        %v1319 = vxor.u32 %v1030, 2147483648
        %v1320 = vxor.u32 %v1036, 2147483648
        %v1321 = vxor.u32 %v1042, 2147483648
        %v1322 = vxor.u32 %v1048, 2147483648
        %v1323 = vxor.u32 %v1054, 2147483648
        %v1324 = vxor.u32 %v1060, 2147483648
        %v1325 = vxor.u32 %v1066, 2147483648
        %v1326 = vxor.u32 %v1072, 2147483648
        %v1327 = vxor.u32 %v1078, 2147483648
        %v1328 = vxor.u32 %v1084, 2147483648
        %v1329 = vxor.u32 %v1090, 2147483648
        %v1330 = vxor.u32 %v1096, 2147483648
        %v1331 = vxor.u32 %v1102, 2147483648
        %v1332 = vxor.u32 %v1108, 2147483648
        %v1333 = vxor.u32 %v1114, 2147483648
        %v1334 = vxor.u32 %v1120, 2147483648
        %v1335 = vxor.u32 %v1126, 2147483648
        %v1336 = vxor.u32 %v1132, 2147483648
        %v1337 = vxor.u32 %v1138, 2147483648
        %v1338 = vxor.u32 %v1144, 2147483648
        %v1339 = vxor.u32 %v1150, 2147483648
        %v1340 = vxor.u32 %v1156, 2147483648
        %v1341 = vxor.u32 %v1162, 2147483648
        %v1342 = vxor.u32 %v1168, 2147483648
        %v1343 = vxor.u32 %v1174, 2147483648
        %v1344 = vxor.u32 %v1180, 2147483648
        %v1345 = vxor.u32 %v1186, 2147483648
        %v1346 = vxor.u32 %v1192, 2147483648
        %v1347 = vxor.u32 %v1198, 2147483648
        %v1348 = vxor.u32 %v1204, 2147483648
        %v1349 = vxor.u32 %v1210, 2147483648
        %v1350 = vxor.u32 %v1216, 2147483648
        %v1351 = vxor.u32 %v1222, 2147483648
        %v1352 = vmul.f32 %v1224, 1.442695
        %v1353 = vpow.pop %v1352
        %v1354 = vmul.f32 %v1225, 1.442695
        %v1355 = vpow.pop %v1354
        %v1356 = vmul.f32 %v1226, 1.442695
        %v1357 = vpow.pop %v1356
        %v1358 = vmul.f32 %v1227, 1.442695
        %v1359 = vpow.pop %v1358
        %v1360 = vmul.f32 %v1228, 1.442695
        %v1361 = vpow.pop %v1360
        %v1362 = vmul.f32 %v1229, 1.442695
        %v1363 = vpow.pop %v1362
        %v1364 = vmul.f32 %v1230, 1.442695
        %v1365 = vpow.pop %v1364
        %v1366 = vmul.f32 %v1231, 1.442695
        %v1367 = vpow.pop %v1366
        %v1368 = vmul.f32 %v1232, 1.442695
        %v1369 = vpow.pop %v1368
        %v1370 = vmul.f32 %v1233, 1.442695
        %v1371 = vpow.pop %v1370
        %v1372 = vmul.f32 %v1234, 1.442695
        %v1373 = vpow.pop %v1372
        %v1374 = vmul.f32 %v1235, 1.442695
        %v1375 = vpow.pop %v1374
        %v1376 = vmul.f32 %v1236, 1.442695
        %v1377 = vpow.pop %v1376
        %v1378 = vmul.f32 %v1237, 1.442695
        %v1379 = vpow.pop %v1378
        %v1380 = vmul.f32 %v1238, 1.442695
        %v1381 = vpow.pop %v1380
        %v1382 = vmul.f32 %v1239, 1.442695
        %v1383 = vpow.pop %v1382
        %v1384 = vmul.f32 %v1240, 1.442695
        %v1385 = vpow.pop %v1384
        %v1386 = vmul.f32 %v1241, 1.442695
        %v1387 = vpow.pop %v1386
        %v1388 = vmul.f32 %v1242, 1.442695
        %v1389 = vpow.pop %v1388
        %v1390 = vmul.f32 %v1243, 1.442695
        %v1391 = vpow.pop %v1390
        %v1392 = vmul.f32 %v1244, 1.442695
        %v1393 = vpow.pop %v1392
        %v1394 = vmul.f32 %v1245, 1.442695
        %v1395 = vpow.pop %v1394
        %v1396 = vmul.f32 %v1246, 1.442695
        %v1397 = vpow.pop %v1396
        %v1398 = vmul.f32 %v1247, 1.442695
        %v1399 = vpow.pop %v1398
        %v1400 = vmul.f32 %v1248, 1.442695
        %v1401 = vpow.pop %v1400
        %v1402 = vmul.f32 %v1249, 1.442695
        %v1403 = vpow.pop %v1402
        %v1404 = vmul.f32 %v1250, 1.442695
        %v1405 = vpow.pop %v1404
        %v1406 = vmul.f32 %v1251, 1.442695
        %v1407 = vpow.pop %v1406
        %v1408 = vmul.f32 %v1252, 1.442695
        %v1409 = vpow.pop %v1408
        %v1410 = vmul.f32 %v1253, 1.442695
        %v1411 = vpow.pop %v1410
        %v1412 = vmul.f32 %v1254, 1.442695
        %v1413 = vpow.pop %v1412
        %v1414 = vmul.f32 %v1255, 1.442695
        %v1415 = vpow.pop %v1414
        %v1416 = vmul.f32 %v1256, 1.442695
        %v1417 = vpow.pop %v1416
        %v1418 = vmul.f32 %v1257, 1.442695
        %v1419 = vpow.pop %v1418
        %v1420 = vmul.f32 %v1258, 1.442695
        %v1421 = vpow.pop %v1420
        %v1422 = vmul.f32 %v1259, 1.442695
        %v1423 = vpow.pop %v1422
        %v1424 = vmul.f32 %v1260, 1.442695
        %v1425 = vpow.pop %v1424
        %v1426 = vmul.f32 %v1261, 1.442695
        %v1427 = vpow.pop %v1426
        %v1428 = vmul.f32 %v1262, 1.442695
        %v1429 = vpow.pop %v1428
        %v1430 = vmul.f32 %v1263, 1.442695
        %v1431 = vpow.pop %v1430
        %v1432 = vmul.f32 %v1264, 1.442695
        %v1433 = vpow.pop %v1432
        %v1434 = vmul.f32 %v1265, 1.442695
        %v1435 = vpow.pop %v1434
        %v1436 = vmul.f32 %v1266, 1.442695
        %v1437 = vpow.pop %v1436
        %v1438 = vmul.f32 %v1267, 1.442695
        %v1439 = vpow.pop %v1438
        %v1440 = vmul.f32 %v1268, 1.442695
        %v1441 = vpow.pop %v1440
        %v1442 = vmul.f32 %v1269, 1.442695
        %v1443 = vpow.pop %v1442
        %v1444 = vmul.f32 %v1270, 1.442695
        %v1445 = vpow.pop %v1444
        %v1446 = vmul.f32 %v1271, 1.442695
        %v1447 = vpow.pop %v1446
        %v1448 = vmul.f32 %v1272, 1.442695
        %v1449 = vpow.pop %v1448
        %v1450 = vmul.f32 %v1273, 1.442695
        %v1451 = vpow.pop %v1450
        %v1452 = vmul.f32 %v1274, 1.442695
        %v1453 = vpow.pop %v1452
        %v1454 = vmul.f32 %v1275, 1.442695
        %v1455 = vpow.pop %v1454
        %v1456 = vmul.f32 %v1276, 1.442695
        %v1457 = vpow.pop %v1456
        %v1458 = vmul.f32 %v1277, 1.442695
        %v1459 = vpow.pop %v1458
        %v1460 = vmul.f32 %v1278, 1.442695
        %v1461 = vpow.pop %v1460
        %v1462 = vmul.f32 %v1279, 1.442695
        %v1463 = vpow.pop %v1462
        %v1464 = vmul.f32 %v1280, 1.442695
        %v1465 = vpow.pop %v1464
        %v1466 = vmul.f32 %v1281, 1.442695
        %v1467 = vpow.pop %v1466
        %v1468 = vmul.f32 %v1282, 1.442695
        %v1469 = vpow.pop %v1468
        %v1470 = vmul.f32 %v1283, 1.442695
        %v1471 = vpow.pop %v1470
        %v1472 = vmul.f32 %v1284, 1.442695
        %v1473 = vpow.pop %v1472
        %v1474 = vmul.f32 %v1285, 1.442695
        %v1475 = vpow.pop %v1474
        %v1476 = vmul.f32 %v1286, 1.442695
        %v1477 = vpow.pop %v1476
        %v1478 = vmul.f32 %v1287, 1.442695
        %v1479 = vpow.pop %v1478
        %v1480 = vmul.f32 %v1288, 1.442695
        %v1481 = vpow.pop %v1480
        %v1482 = vmul.f32 %v1289, 1.442695
        %v1483 = vpow.pop %v1482
        %v1484 = vmul.f32 %v1290, 1.442695
        %v1485 = vpow.pop %v1484
        %v1486 = vmul.f32 %v1291, 1.442695
        %v1487 = vpow.pop %v1486
        %v1488 = vmul.f32 %v1292, 1.442695
        %v1489 = vpow.pop %v1488
        %v1490 = vmul.f32 %v1293, 1.442695
        %v1491 = vpow.pop %v1490
        %v1492 = vmul.f32 %v1294, 1.442695
        %v1493 = vpow.pop %v1492
        %v1494 = vmul.f32 %v1295, 1.442695
        %v1495 = vpow.pop %v1494
        %v1496 = vmul.f32 %v1296, 1.442695
        %v1497 = vpow.pop %v1496
        %v1498 = vmul.f32 %v1297, 1.442695
        %v1499 = vpow.pop %v1498
        %v1500 = vmul.f32 %v1298, 1.442695
        %v1501 = vpow.pop %v1500
        %v1502 = vmul.f32 %v1299, 1.442695
        %v1503 = vpow.pop %v1502
        %v1504 = vmul.f32 %v1300, 1.442695
        %v1505 = vpow.pop %v1504
        %v1506 = vmul.f32 %v1301, 1.442695
        %v1507 = vpow.pop %v1506
        %v1508 = vmul.f32 %v1302, 1.442695
        %v1509 = vpow.pop %v1508
        %v1510 = vmul.f32 %v1303, 1.442695
        %v1511 = vpow.pop %v1510
        %v1512 = vmul.f32 %v1304, 1.442695
        %v1513 = vpow.pop %v1512
        %v1514 = vmul.f32 %v1305, 1.442695
        %v1515 = vpow.pop %v1514
        %v1516 = vmul.f32 %v1306, 1.442695
        %v1517 = vpow.pop %v1516
        %v1518 = vmul.f32 %v1307, 1.442695
        %v1519 = vpow.pop %v1518
        %v1520 = vmul.f32 %v1308, 1.442695
        %v1521 = vpow.pop %v1520
        %v1522 = vmul.f32 %v1309, 1.442695
        %v1523 = vpow.pop %v1522
        %v1524 = vmul.f32 %v1310, 1.442695
        %v1525 = vpow.pop %v1524
        %v1526 = vmul.f32 %v1311, 1.442695
        %v1527 = vpow.pop %v1526
        %v1528 = vmul.f32 %v1312, 1.442695
        %v1529 = vpow.pop %v1528
        %v1530 = vmul.f32 %v1313, 1.442695
        %v1531 = vpow.pop %v1530
        %v1532 = vmul.f32 %v1314, 1.442695
        %v1533 = vpow.pop %v1532
        %v1534 = vmul.f32 %v1315, 1.442695
        %v1535 = vpow.pop %v1534
        %v1536 = vmul.f32 %v1316, 1.442695
        %v1537 = vpow.pop %v1536
        %v1538 = vmul.f32 %v1317, 1.442695
        %v1539 = vpow.pop %v1538
        %v1540 = vmul.f32 %v1318, 1.442695
        %v1541 = vpow.pop %v1540
        %v1542 = vmul.f32 %v1319, 1.442695
        %v1543 = vpow.pop %v1542
        %v1544 = vmul.f32 %v1320, 1.442695
        %v1545 = vpow.pop %v1544
        %v1546 = vmul.f32 %v1321, 1.442695
        %v1547 = vpow.pop %v1546
        %v1548 = vmul.f32 %v1322, 1.442695
        %v1549 = vpow.pop %v1548
        %v1550 = vmul.f32 %v1323, 1.442695
        %v1551 = vpow.pop %v1550
        %v1552 = vmul.f32 %v1324, 1.442695
        %v1553 = vpow.pop %v1552
        %v1554 = vmul.f32 %v1325, 1.442695
        %v1555 = vpow.pop %v1554
        %v1556 = vmul.f32 %v1326, 1.442695
        %v1557 = vpow.pop %v1556
        %v1558 = vmul.f32 %v1327, 1.442695
        %v1559 = vpow.pop %v1558
        %v1560 = vmul.f32 %v1328, 1.442695
        %v1561 = vpow.pop %v1560
        %v1562 = vmul.f32 %v1329, 1.442695
        %v1563 = vpow.pop %v1562
        %v1564 = vmul.f32 %v1330, 1.442695
        %v1565 = vpow.pop %v1564
        %v1566 = vmul.f32 %v1331, 1.442695
        %v1567 = vpow.pop %v1566
        %v1568 = vmul.f32 %v1332, 1.442695
        %v1569 = vpow.pop %v1568
        %v1570 = vmul.f32 %v1333, 1.442695
        %v1571 = vpow.pop %v1570
        %v1572 = vmul.f32 %v1334, 1.442695
        %v1573 = vpow.pop %v1572
        %v1574 = vmul.f32 %v1335, 1.442695
        %v1575 = vpow.pop %v1574
        %v1576 = vmul.f32 %v1336, 1.442695
        %v1577 = vpow.pop %v1576
        %v1578 = vmul.f32 %v1337, 1.442695
        %v1579 = vpow.pop %v1578
        %v1580 = vmul.f32 %v1338, 1.442695
        %v1581 = vpow.pop %v1580
        %v1582 = vmul.f32 %v1339, 1.442695
        %v1583 = vpow.pop %v1582
        %v1584 = vmul.f32 %v1340, 1.442695
        %v1585 = vpow.pop %v1584
        %v1586 = vmul.f32 %v1341, 1.442695
        %v1587 = vpow.pop %v1586
        %v1588 = vmul.f32 %v1342, 1.442695
        %v1589 = vpow.pop %v1588
        %v1590 = vmul.f32 %v1343, 1.442695
        %v1591 = vpow.pop %v1590
        %v1592 = vmul.f32 %v1344, 1.442695
        %v1593 = vpow.pop %v1592
        %v1594 = vmul.f32 %v1345, 1.442695
        %v1595 = vpow.pop %v1594
        %v1596 = vmul.f32 %v1346, 1.442695
        %v1597 = vpow.pop %v1596
        %v1598 = vmul.f32 %v1347, 1.442695
        %v1599 = vpow.pop %v1598
        %v1600 = vmul.f32 %v1348, 1.442695
        %v1601 = vpow.pop %v1600
        %v1602 = vmul.f32 %v1349, 1.442695
        %v1603 = vpow.pop %v1602
        %v1604 = vmul.f32 %v1350, 1.442695
        %v1605 = vpow.pop %v1604
        %v1606 = vmul.f32 %v1351, 1.442695
        %v1607 = vpow.pop %v1606
        %v1608 = vadd.f32 %v1353, 1.0
        %v1609 = vadd.f32 %v1355, 1.0
        %v1610 = vadd.f32 %v1357, 1.0
        %v1611 = vadd.f32 %v1359, 1.0
        %v1612 = vadd.f32 %v1361, 1.0
        %v1613 = vadd.f32 %v1363, 1.0
        %v1614 = vadd.f32 %v1365, 1.0
        %v1615 = vadd.f32 %v1367, 1.0
        %v1616 = vadd.f32 %v1369, 1.0
        %v1617 = vadd.f32 %v1371, 1.0
        %v1618 = vadd.f32 %v1373, 1.0
        %v1619 = vadd.f32 %v1375, 1.0
        %v1620 = vadd.f32 %v1377, 1.0
        %v1621 = vadd.f32 %v1379, 1.0
        %v1622 = vadd.f32 %v1381, 1.0
        %v1623 = vadd.f32 %v1383, 1.0
        %v1624 = vadd.f32 %v1385, 1.0
        %v1625 = vadd.f32 %v1387, 1.0
        %v1626 = vadd.f32 %v1389, 1.0
        %v1627 = vadd.f32 %v1391, 1.0
        %v1628 = vadd.f32 %v1393, 1.0
        %v1629 = vadd.f32 %v1395, 1.0
        %v1630 = vadd.f32 %v1397, 1.0
        %v1631 = vadd.f32 %v1399, 1.0
        %v1632 = vadd.f32 %v1401, 1.0
        %v1633 = vadd.f32 %v1403, 1.0
        %v1634 = vadd.f32 %v1405, 1.0
        %v1635 = vadd.f32 %v1407, 1.0
        %v1636 = vadd.f32 %v1409, 1.0
        %v1637 = vadd.f32 %v1411, 1.0
        %v1638 = vadd.f32 %v1413, 1.0
        %v1639 = vadd.f32 %v1415, 1.0
        %v1640 = vadd.f32 %v1417, 1.0
        %v1641 = vadd.f32 %v1419, 1.0
        %v1642 = vadd.f32 %v1421, 1.0
        %v1643 = vadd.f32 %v1423, 1.0
        %v1644 = vadd.f32 %v1425, 1.0
        %v1645 = vadd.f32 %v1427, 1.0
        %v1646 = vadd.f32 %v1429, 1.0
        %v1647 = vadd.f32 %v1431, 1.0
        %v1648 = vadd.f32 %v1433, 1.0
        %v1649 = vadd.f32 %v1435, 1.0
        %v1650 = vadd.f32 %v1437, 1.0
        %v1651 = vadd.f32 %v1439, 1.0
        %v1652 = vadd.f32 %v1441, 1.0
        %v1653 = vadd.f32 %v1443, 1.0
        %v1654 = vadd.f32 %v1445, 1.0
        %v1655 = vadd.f32 %v1447, 1.0
        %v1656 = vadd.f32 %v1449, 1.0
        %v1657 = vadd.f32 %v1451, 1.0
        %v1658 = vadd.f32 %v1453, 1.0
        %v1659 = vadd.f32 %v1455, 1.0
        %v1660 = vadd.f32 %v1457, 1.0
        %v1661 = vadd.f32 %v1459, 1.0
        %v1662 = vadd.f32 %v1461, 1.0
        %v1663 = vadd.f32 %v1463, 1.0
        %v1664 = vadd.f32 %v1465, 1.0
        %v1665 = vadd.f32 %v1467, 1.0
        %v1666 = vadd.f32 %v1469, 1.0
        %v1667 = vadd.f32 %v1471, 1.0
        %v1668 = vadd.f32 %v1473, 1.0
        %v1669 = vadd.f32 %v1475, 1.0
        %v1670 = vadd.f32 %v1477, 1.0
        %v1671 = vadd.f32 %v1479, 1.0
        %v1672 = vadd.f32 %v1481, 1.0
        %v1673 = vadd.f32 %v1483, 1.0
        %v1674 = vadd.f32 %v1485, 1.0
        %v1675 = vadd.f32 %v1487, 1.0
        %v1676 = vadd.f32 %v1489, 1.0
        %v1677 = vadd.f32 %v1491, 1.0
        %v1678 = vadd.f32 %v1493, 1.0
        %v1679 = vadd.f32 %v1495, 1.0
        %v1680 = vadd.f32 %v1497, 1.0
        %v1681 = vadd.f32 %v1499, 1.0
        %v1682 = vadd.f32 %v1501, 1.0
        %v1683 = vadd.f32 %v1503, 1.0
        %v1684 = vadd.f32 %v1505, 1.0
        %v1685 = vadd.f32 %v1507, 1.0
        %v1686 = vadd.f32 %v1509, 1.0
        %v1687 = vadd.f32 %v1511, 1.0
        %v1688 = vadd.f32 %v1513, 1.0
        %v1689 = vadd.f32 %v1515, 1.0
        %v1690 = vadd.f32 %v1517, 1.0
        %v1691 = vadd.f32 %v1519, 1.0
        %v1692 = vadd.f32 %v1521, 1.0
        %v1693 = vadd.f32 %v1523, 1.0
        %v1694 = vadd.f32 %v1525, 1.0
        %v1695 = vadd.f32 %v1527, 1.0
        %v1696 = vadd.f32 %v1529, 1.0
        %v1697 = vadd.f32 %v1531, 1.0
        %v1698 = vadd.f32 %v1533, 1.0
        %v1699 = vadd.f32 %v1535, 1.0
        %v1700 = vadd.f32 %v1537, 1.0
        %v1701 = vadd.f32 %v1539, 1.0
        %v1702 = vadd.f32 %v1541, 1.0
        %v1703 = vadd.f32 %v1543, 1.0
        %v1704 = vadd.f32 %v1545, 1.0
        %v1705 = vadd.f32 %v1547, 1.0
        %v1706 = vadd.f32 %v1549, 1.0
        %v1707 = vadd.f32 %v1551, 1.0
        %v1708 = vadd.f32 %v1553, 1.0
        %v1709 = vadd.f32 %v1555, 1.0
        %v1710 = vadd.f32 %v1557, 1.0
        %v1711 = vadd.f32 %v1559, 1.0
        %v1712 = vadd.f32 %v1561, 1.0
        %v1713 = vadd.f32 %v1563, 1.0
        %v1714 = vadd.f32 %v1565, 1.0
        %v1715 = vadd.f32 %v1567, 1.0
        %v1716 = vadd.f32 %v1569, 1.0
        %v1717 = vadd.f32 %v1571, 1.0
        %v1718 = vadd.f32 %v1573, 1.0
        %v1719 = vadd.f32 %v1575, 1.0
        %v1720 = vadd.f32 %v1577, 1.0
        %v1721 = vadd.f32 %v1579, 1.0
        %v1722 = vadd.f32 %v1581, 1.0
        %v1723 = vadd.f32 %v1583, 1.0
        %v1724 = vadd.f32 %v1585, 1.0
        %v1725 = vadd.f32 %v1587, 1.0
        %v1726 = vadd.f32 %v1589, 1.0
        %v1727 = vadd.f32 %v1591, 1.0
        %v1728 = vadd.f32 %v1593, 1.0
        %v1729 = vadd.f32 %v1595, 1.0
        %v1730 = vadd.f32 %v1597, 1.0
        %v1731 = vadd.f32 %v1599, 1.0
        %v1732 = vadd.f32 %v1601, 1.0
        %v1733 = vadd.f32 %v1603, 1.0
        %v1734 = vadd.f32 %v1605, 1.0
        %v1735 = vadd.f32 %v1607, 1.0
        %v1736 = vrcp.pop %v1608
        %v1737 = vmul.f32 1.0, %v1736
        %v1738 = vrcp.pop %v1609
        %v1739 = vmul.f32 1.0, %v1738
        %v1740 = vrcp.pop %v1610
        %v1741 = vmul.f32 1.0, %v1740
        %v1742 = vrcp.pop %v1611
        %v1743 = vmul.f32 1.0, %v1742
        %v1744 = vrcp.pop %v1612
        %v1745 = vmul.f32 1.0, %v1744
        %v1746 = vrcp.pop %v1613
        %v1747 = vmul.f32 1.0, %v1746
        %v1748 = vrcp.pop %v1614
        %v1749 = vmul.f32 1.0, %v1748
        %v1750 = vrcp.pop %v1615
        %v1751 = vmul.f32 1.0, %v1750
        %v1752 = vrcp.pop %v1616
        %v1753 = vmul.f32 1.0, %v1752
        %v1754 = vrcp.pop %v1617
        %v1755 = vmul.f32 1.0, %v1754
        %v1756 = vrcp.pop %v1618
        %v1757 = vmul.f32 1.0, %v1756
        %v1758 = vrcp.pop %v1619
        %v1759 = vmul.f32 1.0, %v1758
        %v1760 = vrcp.pop %v1620
        %v1761 = vmul.f32 1.0, %v1760
        %v1762 = vrcp.pop %v1621
        %v1763 = vmul.f32 1.0, %v1762
        %v1764 = vrcp.pop %v1622
        %v1765 = vmul.f32 1.0, %v1764
        %v1766 = vrcp.pop %v1623
        %v1767 = vmul.f32 1.0, %v1766
        %v1768 = vrcp.pop %v1624
        %v1769 = vmul.f32 1.0, %v1768
        %v1770 = vrcp.pop %v1625
        %v1771 = vmul.f32 1.0, %v1770
        %v1772 = vrcp.pop %v1626
        %v1773 = vmul.f32 1.0, %v1772
        %v1774 = vrcp.pop %v1627
        %v1775 = vmul.f32 1.0, %v1774
        %v1776 = vrcp.pop %v1628
        %v1777 = vmul.f32 1.0, %v1776
        %v1778 = vrcp.pop %v1629
        %v1779 = vmul.f32 1.0, %v1778
        %v1780 = vrcp.pop %v1630
        %v1781 = vmul.f32 1.0, %v1780
        %v1782 = vrcp.pop %v1631
        %v1783 = vmul.f32 1.0, %v1782
        %v1784 = vrcp.pop %v1632
        %v1785 = vmul.f32 1.0, %v1784
        %v1786 = vrcp.pop %v1633
        %v1787 = vmul.f32 1.0, %v1786
        %v1788 = vrcp.pop %v1634
        %v1789 = vmul.f32 1.0, %v1788
        %v1790 = vrcp.pop %v1635
        %v1791 = vmul.f32 1.0, %v1790
        %v1792 = vrcp.pop %v1636
        %v1793 = vmul.f32 1.0, %v1792
        %v1794 = vrcp.pop %v1637
        %v1795 = vmul.f32 1.0, %v1794
        %v1796 = vrcp.pop %v1638
        %v1797 = vmul.f32 1.0, %v1796
        %v1798 = vrcp.pop %v1639
        %v1799 = vmul.f32 1.0, %v1798
        %v1800 = vrcp.pop %v1640
        %v1801 = vmul.f32 1.0, %v1800
        %v1802 = vrcp.pop %v1641
        %v1803 = vmul.f32 1.0, %v1802
        %v1804 = vrcp.pop %v1642
        %v1805 = vmul.f32 1.0, %v1804
        %v1806 = vrcp.pop %v1643
        %v1807 = vmul.f32 1.0, %v1806
        %v1808 = vrcp.pop %v1644
        %v1809 = vmul.f32 1.0, %v1808
        %v1810 = vrcp.pop %v1645
        %v1811 = vmul.f32 1.0, %v1810
        %v1812 = vrcp.pop %v1646
        %v1813 = vmul.f32 1.0, %v1812
        %v1814 = vrcp.pop %v1647
        %v1815 = vmul.f32 1.0, %v1814
        %v1816 = vrcp.pop %v1648
        %v1817 = vmul.f32 1.0, %v1816
        %v1818 = vrcp.pop %v1649
        %v1819 = vmul.f32 1.0, %v1818
        %v1820 = vrcp.pop %v1650
        %v1821 = vmul.f32 1.0, %v1820
        %v1822 = vrcp.pop %v1651
        %v1823 = vmul.f32 1.0, %v1822
        %v1824 = vrcp.pop %v1652
        %v1825 = vmul.f32 1.0, %v1824
        %v1826 = vrcp.pop %v1653
        %v1827 = vmul.f32 1.0, %v1826
        %v1828 = vrcp.pop %v1654
        %v1829 = vmul.f32 1.0, %v1828
        %v1830 = vrcp.pop %v1655
        %v1831 = vmul.f32 1.0, %v1830
        %v1832 = vrcp.pop %v1656
        %v1833 = vmul.f32 1.0, %v1832
        %v1834 = vrcp.pop %v1657
        %v1835 = vmul.f32 1.0, %v1834
        %v1836 = vrcp.pop %v1658
        %v1837 = vmul.f32 1.0, %v1836
        %v1838 = vrcp.pop %v1659
        %v1839 = vmul.f32 1.0, %v1838
        %v1840 = vrcp.pop %v1660
        %v1841 = vmul.f32 1.0, %v1840
        %v1842 = vrcp.pop %v1661
        %v1843 = vmul.f32 1.0, %v1842
        %v1844 = vrcp.pop %v1662
        %v1845 = vmul.f32 1.0, %v1844
        %v1846 = vrcp.pop %v1663
        %v1847 = vmul.f32 1.0, %v1846
        %v1848 = vrcp.pop %v1664
        %v1849 = vmul.f32 1.0, %v1848
        %v1850 = vrcp.pop %v1665
        %v1851 = vmul.f32 1.0, %v1850
        %v1852 = vrcp.pop %v1666
        %v1853 = vmul.f32 1.0, %v1852
        %v1854 = vrcp.pop %v1667
        %v1855 = vmul.f32 1.0, %v1854
        %v1856 = vrcp.pop %v1668
        %v1857 = vmul.f32 1.0, %v1856
        %v1858 = vrcp.pop %v1669
        %v1859 = vmul.f32 1.0, %v1858
        %v1860 = vrcp.pop %v1670
        %v1861 = vmul.f32 1.0, %v1860
        %v1862 = vrcp.pop %v1671
        %v1863 = vmul.f32 1.0, %v1862
        %v1864 = vrcp.pop %v1672
        %v1865 = vmul.f32 1.0, %v1864
        %v1866 = vrcp.pop %v1673
        %v1867 = vmul.f32 1.0, %v1866
        %v1868 = vrcp.pop %v1674
        %v1869 = vmul.f32 1.0, %v1868
        %v1870 = vrcp.pop %v1675
        %v1871 = vmul.f32 1.0, %v1870
        %v1872 = vrcp.pop %v1676
        %v1873 = vmul.f32 1.0, %v1872
        %v1874 = vrcp.pop %v1677
        %v1875 = vmul.f32 1.0, %v1874
        %v1876 = vrcp.pop %v1678
        %v1877 = vmul.f32 1.0, %v1876
        %v1878 = vrcp.pop %v1679
        %v1879 = vmul.f32 1.0, %v1878
        %v1880 = vrcp.pop %v1680
        %v1881 = vmul.f32 1.0, %v1880
        %v1882 = vrcp.pop %v1681
        %v1883 = vmul.f32 1.0, %v1882
        %v1884 = vrcp.pop %v1682
        %v1885 = vmul.f32 1.0, %v1884
        %v1886 = vrcp.pop %v1683
        %v1887 = vmul.f32 1.0, %v1886
        %v1888 = vrcp.pop %v1684
        %v1889 = vmul.f32 1.0, %v1888
        %v1890 = vrcp.pop %v1685
        %v1891 = vmul.f32 1.0, %v1890
        %v1892 = vrcp.pop %v1686
        %v1893 = vmul.f32 1.0, %v1892
        %v1894 = vrcp.pop %v1687
        %v1895 = vmul.f32 1.0, %v1894
        %v1896 = vrcp.pop %v1688
        %v1897 = vmul.f32 1.0, %v1896
        %v1898 = vrcp.pop %v1689
        %v1899 = vmul.f32 1.0, %v1898
        %v1900 = vrcp.pop %v1690
        %v1901 = vmul.f32 1.0, %v1900
        %v1902 = vrcp.pop %v1691
        %v1903 = vmul.f32 1.0, %v1902
        %v1904 = vrcp.pop %v1692
        %v1905 = vmul.f32 1.0, %v1904
        %v1906 = vrcp.pop %v1693
        %v1907 = vmul.f32 1.0, %v1906
        %v1908 = vrcp.pop %v1694
        %v1909 = vmul.f32 1.0, %v1908
        %v1910 = vrcp.pop %v1695
        %v1911 = vmul.f32 1.0, %v1910
        %v1912 = vrcp.pop %v1696
        %v1913 = vmul.f32 1.0, %v1912
        %v1914 = vrcp.pop %v1697
        %v1915 = vmul.f32 1.0, %v1914
        %v1916 = vrcp.pop %v1698
        %v1917 = vmul.f32 1.0, %v1916
        %v1918 = vrcp.pop %v1699
        %v1919 = vmul.f32 1.0, %v1918
        %v1920 = vrcp.pop %v1700
        %v1921 = vmul.f32 1.0, %v1920
        %v1922 = vrcp.pop %v1701
        %v1923 = vmul.f32 1.0, %v1922
        %v1924 = vrcp.pop %v1702
        %v1925 = vmul.f32 1.0, %v1924
        %v1926 = vrcp.pop %v1703
        %v1927 = vmul.f32 1.0, %v1926
        %v1928 = vrcp.pop %v1704
        %v1929 = vmul.f32 1.0, %v1928
        %v1930 = vrcp.pop %v1705
        %v1931 = vmul.f32 1.0, %v1930
        %v1932 = vrcp.pop %v1706
        %v1933 = vmul.f32 1.0, %v1932
        %v1934 = vrcp.pop %v1707
        %v1935 = vmul.f32 1.0, %v1934
        %v1936 = vrcp.pop %v1708
        %v1937 = vmul.f32 1.0, %v1936
        %v1938 = vrcp.pop %v1709
        %v1939 = vmul.f32 1.0, %v1938
        %v1940 = vrcp.pop %v1710
        %v1941 = vmul.f32 1.0, %v1940
        %v1942 = vrcp.pop %v1711
        %v1943 = vmul.f32 1.0, %v1942
        %v1944 = vrcp.pop %v1712
        %v1945 = vmul.f32 1.0, %v1944
        %v1946 = vrcp.pop %v1713
        %v1947 = vmul.f32 1.0, %v1946
        %v1948 = vrcp.pop %v1714
        %v1949 = vmul.f32 1.0, %v1948
        %v1950 = vrcp.pop %v1715
        %v1951 = vmul.f32 1.0, %v1950
        %v1952 = vrcp.pop %v1716
        %v1953 = vmul.f32 1.0, %v1952
        %v1954 = vrcp.pop %v1717
        %v1955 = vmul.f32 1.0, %v1954
        %v1956 = vrcp.pop %v1718
        %v1957 = vmul.f32 1.0, %v1956
        %v1958 = vrcp.pop %v1719
        %v1959 = vmul.f32 1.0, %v1958
        %v1960 = vrcp.pop %v1720
        %v1961 = vmul.f32 1.0, %v1960
        %v1962 = vrcp.pop %v1721
        %v1963 = vmul.f32 1.0, %v1962
        %v1964 = vrcp.pop %v1722
        %v1965 = vmul.f32 1.0, %v1964
        %v1966 = vrcp.pop %v1723
        %v1967 = vmul.f32 1.0, %v1966
        %v1968 = vrcp.pop %v1724
        %v1969 = vmul.f32 1.0, %v1968
        %v1970 = vrcp.pop %v1725
        %v1971 = vmul.f32 1.0, %v1970
        %v1972 = vrcp.pop %v1726
        %v1973 = vmul.f32 1.0, %v1972
        %v1974 = vrcp.pop %v1727
        %v1975 = vmul.f32 1.0, %v1974
        %v1976 = vrcp.pop %v1728
        %v1977 = vmul.f32 1.0, %v1976
        %v1978 = vrcp.pop %v1729
        %v1979 = vmul.f32 1.0, %v1978
        %v1980 = vrcp.pop %v1730
        %v1981 = vmul.f32 1.0, %v1980
        %v1982 = vrcp.pop %v1731
        %v1983 = vmul.f32 1.0, %v1982
        %v1984 = vrcp.pop %v1732
        %v1985 = vmul.f32 1.0, %v1984
        %v1986 = vrcp.pop %v1733
        %v1987 = vmul.f32 1.0, %v1986
        %v1988 = vrcp.pop %v1734
        %v1989 = vmul.f32 1.0, %v1988
        %v1990 = vrcp.pop %v1735
        %v1991 = vmul.f32 1.0, %v1990
        %v1992 = vld [vmem:[%s2] sm:$0xff]
        %v1993 = vld [vmem:[%s2 + $0x8] sm:$0xff]
        %v1994 = vld [vmem:[%s2 + $0x10] sm:$0xff]
        %v1995 = vld [vmem:[%s2 + $0x18] sm:$0xff]
        %v1996 = vld [vmem:[%s2 + $0x20] sm:$0xff]
        %v1997 = vld [vmem:[%s2 + $0x28] sm:$0xff]
        %v1998 = vld [vmem:[%s2 + $0x30] sm:$0xff]
        %v1999 = vld [vmem:[%s2 + $0x38] sm:$0xff]
        %v2000 = vld [vmem:[%s2 + $0x40] sm:$0xff]
        %v2001 = vld [vmem:[%s2 + $0x48] sm:$0xff]
        %v2002 = vld [vmem:[%s2 + $0x50] sm:$0xff]
        %v2003 = vld [vmem:[%s2 + $0x58] sm:$0xff]
        %v2004 = vld [vmem:[%s2 + $0x60] sm:$0xff]
        %v2005 = vld [vmem:[%s2 + $0x68] sm:$0xff]
        %v2006 = vld [vmem:[%s2 + $0x70] sm:$0xff]
        %v2007 = vld [vmem:[%s2 + $0x78] sm:$0xff]
        %2008 = vmatprep.subr.mxu0 0.0
        %2009 = vmatpush1.msra.mxu0 %v1992
        %2010 = vmatprep.subr.mxu0 0.0
        %2011 = vmatpush1.msra.mxu0 %v1993
        %2012 = vmatprep.subr.mxu0 0.0
        %2013 = vmatpush1.msra.mxu0 %v1994
        %2014 = vmatprep.subr.mxu0 0.0
        %2015 = vmatpush1.msra.mxu0 %v1995
        %2016 = vmatprep.subr.mxu0 0.0
        %2017 = vmatpush1.msra.mxu0 %v1996
        %2018 = vmatprep.subr.mxu0 0.0
        %2019 = vmatpush1.msra.mxu0 %v1997
        %2020 = vmatprep.subr.mxu0 0.0
        %2021 = vmatpush1.msra.mxu0 %v1998
        %2022 = vmatprep.subr.mxu0 0.0
        %2023 = vmatpush1.msra.mxu0 %v1999
        %2024 = vmatprep.subr.mxu0 0.0
        %2025 = vmatpush1.msra.mxu0 %v2000
        %2026 = vmatprep.subr.mxu0 0.0
        %2027 = vmatpush1.msra.mxu0 %v2001
        %2028 = vmatprep.subr.mxu0 0.0
        %2029 = vmatpush1.msra.mxu0 %v2002
        %2030 = vmatprep.subr.mxu0 0.0
        %2031 = vmatpush1.msra.mxu0 %v2003
        %2032 = vmatprep.subr.mxu0 0.0
        %2033 = vmatpush1.msra.mxu0 %v2004
        %2034 = vmatprep.subr.mxu0 0.0
        %2035 = vmatpush1.msra.mxu0 %v2005
        %2036 = vmatprep.subr.mxu0 0.0
        %2037 = vmatpush1.msra.mxu0 %v2006
        %2038 = vmatprep.subr.mxu0 0.0
        %2039 = vmatpush1.msra.mxu0 %v2007
        %2040 = vmatprep.subr.mxu0 0.0
        %2041 = vmatpush1.msra.mxu0 0.0
        %2042 = vmatprep.subr.mxu0 0.0
        %2043 = vmatpush1.msra.mxu0 0.0
        %2044 = vmatprep.subr.mxu0 0.0
        %2045 = vmatpush1.msra.mxu0 0.0
        %2046 = vmatprep.subr.mxu0 0.0
        %2047 = vmatpush1.msra.mxu0 0.0
        %2048 = vmatprep.subr.mxu0 0.0
        %2049 = vmatpush1.msra.mxu0 0.0
        %2050 = vmatprep.subr.mxu0 0.0
        %2051 = vmatpush1.msra.mxu0 0.0
        %2052 = vmatprep.subr.mxu0 0.0
        %2053 = vmatpush1.msra.mxu0 0.0
        %2054 = vmatprep.subr.mxu0 0.0
        %2055 = vmatpush1.msra.mxu0 0.0
        %2056 = vmatprep.subr.mxu0 0.0
        %2057 = vmatpush1.msra.mxu0 0.0
        %2058 = vmatprep.subr.mxu0 0.0
        %2059 = vmatpush1.msra.mxu0 0.0
        %2060 = vmatprep.subr.mxu0 0.0
        %2061 = vmatpush1.msra.mxu0 0.0
        %2062 = vmatprep.subr.mxu0 0.0
        %2063 = vmatpush1.msra.mxu0 0.0
        %2064 = vmatprep.subr.mxu0 0.0
        %2065 = vmatpush1.msra.mxu0 0.0
        %2066 = vmatprep.subr.mxu0 0.0
        %2067 = vmatpush1.msra.mxu0 0.0
        %2068 = vmatprep.subr.mxu0 0.0
        %2069 = vmatpush1.msra.mxu0 0.0
        %2070 = vmatprep.subr.mxu0 0.0
        %2071 = vmatpush1.msra.mxu0 0.0
        %2072 = vmatprep.mubr.f32.mxu0 0.0
        %2073 = vmatmul.mubr.f32.gmra.mrb[0].mxu0 %v1737
        %v2074 = vpop.f32.mrb[0].mxu0
        %v2075 = vadd.f32 0.0, %v2074
        %v2076 = vpop.f32.mrb[0].mxu0
        %2077 = vmatprep.mubr.f32.mxu0 0.0
        %2078 = vmatmul.mubr.f32.gmra.mrb[0].mxu0 %v1739
        %v2079 = vpop.f32.mrb[0].mxu0
        %v2080 = vadd.f32 0.0, %v2079
        %v2081 = vpop.f32.mrb[0].mxu0
        %2082 = vmatprep.mubr.f32.mxu0 0.0
        %2083 = vmatmul.mubr.f32.gmra.mrb[0].mxu0 %v1741
        %v2084 = vpop.f32.mrb[0].mxu0
        %v2085 = vadd.f32 0.0, %v2084
        %v2086 = vpop.f32.mrb[0].mxu0
        %2087 = vmatprep.mubr.f32.mxu0 0.0
        %2088 = vmatmul.mubr.f32.gmra.mrb[0].mxu0 %v1743
        %v2089 = vpop.f32.mrb[0].mxu0
        %v2090 = vadd.f32 0.0, %v2089
        %v2091 = vpop.f32.mrb[0].mxu0
        %2092 = vmatprep.mubr.f32.mxu0 0.0
        %2093 = vmatmul.mubr.f32.gmra.mrb[0].mxu0 %v1745
        %v2094 = vpop.f32.mrb[0].mxu0
        %v2095 = vadd.f32 0.0, %v2094
        %v2096 = vpop.f32.mrb[0].mxu0
        %2097 = vmatprep.mubr.f32.mxu0 0.0
        %2098 = vmatmul.mubr.f32.gmra.mrb[0].mxu0 %v1747
        %v2099 = vpop.f32.mrb[0].mxu0
        %v2100 = vadd.f32 0.0, %v2099
        %v2101 = vpop.f32.mrb[0].mxu0
        %2102 = vmatprep.mubr.f32.mxu0 0.0
        %2103 = vmatmul.mubr.f32.gmra.mrb[0].mxu0 %v1749
        %v2104 = vpop.f32.mrb[0].mxu0
        %v2105 = vadd.f32 0.0, %v2104
        %v2106 = vpop.f32.mrb[0].mxu0
        %2107 = vmatprep.mubr.f32.mxu0 0.0
        %2108 = vmatmul.mubr.f32.gmra.mrb[0].mxu0 %v1751
        %v2109 = vpop.f32.mrb[0].mxu0
        %v2110 = vadd.f32 0.0, %v2109
        %v2111 = vpop.f32.mrb[0].mxu0
        %2112 = vmatprep.mubr.f32.mxu0 0.0
        %2113 = vmatmul.mubr.f32.gmra.mrb[0].mxu0 %v1753
        %v2114 = vpop.f32.mrb[0].mxu0
        %v2115 = vadd.f32 0.0, %v2114
        %v2116 = vpop.f32.mrb[0].mxu0
        %2117 = vmatprep.mubr.f32.mxu0 0.0
        %2118 = vmatmul.mubr.f32.gmra.mrb[0].mxu0 %v1755
        %v2119 = vpop.f32.mrb[0].mxu0
        %v2120 = vadd.f32 0.0, %v2119
        %v2121 = vpop.f32.mrb[0].mxu0
        %2122 = vmatprep.mubr.f32.mxu0 0.0
        %2123 = vmatmul.mubr.f32.gmra.mrb[0].mxu0 %v1757
        %v2124 = vpop.f32.mrb[0].mxu0
        %v2125 = vadd.f32 0.0, %v2124
        %v2126 = vpop.f32.mrb[0].mxu0
        %2127 = vmatprep.mubr.f32.mxu0 0.0
        %2128 = vmatmul.mubr.f32.gmra.mrb[0].mxu0 %v1759
        %v2129 = vpop.f32.mrb[0].mxu0
        %v2130 = vadd.f32 0.0, %v2129
        %v2131 = vpop.f32.mrb[0].mxu0
        %2132 = vmatprep.mubr.f32.mxu0 0.0
        %2133 = vmatmul.mubr.f32.gmra.mrb[0].mxu0 %v1761
        %v2134 = vpop.f32.mrb[0].mxu0
        %v2135 = vadd.f32 0.0, %v2134
        %v2136 = vpop.f32.mrb[0].mxu0
        %2137 = vmatprep.mubr.f32.mxu0 0.0
        %2138 = vmatmul.mubr.f32.gmra.mrb[0].mxu0 %v1763
        %v2139 = vpop.f32.mrb[0].mxu0
        %v2140 = vadd.f32 0.0, %v2139
        %v2141 = vpop.f32.mrb[0].mxu0
        %2142 = vmatprep.mubr.f32.mxu0 0.0
        %2143 = vmatmul.mubr.f32.gmra.mrb[0].mxu0 %v1765
        %v2144 = vpop.f32.mrb[0].mxu0
        %v2145 = vadd.f32 0.0, %v2144
        %v2146 = vpop.f32.mrb[0].mxu0
        %2147 = vmatprep.mubr.f32.mxu0 0.0
        %2148 = vmatmul.mubr.f32.gmra.mrb[0].mxu0 %v1767
        %v2149 = vpop.f32.mrb[0].mxu0
        %v2150 = vadd.f32 0.0, %v2149
        %v2151 = vpop.f32.mrb[0].mxu0
        %2152 = vmatprep.mubr.f32.mxu0 0.0
        %2153 = vmatmul.mubr.f32.gmra.mrb[0].mxu0 %v1769
        %v2154 = vpop.f32.mrb[0].mxu0
        %v2155 = vadd.f32 0.0, %v2154
        %v2156 = vpop.f32.mrb[0].mxu0
        %2157 = vmatprep.mubr.f32.mxu0 0.0
        %2158 = vmatmul.mubr.f32.gmra.mrb[0].mxu0 %v1771
        %v2159 = vpop.f32.mrb[0].mxu0
        %v2160 = vadd.f32 0.0, %v2159
        %v2161 = vpop.f32.mrb[0].mxu0
        %2162 = vmatprep.mubr.f32.mxu0 0.0
        %2163 = vmatmul.mubr.f32.gmra.mrb[0].mxu0 %v1773
        %v2164 = vpop.f32.mrb[0].mxu0
        %v2165 = vadd.f32 0.0, %v2164
        %v2166 = vpop.f32.mrb[0].mxu0
        %2167 = vmatprep.mubr.f32.mxu0 0.0
        %2168 = vmatmul.mubr.f32.gmra.mrb[0].mxu0 %v1775
        %v2169 = vpop.f32.mrb[0].mxu0
        %v2170 = vadd.f32 0.0, %v2169
        %v2171 = vpop.f32.mrb[0].mxu0
        %2172 = vmatprep.mubr.f32.mxu0 0.0
        %2173 = vmatmul.mubr.f32.gmra.mrb[0].mxu0 %v1777
        %v2174 = vpop.f32.mrb[0].mxu0
        %v2175 = vadd.f32 0.0, %v2174
        %v2176 = vpop.f32.mrb[0].mxu0
        %2177 = vmatprep.mubr.f32.mxu0 0.0
        %2178 = vmatmul.mubr.f32.gmra.mrb[0].mxu0 %v1779
        %v2179 = vpop.f32.mrb[0].mxu0
        %v2180 = vadd.f32 0.0, %v2179
        %v2181 = vpop.f32.mrb[0].mxu0
        %2182 = vmatprep.mubr.f32.mxu0 0.0
        %2183 = vmatmul.mubr.f32.gmra.mrb[0].mxu0 %v1781
        %v2184 = vpop.f32.mrb[0].mxu0
        %v2185 = vadd.f32 0.0, %v2184
        %v2186 = vpop.f32.mrb[0].mxu0
        %2187 = vmatprep.mubr.f32.mxu0 0.0
        %2188 = vmatmul.mubr.f32.gmra.mrb[0].mxu0 %v1783
        %v2189 = vpop.f32.mrb[0].mxu0
        %v2190 = vadd.f32 0.0, %v2189
        %v2191 = vpop.f32.mrb[0].mxu0
        %2192 = vmatprep.mubr.f32.mxu0 0.0
        %2193 = vmatmul.mubr.f32.gmra.mrb[0].mxu0 %v1785
        %v2194 = vpop.f32.mrb[0].mxu0
        %v2195 = vadd.f32 0.0, %v2194
        %v2196 = vpop.f32.mrb[0].mxu0
        %2197 = vmatprep.mubr.f32.mxu0 0.0
        %2198 = vmatmul.mubr.f32.gmra.mrb[0].mxu0 %v1787
        %v2199 = vpop.f32.mrb[0].mxu0
        %v2200 = vadd.f32 0.0, %v2199
        %v2201 = vpop.f32.mrb[0].mxu0
        %2202 = vmatprep.mubr.f32.mxu0 0.0
        %2203 = vmatmul.mubr.f32.gmra.mrb[0].mxu0 %v1789
        %v2204 = vpop.f32.mrb[0].mxu0
        %v2205 = vadd.f32 0.0, %v2204
        %v2206 = vpop.f32.mrb[0].mxu0
        %2207 = vmatprep.mubr.f32.mxu0 0.0
        %2208 = vmatmul.mubr.f32.gmra.mrb[0].mxu0 %v1791
        %v2209 = vpop.f32.mrb[0].mxu0
        %v2210 = vadd.f32 0.0, %v2209
        %v2211 = vpop.f32.mrb[0].mxu0
        %2212 = vmatprep.mubr.f32.mxu0 0.0
        %2213 = vmatmul.mubr.f32.gmra.mrb[0].mxu0 %v1793
        %v2214 = vpop.f32.mrb[0].mxu0
        %v2215 = vadd.f32 0.0, %v2214
        %v2216 = vpop.f32.mrb[0].mxu0
        %2217 = vmatprep.mubr.f32.mxu0 0.0
        %2218 = vmatmul.mubr.f32.gmra.mrb[0].mxu0 %v1795
        %v2219 = vpop.f32.mrb[0].mxu0
        %v2220 = vadd.f32 0.0, %v2219
        %v2221 = vpop.f32.mrb[0].mxu0
        %2222 = vmatprep.mubr.f32.mxu0 0.0
        %2223 = vmatmul.mubr.f32.gmra.mrb[0].mxu0 %v1797
        %v2224 = vpop.f32.mrb[0].mxu0
        %v2225 = vadd.f32 0.0, %v2224
        %v2226 = vpop.f32.mrb[0].mxu0
        %2227 = vmatprep.mubr.f32.mxu0 0.0
        %2228 = vmatmul.mubr.f32.gmra.mrb[0].mxu0 %v1799
        %v2229 = vpop.f32.mrb[0].mxu0
        %v2230 = vadd.f32 0.0, %v2229
        %v2231 = vpop.f32.mrb[0].mxu0
        %2232 = vmatprep.mubr.f32.mxu0 0.0
        %2233 = vmatmul.mubr.f32.gmra.mrb[0].mxu0 %v1801
        %v2234 = vpop.f32.mrb[0].mxu0
        %v2235 = vadd.f32 0.0, %v2234
        %v2236 = vpop.f32.mrb[0].mxu0
        %2237 = vmatprep.mubr.f32.mxu0 0.0
        %2238 = vmatmul.mubr.f32.gmra.mrb[0].mxu0 %v1803
        %v2239 = vpop.f32.mrb[0].mxu0
        %v2240 = vadd.f32 0.0, %v2239
        %v2241 = vpop.f32.mrb[0].mxu0
        %2242 = vmatprep.mubr.f32.mxu0 0.0
        %2243 = vmatmul.mubr.f32.gmra.mrb[0].mxu0 %v1805
        %v2244 = vpop.f32.mrb[0].mxu0
        %v2245 = vadd.f32 0.0, %v2244
        %v2246 = vpop.f32.mrb[0].mxu0
        %2247 = vmatprep.mubr.f32.mxu0 0.0
        %2248 = vmatmul.mubr.f32.gmra.mrb[0].mxu0 %v1807
        %v2249 = vpop.f32.mrb[0].mxu0
        %v2250 = vadd.f32 0.0, %v2249
        %v2251 = vpop.f32.mrb[0].mxu0
        %2252 = vmatprep.mubr.f32.mxu0 0.0
        %2253 = vmatmul.mubr.f32.gmra.mrb[0].mxu0 %v1809
        %v2254 = vpop.f32.mrb[0].mxu0
        %v2255 = vadd.f32 0.0, %v2254
        %v2256 = vpop.f32.mrb[0].mxu0
        %2257 = vmatprep.mubr.f32.mxu0 0.0
        %2258 = vmatmul.mubr.f32.gmra.mrb[0].mxu0 %v1811
        %v2259 = vpop.f32.mrb[0].mxu0
        %v2260 = vadd.f32 0.0, %v2259
        %v2261 = vpop.f32.mrb[0].mxu0
        %2262 = vmatprep.mubr.f32.mxu0 0.0
        %2263 = vmatmul.mubr.f32.gmra.mrb[0].mxu0 %v1813
        %v2264 = vpop.f32.mrb[0].mxu0
        %v2265 = vadd.f32 0.0, %v2264
        %v2266 = vpop.f32.mrb[0].mxu0
        %2267 = vmatprep.mubr.f32.mxu0 0.0
        %2268 = vmatmul.mubr.f32.gmra.mrb[0].mxu0 %v1815
        %v2269 = vpop.f32.mrb[0].mxu0
        %v2270 = vadd.f32 0.0, %v2269
        %v2271 = vpop.f32.mrb[0].mxu0
        %2272 = vmatprep.mubr.f32.mxu0 0.0
        %2273 = vmatmul.mubr.f32.gmra.mrb[0].mxu0 %v1817
        %v2274 = vpop.f32.mrb[0].mxu0
        %v2275 = vadd.f32 0.0, %v2274
        %v2276 = vpop.f32.mrb[0].mxu0
        %2277 = vmatprep.mubr.f32.mxu0 0.0
        %2278 = vmatmul.mubr.f32.gmra.mrb[0].mxu0 %v1819
        %v2279 = vpop.f32.mrb[0].mxu0
        %v2280 = vadd.f32 0.0, %v2279
        %v2281 = vpop.f32.mrb[0].mxu0
        %2282 = vmatprep.mubr.f32.mxu0 0.0
        %2283 = vmatmul.mubr.f32.gmra.mrb[0].mxu0 %v1821
        %v2284 = vpop.f32.mrb[0].mxu0
        %v2285 = vadd.f32 0.0, %v2284
        %v2286 = vpop.f32.mrb[0].mxu0
        %2287 = vmatprep.mubr.f32.mxu0 0.0
        %2288 = vmatmul.mubr.f32.gmra.mrb[0].mxu0 %v1823
        %v2289 = vpop.f32.mrb[0].mxu0
        %v2290 = vadd.f32 0.0, %v2289
        %v2291 = vpop.f32.mrb[0].mxu0
        %2292 = vmatprep.mubr.f32.mxu0 0.0
        %2293 = vmatmul.mubr.f32.gmra.mrb[0].mxu0 %v1825
        %v2294 = vpop.f32.mrb[0].mxu0
        %v2295 = vadd.f32 0.0, %v2294
        %v2296 = vpop.f32.mrb[0].mxu0
        %2297 = vmatprep.mubr.f32.mxu0 0.0
        %2298 = vmatmul.mubr.f32.gmra.mrb[0].mxu0 %v1827
        %v2299 = vpop.f32.mrb[0].mxu0
        %v2300 = vadd.f32 0.0, %v2299
        %v2301 = vpop.f32.mrb[0].mxu0
        %2302 = vmatprep.mubr.f32.mxu0 0.0
        %2303 = vmatmul.mubr.f32.gmra.mrb[0].mxu0 %v1829
        %v2304 = vpop.f32.mrb[0].mxu0
        %v2305 = vadd.f32 0.0, %v2304
        %v2306 = vpop.f32.mrb[0].mxu0
        %2307 = vmatprep.mubr.f32.mxu0 0.0
        %2308 = vmatmul.mubr.f32.gmra.mrb[0].mxu0 %v1831
        %v2309 = vpop.f32.mrb[0].mxu0
        %v2310 = vadd.f32 0.0, %v2309
        %v2311 = vpop.f32.mrb[0].mxu0
        %2312 = vmatprep.mubr.f32.mxu0 0.0
        %2313 = vmatmul.mubr.f32.gmra.mrb[0].mxu0 %v1833
        %v2314 = vpop.f32.mrb[0].mxu0
        %v2315 = vadd.f32 0.0, %v2314
        %v2316 = vpop.f32.mrb[0].mxu0
        %2317 = vmatprep.mubr.f32.mxu0 0.0
        %2318 = vmatmul.mubr.f32.gmra.mrb[0].mxu0 %v1835
        %v2319 = vpop.f32.mrb[0].mxu0
        %v2320 = vadd.f32 0.0, %v2319
        %v2321 = vpop.f32.mrb[0].mxu0
        %2322 = vmatprep.mubr.f32.mxu0 0.0
        %2323 = vmatmul.mubr.f32.gmra.mrb[0].mxu0 %v1837
        %v2324 = vpop.f32.mrb[0].mxu0
        %v2325 = vadd.f32 0.0, %v2324
        %v2326 = vpop.f32.mrb[0].mxu0
        %2327 = vmatprep.mubr.f32.mxu0 0.0
        %2328 = vmatmul.mubr.f32.gmra.mrb[0].mxu0 %v1839
        %v2329 = vpop.f32.mrb[0].mxu0
        %v2330 = vadd.f32 0.0, %v2329
        %v2331 = vpop.f32.mrb[0].mxu0
        %2332 = vmatprep.mubr.f32.mxu0 0.0
        %2333 = vmatmul.mubr.f32.gmra.mrb[0].mxu0 %v1841
        %v2334 = vpop.f32.mrb[0].mxu0
        %v2335 = vadd.f32 0.0, %v2334
        %v2336 = vpop.f32.mrb[0].mxu0
        %2337 = vmatprep.mubr.f32.mxu0 0.0
        %2338 = vmatmul.mubr.f32.gmra.mrb[0].mxu0 %v1843
        %v2339 = vpop.f32.mrb[0].mxu0
        %v2340 = vadd.f32 0.0, %v2339
        %v2341 = vpop.f32.mrb[0].mxu0
        %2342 = vmatprep.mubr.f32.mxu0 0.0
        %2343 = vmatmul.mubr.f32.gmra.mrb[0].mxu0 %v1845
        %v2344 = vpop.f32.mrb[0].mxu0
        %v2345 = vadd.f32 0.0, %v2344
        %v2346 = vpop.f32.mrb[0].mxu0
        %2347 = vmatprep.mubr.f32.mxu0 0.0
        %2348 = vmatmul.mubr.f32.gmra.mrb[0].mxu0 %v1847
        %v2349 = vpop.f32.mrb[0].mxu0
        %v2350 = vadd.f32 0.0, %v2349
        %v2351 = vpop.f32.mrb[0].mxu0
        %2352 = vmatprep.mubr.f32.mxu0 0.0
        %2353 = vmatmul.mubr.f32.gmra.mrb[0].mxu0 %v1849
        %v2354 = vpop.f32.mrb[0].mxu0
        %v2355 = vadd.f32 0.0, %v2354
        %v2356 = vpop.f32.mrb[0].mxu0
        %2357 = vmatprep.mubr.f32.mxu0 0.0
        %2358 = vmatmul.mubr.f32.gmra.mrb[0].mxu0 %v1851
        %v2359 = vpop.f32.mrb[0].mxu0
        %v2360 = vadd.f32 0.0, %v2359
        %v2361 = vpop.f32.mrb[0].mxu0
        %2362 = vmatprep.mubr.f32.mxu0 0.0
        %2363 = vmatmul.mubr.f32.gmra.mrb[0].mxu0 %v1853
        %v2364 = vpop.f32.mrb[0].mxu0
        %v2365 = vadd.f32 0.0, %v2364
        %v2366 = vpop.f32.mrb[0].mxu0
        %2367 = vmatprep.mubr.f32.mxu0 0.0
        %2368 = vmatmul.mubr.f32.gmra.mrb[0].mxu0 %v1855
        %v2369 = vpop.f32.mrb[0].mxu0
        %v2370 = vadd.f32 0.0, %v2369
        %v2371 = vpop.f32.mrb[0].mxu0
        %2372 = vmatprep.mubr.f32.mxu0 0.0
        %2373 = vmatmul.mubr.f32.gmra.mrb[0].mxu0 %v1857
        %v2374 = vpop.f32.mrb[0].mxu0
        %v2375 = vadd.f32 0.0, %v2374
        %v2376 = vpop.f32.mrb[0].mxu0
        %2377 = vmatprep.mubr.f32.mxu0 0.0
        %2378 = vmatmul.mubr.f32.gmra.mrb[0].mxu0 %v1859
        %v2379 = vpop.f32.mrb[0].mxu0
        %v2380 = vadd.f32 0.0, %v2379
        %v2381 = vpop.f32.mrb[0].mxu0
        %2382 = vmatprep.mubr.f32.mxu0 0.0
        %2383 = vmatmul.mubr.f32.gmra.mrb[0].mxu0 %v1861
        %v2384 = vpop.f32.mrb[0].mxu0
        %v2385 = vadd.f32 0.0, %v2384
        %v2386 = vpop.f32.mrb[0].mxu0
        %2387 = vmatprep.mubr.f32.mxu0 0.0
        %2388 = vmatmul.mubr.f32.gmra.mrb[0].mxu0 %v1863
        %v2389 = vpop.f32.mrb[0].mxu0
        %v2390 = vadd.f32 0.0, %v2389
        %v2391 = vpop.f32.mrb[0].mxu0
        %2392 = vmatprep.mubr.f32.mxu0 0.0
        %2393 = vmatmul.mubr.f32.gmra.mrb[0].mxu0 %v1865
        %v2394 = vpop.f32.mrb[0].mxu0
        %v2395 = vadd.f32 0.0, %v2394
        %v2396 = vpop.f32.mrb[0].mxu0
        %2397 = vmatprep.mubr.f32.mxu0 0.0
        %2398 = vmatmul.mubr.f32.gmra.mrb[0].mxu0 %v1867
        %v2399 = vpop.f32.mrb[0].mxu0
        %v2400 = vadd.f32 0.0, %v2399
        %v2401 = vpop.f32.mrb[0].mxu0
        %2402 = vmatprep.mubr.f32.mxu0 0.0
        %2403 = vmatmul.mubr.f32.gmra.mrb[0].mxu0 %v1869
        %v2404 = vpop.f32.mrb[0].mxu0
        %v2405 = vadd.f32 0.0, %v2404
        %v2406 = vpop.f32.mrb[0].mxu0
        %2407 = vmatprep.mubr.f32.mxu0 0.0
        %2408 = vmatmul.mubr.f32.gmra.mrb[0].mxu0 %v1871
        %v2409 = vpop.f32.mrb[0].mxu0
        %v2410 = vadd.f32 0.0, %v2409
        %v2411 = vpop.f32.mrb[0].mxu0
        %2412 = vmatprep.mubr.f32.mxu0 0.0
        %2413 = vmatmul.mubr.f32.gmra.mrb[0].mxu0 %v1873
        %v2414 = vpop.f32.mrb[0].mxu0
        %v2415 = vadd.f32 0.0, %v2414
        %v2416 = vpop.f32.mrb[0].mxu0
        %2417 = vmatprep.mubr.f32.mxu0 0.0
        %2418 = vmatmul.mubr.f32.gmra.mrb[0].mxu0 %v1875
        %v2419 = vpop.f32.mrb[0].mxu0
        %v2420 = vadd.f32 0.0, %v2419
        %v2421 = vpop.f32.mrb[0].mxu0
        %2422 = vmatprep.mubr.f32.mxu0 0.0
        %2423 = vmatmul.mubr.f32.gmra.mrb[0].mxu0 %v1877
        %v2424 = vpop.f32.mrb[0].mxu0
        %v2425 = vadd.f32 0.0, %v2424
        %v2426 = vpop.f32.mrb[0].mxu0
        %2427 = vmatprep.mubr.f32.mxu0 0.0
        %2428 = vmatmul.mubr.f32.gmra.mrb[0].mxu0 %v1879
        %v2429 = vpop.f32.mrb[0].mxu0
        %v2430 = vadd.f32 0.0, %v2429
        %v2431 = vpop.f32.mrb[0].mxu0
        %2432 = vmatprep.mubr.f32.mxu0 0.0
        %2433 = vmatmul.mubr.f32.gmra.mrb[0].mxu0 %v1881
        %v2434 = vpop.f32.mrb[0].mxu0
        %v2435 = vadd.f32 0.0, %v2434
        %v2436 = vpop.f32.mrb[0].mxu0
        %2437 = vmatprep.mubr.f32.mxu0 0.0
        %2438 = vmatmul.mubr.f32.gmra.mrb[0].mxu0 %v1883
        %v2439 = vpop.f32.mrb[0].mxu0
        %v2440 = vadd.f32 0.0, %v2439
        %v2441 = vpop.f32.mrb[0].mxu0
        %2442 = vmatprep.mubr.f32.mxu0 0.0
        %2443 = vmatmul.mubr.f32.gmra.mrb[0].mxu0 %v1885
        %v2444 = vpop.f32.mrb[0].mxu0
        %v2445 = vadd.f32 0.0, %v2444
        %v2446 = vpop.f32.mrb[0].mxu0
        %2447 = vmatprep.mubr.f32.mxu0 0.0
        %2448 = vmatmul.mubr.f32.gmra.mrb[0].mxu0 %v1887
        %v2449 = vpop.f32.mrb[0].mxu0
        %v2450 = vadd.f32 0.0, %v2449
        %v2451 = vpop.f32.mrb[0].mxu0
        %2452 = vmatprep.mubr.f32.mxu0 0.0
        %2453 = vmatmul.mubr.f32.gmra.mrb[0].mxu0 %v1889
        %v2454 = vpop.f32.mrb[0].mxu0
        %v2455 = vadd.f32 0.0, %v2454
        %v2456 = vpop.f32.mrb[0].mxu0
        %2457 = vmatprep.mubr.f32.mxu0 0.0
        %2458 = vmatmul.mubr.f32.gmra.mrb[0].mxu0 %v1891
        %v2459 = vpop.f32.mrb[0].mxu0
        %v2460 = vadd.f32 0.0, %v2459
        %v2461 = vpop.f32.mrb[0].mxu0
        %2462 = vmatprep.mubr.f32.mxu0 0.0
        %2463 = vmatmul.mubr.f32.gmra.mrb[0].mxu0 %v1893
        %v2464 = vpop.f32.mrb[0].mxu0
        %v2465 = vadd.f32 0.0, %v2464
        %v2466 = vpop.f32.mrb[0].mxu0
        %2467 = vmatprep.mubr.f32.mxu0 0.0
        %2468 = vmatmul.mubr.f32.gmra.mrb[0].mxu0 %v1895
        %v2469 = vpop.f32.mrb[0].mxu0
        %v2470 = vadd.f32 0.0, %v2469
        %v2471 = vpop.f32.mrb[0].mxu0
        %2472 = vmatprep.mubr.f32.mxu0 0.0
        %2473 = vmatmul.mubr.f32.gmra.mrb[0].mxu0 %v1897
        %v2474 = vpop.f32.mrb[0].mxu0
        %v2475 = vadd.f32 0.0, %v2474
        %v2476 = vpop.f32.mrb[0].mxu0
        %2477 = vmatprep.mubr.f32.mxu0 0.0
        %2478 = vmatmul.mubr.f32.gmra.mrb[0].mxu0 %v1899
        %v2479 = vpop.f32.mrb[0].mxu0
        %v2480 = vadd.f32 0.0, %v2479
        %v2481 = vpop.f32.mrb[0].mxu0
        %2482 = vmatprep.mubr.f32.mxu0 0.0
        %2483 = vmatmul.mubr.f32.gmra.mrb[0].mxu0 %v1901
        %v2484 = vpop.f32.mrb[0].mxu0
        %v2485 = vadd.f32 0.0, %v2484
        %v2486 = vpop.f32.mrb[0].mxu0
        %2487 = vmatprep.mubr.f32.mxu0 0.0
        %2488 = vmatmul.mubr.f32.gmra.mrb[0].mxu0 %v1903
        %v2489 = vpop.f32.mrb[0].mxu0
        %v2490 = vadd.f32 0.0, %v2489
        %v2491 = vpop.f32.mrb[0].mxu0
        %2492 = vmatprep.mubr.f32.mxu0 0.0
        %2493 = vmatmul.mubr.f32.gmra.mrb[0].mxu0 %v1905
        %v2494 = vpop.f32.mrb[0].mxu0
        %v2495 = vadd.f32 0.0, %v2494
        %v2496 = vpop.f32.mrb[0].mxu0
        %2497 = vmatprep.mubr.f32.mxu0 0.0
        %2498 = vmatmul.mubr.f32.gmra.mrb[0].mxu0 %v1907
        %v2499 = vpop.f32.mrb[0].mxu0
        %v2500 = vadd.f32 0.0, %v2499
        %v2501 = vpop.f32.mrb[0].mxu0
        %2502 = vmatprep.mubr.f32.mxu0 0.0
        %2503 = vmatmul.mubr.f32.gmra.mrb[0].mxu0 %v1909
        %v2504 = vpop.f32.mrb[0].mxu0
        %v2505 = vadd.f32 0.0, %v2504
        %v2506 = vpop.f32.mrb[0].mxu0
        %2507 = vmatprep.mubr.f32.mxu0 0.0
        %2508 = vmatmul.mubr.f32.gmra.mrb[0].mxu0 %v1911
        %v2509 = vpop.f32.mrb[0].mxu0
        %v2510 = vadd.f32 0.0, %v2509
        %v2511 = vpop.f32.mrb[0].mxu0
        %2512 = vmatprep.mubr.f32.mxu0 0.0
        %2513 = vmatmul.mubr.f32.gmra.mrb[0].mxu0 %v1913
        %v2514 = vpop.f32.mrb[0].mxu0
        %v2515 = vadd.f32 0.0, %v2514
        %v2516 = vpop.f32.mrb[0].mxu0
        %2517 = vmatprep.mubr.f32.mxu0 0.0
        %2518 = vmatmul.mubr.f32.gmra.mrb[0].mxu0 %v1915
        %v2519 = vpop.f32.mrb[0].mxu0
        %v2520 = vadd.f32 0.0, %v2519
        %v2521 = vpop.f32.mrb[0].mxu0
        %2522 = vmatprep.mubr.f32.mxu0 0.0
        %2523 = vmatmul.mubr.f32.gmra.mrb[0].mxu0 %v1917
        %v2524 = vpop.f32.mrb[0].mxu0
        %v2525 = vadd.f32 0.0, %v2524
        %v2526 = vpop.f32.mrb[0].mxu0
        %2527 = vmatprep.mubr.f32.mxu0 0.0
        %2528 = vmatmul.mubr.f32.gmra.mrb[0].mxu0 %v1919
        %v2529 = vpop.f32.mrb[0].mxu0
        %v2530 = vadd.f32 0.0, %v2529
        %v2531 = vpop.f32.mrb[0].mxu0
        %2532 = vmatprep.mubr.f32.mxu0 0.0
        %2533 = vmatmul.mubr.f32.gmra.mrb[0].mxu0 %v1921
        %v2534 = vpop.f32.mrb[0].mxu0
        %v2535 = vadd.f32 0.0, %v2534
        %v2536 = vpop.f32.mrb[0].mxu0
        %2537 = vmatprep.mubr.f32.mxu0 0.0
        %2538 = vmatmul.mubr.f32.gmra.mrb[0].mxu0 %v1923
        %v2539 = vpop.f32.mrb[0].mxu0
        %v2540 = vadd.f32 0.0, %v2539
        %v2541 = vpop.f32.mrb[0].mxu0
        %2542 = vmatprep.mubr.f32.mxu0 0.0
        %2543 = vmatmul.mubr.f32.gmra.mrb[0].mxu0 %v1925
        %v2544 = vpop.f32.mrb[0].mxu0
        %v2545 = vadd.f32 0.0, %v2544
        %v2546 = vpop.f32.mrb[0].mxu0
        %2547 = vmatprep.mubr.f32.mxu0 0.0
        %2548 = vmatmul.mubr.f32.gmra.mrb[0].mxu0 %v1927
        %v2549 = vpop.f32.mrb[0].mxu0
        %v2550 = vadd.f32 0.0, %v2549
        %v2551 = vpop.f32.mrb[0].mxu0
        %2552 = vmatprep.mubr.f32.mxu0 0.0
        %2553 = vmatmul.mubr.f32.gmra.mrb[0].mxu0 %v1929
        %v2554 = vpop.f32.mrb[0].mxu0
        %v2555 = vadd.f32 0.0, %v2554
        %v2556 = vpop.f32.mrb[0].mxu0
        %2557 = vmatprep.mubr.f32.mxu0 0.0
        %2558 = vmatmul.mubr.f32.gmra.mrb[0].mxu0 %v1931
        %v2559 = vpop.f32.mrb[0].mxu0
        %v2560 = vadd.f32 0.0, %v2559
        %v2561 = vpop.f32.mrb[0].mxu0
        %2562 = vmatprep.mubr.f32.mxu0 0.0
        %2563 = vmatmul.mubr.f32.gmra.mrb[0].mxu0 %v1933
        %v2564 = vpop.f32.mrb[0].mxu0
        %v2565 = vadd.f32 0.0, %v2564
        %v2566 = vpop.f32.mrb[0].mxu0
        %2567 = vmatprep.mubr.f32.mxu0 0.0
        %2568 = vmatmul.mubr.f32.gmra.mrb[0].mxu0 %v1935
        %v2569 = vpop.f32.mrb[0].mxu0
        %v2570 = vadd.f32 0.0, %v2569
        %v2571 = vpop.f32.mrb[0].mxu0
        %2572 = vmatprep.mubr.f32.mxu0 0.0
        %2573 = vmatmul.mubr.f32.gmra.mrb[0].mxu0 %v1937
        %v2574 = vpop.f32.mrb[0].mxu0
        %v2575 = vadd.f32 0.0, %v2574
        %v2576 = vpop.f32.mrb[0].mxu0
        %2577 = vmatprep.mubr.f32.mxu0 0.0
        %2578 = vmatmul.mubr.f32.gmra.mrb[0].mxu0 %v1939
        %v2579 = vpop.f32.mrb[0].mxu0
        %v2580 = vadd.f32 0.0, %v2579
        %v2581 = vpop.f32.mrb[0].mxu0
        %2582 = vmatprep.mubr.f32.mxu0 0.0
        %2583 = vmatmul.mubr.f32.gmra.mrb[0].mxu0 %v1941
        %v2584 = vpop.f32.mrb[0].mxu0
        %v2585 = vadd.f32 0.0, %v2584
        %v2586 = vpop.f32.mrb[0].mxu0
        %2587 = vmatprep.mubr.f32.mxu0 0.0
        %2588 = vmatmul.mubr.f32.gmra.mrb[0].mxu0 %v1943
        %v2589 = vpop.f32.mrb[0].mxu0
        %v2590 = vadd.f32 0.0, %v2589
        %v2591 = vpop.f32.mrb[0].mxu0
        %2592 = vmatprep.mubr.f32.mxu0 0.0
        %2593 = vmatmul.mubr.f32.gmra.mrb[0].mxu0 %v1945
        %v2594 = vpop.f32.mrb[0].mxu0
        %v2595 = vadd.f32 0.0, %v2594
        %v2596 = vpop.f32.mrb[0].mxu0
        %2597 = vmatprep.mubr.f32.mxu0 0.0
        %2598 = vmatmul.mubr.f32.gmra.mrb[0].mxu0 %v1947
        %v2599 = vpop.f32.mrb[0].mxu0
        %v2600 = vadd.f32 0.0, %v2599
        %v2601 = vpop.f32.mrb[0].mxu0
        %2602 = vmatprep.mubr.f32.mxu0 0.0
        %2603 = vmatmul.mubr.f32.gmra.mrb[0].mxu0 %v1949
        %v2604 = vpop.f32.mrb[0].mxu0
        %v2605 = vadd.f32 0.0, %v2604
        %v2606 = vpop.f32.mrb[0].mxu0
        %2607 = vmatprep.mubr.f32.mxu0 0.0
        %2608 = vmatmul.mubr.f32.gmra.mrb[0].mxu0 %v1951
        %v2609 = vpop.f32.mrb[0].mxu0
        %v2610 = vadd.f32 0.0, %v2609
        %v2611 = vpop.f32.mrb[0].mxu0
        %2612 = vmatprep.mubr.f32.mxu0 0.0
        %2613 = vmatmul.mubr.f32.gmra.mrb[0].mxu0 %v1953
        %v2614 = vpop.f32.mrb[0].mxu0
        %v2615 = vadd.f32 0.0, %v2614
        %v2616 = vpop.f32.mrb[0].mxu0
        %2617 = vmatprep.mubr.f32.mxu0 0.0
        %2618 = vmatmul.mubr.f32.gmra.mrb[0].mxu0 %v1955
        %v2619 = vpop.f32.mrb[0].mxu0
        %v2620 = vadd.f32 0.0, %v2619
        %v2621 = vpop.f32.mrb[0].mxu0
        %2622 = vmatprep.mubr.f32.mxu0 0.0
        %2623 = vmatmul.mubr.f32.gmra.mrb[0].mxu0 %v1957
        %v2624 = vpop.f32.mrb[0].mxu0
        %v2625 = vadd.f32 0.0, %v2624
        %v2626 = vpop.f32.mrb[0].mxu0
        %2627 = vmatprep.mubr.f32.mxu0 0.0
        %2628 = vmatmul.mubr.f32.gmra.mrb[0].mxu0 %v1959
        %v2629 = vpop.f32.mrb[0].mxu0
        %v2630 = vadd.f32 0.0, %v2629
        %v2631 = vpop.f32.mrb[0].mxu0
        %2632 = vmatprep.mubr.f32.mxu0 0.0
        %2633 = vmatmul.mubr.f32.gmra.mrb[0].mxu0 %v1961
        %v2634 = vpop.f32.mrb[0].mxu0
        %v2635 = vadd.f32 0.0, %v2634
        %v2636 = vpop.f32.mrb[0].mxu0
        %2637 = vmatprep.mubr.f32.mxu0 0.0
        %2638 = vmatmul.mubr.f32.gmra.mrb[0].mxu0 %v1963
        %v2639 = vpop.f32.mrb[0].mxu0
        %v2640 = vadd.f32 0.0, %v2639
        %v2641 = vpop.f32.mrb[0].mxu0
        %2642 = vmatprep.mubr.f32.mxu0 0.0
        %2643 = vmatmul.mubr.f32.gmra.mrb[0].mxu0 %v1965
        %v2644 = vpop.f32.mrb[0].mxu0
        %v2645 = vadd.f32 0.0, %v2644
        %v2646 = vpop.f32.mrb[0].mxu0
        %2647 = vmatprep.mubr.f32.mxu0 0.0
        %2648 = vmatmul.mubr.f32.gmra.mrb[0].mxu0 %v1967
        %v2649 = vpop.f32.mrb[0].mxu0
        %v2650 = vadd.f32 0.0, %v2649
        %v2651 = vpop.f32.mrb[0].mxu0
        %2652 = vmatprep.mubr.f32.mxu0 0.0
        %2653 = vmatmul.mubr.f32.gmra.mrb[0].mxu0 %v1969
        %v2654 = vpop.f32.mrb[0].mxu0
        %v2655 = vadd.f32 0.0, %v2654
        %v2656 = vpop.f32.mrb[0].mxu0
        %2657 = vmatprep.mubr.f32.mxu0 0.0
        %2658 = vmatmul.mubr.f32.gmra.mrb[0].mxu0 %v1971
        %v2659 = vpop.f32.mrb[0].mxu0
        %v2660 = vadd.f32 0.0, %v2659
        %v2661 = vpop.f32.mrb[0].mxu0
        %2662 = vmatprep.mubr.f32.mxu0 0.0
        %2663 = vmatmul.mubr.f32.gmra.mrb[0].mxu0 %v1973
        %v2664 = vpop.f32.mrb[0].mxu0
        %v2665 = vadd.f32 0.0, %v2664
        %v2666 = vpop.f32.mrb[0].mxu0
        %2667 = vmatprep.mubr.f32.mxu0 0.0
        %2668 = vmatmul.mubr.f32.gmra.mrb[0].mxu0 %v1975
        %v2669 = vpop.f32.mrb[0].mxu0
        %v2670 = vadd.f32 0.0, %v2669
        %v2671 = vpop.f32.mrb[0].mxu0
        %2672 = vmatprep.mubr.f32.mxu0 0.0
        %2673 = vmatmul.mubr.f32.gmra.mrb[0].mxu0 %v1977
        %v2674 = vpop.f32.mrb[0].mxu0
        %v2675 = vadd.f32 0.0, %v2674
        %v2676 = vpop.f32.mrb[0].mxu0
        %2677 = vmatprep.mubr.f32.mxu0 0.0
        %2678 = vmatmul.mubr.f32.gmra.mrb[0].mxu0 %v1979
        %v2679 = vpop.f32.mrb[0].mxu0
        %v2680 = vadd.f32 0.0, %v2679
        %v2681 = vpop.f32.mrb[0].mxu0
        %2682 = vmatprep.mubr.f32.mxu0 0.0
        %2683 = vmatmul.mubr.f32.gmra.mrb[0].mxu0 %v1981
        %v2684 = vpop.f32.mrb[0].mxu0
        %v2685 = vadd.f32 0.0, %v2684
        %v2686 = vpop.f32.mrb[0].mxu0
        %2687 = vmatprep.mubr.f32.mxu0 0.0
        %2688 = vmatmul.mubr.f32.gmra.mrb[0].mxu0 %v1983
        %v2689 = vpop.f32.mrb[0].mxu0
        %v2690 = vadd.f32 0.0, %v2689
        %v2691 = vpop.f32.mrb[0].mxu0
        %2692 = vmatprep.mubr.f32.mxu0 0.0
        %2693 = vmatmul.mubr.f32.gmra.mrb[0].mxu0 %v1985
        %v2694 = vpop.f32.mrb[0].mxu0
        %v2695 = vadd.f32 0.0, %v2694
        %v2696 = vpop.f32.mrb[0].mxu0
        %2697 = vmatprep.mubr.f32.mxu0 0.0
        %2698 = vmatmul.mubr.f32.gmra.mrb[0].mxu0 %v1987
        %v2699 = vpop.f32.mrb[0].mxu0
        %v2700 = vadd.f32 0.0, %v2699
        %v2701 = vpop.f32.mrb[0].mxu0
        %2702 = vmatprep.mubr.f32.mxu0 0.0
        %2703 = vmatmul.mubr.f32.gmra.mrb[0].mxu0 %v1989
        %v2704 = vpop.f32.mrb[0].mxu0
        %v2705 = vadd.f32 0.0, %v2704
        %v2706 = vpop.f32.mrb[0].mxu0
        %2707 = vmatprep.mubr.f32.mxu0 0.0
        %2708 = vmatmul.mubr.f32.gmra.mrb[0].mxu0 %v1991
        %v2709 = vpop.f32.mrb[0].mxu0
        %v2710 = vadd.f32 0.0, %v2709
        %v2711 = vpop.f32.mrb[0].mxu0
        %2712 = vdwg.mxu0
        %v2713 = vmul.f32 %v458, %v2075
        %v2714 = vmul.f32 %v464, %v2080
        %v2715 = vmul.f32 %v470, %v2085
        %v2716 = vmul.f32 %v476, %v2090
        %v2717 = vmul.f32 %v482, %v2095
        %v2718 = vmul.f32 %v488, %v2100
        %v2719 = vmul.f32 %v494, %v2105
        %v2720 = vmul.f32 %v500, %v2110
        %v2721 = vmul.f32 %v506, %v2115
        %v2722 = vmul.f32 %v512, %v2120
        %v2723 = vmul.f32 %v518, %v2125
        %v2724 = vmul.f32 %v524, %v2130
        %v2725 = vmul.f32 %v530, %v2135
        %v2726 = vmul.f32 %v536, %v2140
        %v2727 = vmul.f32 %v542, %v2145
        %v2728 = vmul.f32 %v548, %v2150
        %v2729 = vmul.f32 %v554, %v2155
        %v2730 = vmul.f32 %v560, %v2160
        %v2731 = vmul.f32 %v566, %v2165
        %v2732 = vmul.f32 %v572, %v2170
        %v2733 = vmul.f32 %v578, %v2175
        %v2734 = vmul.f32 %v584, %v2180
        %v2735 = vmul.f32 %v590, %v2185
        %v2736 = vmul.f32 %v596, %v2190
        %v2737 = vmul.f32 %v602, %v2195
        %v2738 = vmul.f32 %v608, %v2200
        %v2739 = vmul.f32 %v614, %v2205
        %v2740 = vmul.f32 %v620, %v2210
        %v2741 = vmul.f32 %v626, %v2215
        %v2742 = vmul.f32 %v632, %v2220
        %v2743 = vmul.f32 %v638, %v2225
        %v2744 = vmul.f32 %v644, %v2230
        %v2745 = vmul.f32 %v650, %v2235
        %v2746 = vmul.f32 %v656, %v2240
        %v2747 = vmul.f32 %v662, %v2245
        %v2748 = vmul.f32 %v668, %v2250
        %v2749 = vmul.f32 %v674, %v2255
        %v2750 = vmul.f32 %v680, %v2260
        %v2751 = vmul.f32 %v686, %v2265
        %v2752 = vmul.f32 %v692, %v2270
        %v2753 = vmul.f32 %v698, %v2275
        %v2754 = vmul.f32 %v704, %v2280
        %v2755 = vmul.f32 %v710, %v2285
        %v2756 = vmul.f32 %v716, %v2290
        %v2757 = vmul.f32 %v722, %v2295
        %v2758 = vmul.f32 %v728, %v2300
        %v2759 = vmul.f32 %v734, %v2305
        %v2760 = vmul.f32 %v740, %v2310
        %v2761 = vmul.f32 %v746, %v2315
        %v2762 = vmul.f32 %v752, %v2320
        %v2763 = vmul.f32 %v758, %v2325
        %v2764 = vmul.f32 %v764, %v2330
        %v2765 = vmul.f32 %v770, %v2335
        %v2766 = vmul.f32 %v776, %v2340
        %v2767 = vmul.f32 %v782, %v2345
        %v2768 = vmul.f32 %v788, %v2350
        %v2769 = vmul.f32 %v794, %v2355
        %v2770 = vmul.f32 %v800, %v2360
        %v2771 = vmul.f32 %v806, %v2365
        %v2772 = vmul.f32 %v812, %v2370
        %v2773 = vmul.f32 %v818, %v2375
        %v2774 = vmul.f32 %v824, %v2380
        %v2775 = vmul.f32 %v830, %v2385
        %v2776 = vmul.f32 %v836, %v2390
        %v2777 = vmul.f32 %v842, %v2395
        %v2778 = vmul.f32 %v848, %v2400
        %v2779 = vmul.f32 %v854, %v2405
        %v2780 = vmul.f32 %v860, %v2410
        %v2781 = vmul.f32 %v866, %v2415
        %v2782 = vmul.f32 %v872, %v2420
        %v2783 = vmul.f32 %v878, %v2425
        %v2784 = vmul.f32 %v884, %v2430
        %v2785 = vmul.f32 %v890, %v2435
        %v2786 = vmul.f32 %v896, %v2440
        %v2787 = vmul.f32 %v902, %v2445
        %v2788 = vmul.f32 %v908, %v2450
        %v2789 = vmul.f32 %v914, %v2455
        %v2790 = vmul.f32 %v920, %v2460
        %v2791 = vmul.f32 %v926, %v2465
        %v2792 = vmul.f32 %v932, %v2470
        %v2793 = vmul.f32 %v938, %v2475
        %v2794 = vmul.f32 %v944, %v2480
        %v2795 = vmul.f32 %v950, %v2485
        %v2796 = vmul.f32 %v956, %v2490
        %v2797 = vmul.f32 %v962, %v2495
        %v2798 = vmul.f32 %v968, %v2500
        %v2799 = vmul.f32 %v974, %v2505
        %v2800 = vmul.f32 %v980, %v2510
        %v2801 = vmul.f32 %v986, %v2515
        %v2802 = vmul.f32 %v992, %v2520
        %v2803 = vmul.f32 %v998, %v2525
        %v2804 = vmul.f32 %v1004, %v2530
        %v2805 = vmul.f32 %v1010, %v2535
        %v2806 = vmul.f32 %v1016, %v2540
        %v2807 = vmul.f32 %v1022, %v2545
        %v2808 = vmul.f32 %v1028, %v2550
        %v2809 = vmul.f32 %v1034, %v2555
        %v2810 = vmul.f32 %v1040, %v2560
        %v2811 = vmul.f32 %v1046, %v2565
        %v2812 = vmul.f32 %v1052, %v2570
        %v2813 = vmul.f32 %v1058, %v2575
        %v2814 = vmul.f32 %v1064, %v2580
        %v2815 = vmul.f32 %v1070, %v2585
        %v2816 = vmul.f32 %v1076, %v2590
        %v2817 = vmul.f32 %v1082, %v2595
        %v2818 = vmul.f32 %v1088, %v2600
        %v2819 = vmul.f32 %v1094, %v2605
        %v2820 = vmul.f32 %v1100, %v2610
        %v2821 = vmul.f32 %v1106, %v2615
        %v2822 = vmul.f32 %v1112, %v2620
        %v2823 = vmul.f32 %v1118, %v2625
        %v2824 = vmul.f32 %v1124, %v2630
        %v2825 = vmul.f32 %v1130, %v2635
        %v2826 = vmul.f32 %v1136, %v2640
        %v2827 = vmul.f32 %v1142, %v2645
        %v2828 = vmul.f32 %v1148, %v2650
        %v2829 = vmul.f32 %v1154, %v2655
        %v2830 = vmul.f32 %v1160, %v2660
        %v2831 = vmul.f32 %v1166, %v2665
        %v2832 = vmul.f32 %v1172, %v2670
        %v2833 = vmul.f32 %v1178, %v2675
        %v2834 = vmul.f32 %v1184, %v2680
        %v2835 = vmul.f32 %v1190, %v2685
        %v2836 = vmul.f32 %v1196, %v2690
        %v2837 = vmul.f32 %v1202, %v2695
        %v2838 = vmul.f32 %v1208, %v2700
        %v2839 = vmul.f32 %v1214, %v2705
        %v2840 = vmul.f32 %v1220, %v2710
        %2841 = vst [vmem:[%s199] sm:$0xff] %v2713
        %2842 = vst [vmem:[%s199 + $0x8] sm:$0xff] %v2714
        %2843 = vst [vmem:[%s199 + $0x10] sm:$0xff] %v2715
        %2844 = vst [vmem:[%s199 + $0x18] sm:$0xff] %v2716
        %2845 = vst [vmem:[%s199 + $0x20] sm:$0xff] %v2717
        %2846 = vst [vmem:[%s199 + $0x28] sm:$0xff] %v2718
        %2847 = vst [vmem:[%s199 + $0x30] sm:$0xff] %v2719
        %2848 = vst [vmem:[%s199 + $0x38] sm:$0xff] %v2720
        %2849 = vst [vmem:[%s199 + $0x40] sm:$0xff] %v2721
        %2850 = vst [vmem:[%s199 + $0x48] sm:$0xff] %v2722
        %2851 = vst [vmem:[%s199 + $0x50] sm:$0xff] %v2723
        %2852 = vst [vmem:[%s199 + $0x58] sm:$0xff] %v2724
        %2853 = vst [vmem:[%s199 + $0x60] sm:$0xff] %v2725
        %2854 = vst [vmem:[%s199 + $0x68] sm:$0xff] %v2726
        %2855 = vst [vmem:[%s199 + $0x70] sm:$0xff] %v2727
        %2856 = vst [vmem:[%s199 + $0x78] sm:$0xff] %v2728
        %2857 = vst [vmem:[%s199 + $0x80] sm:$0xff] %v2729
        %2858 = vst [vmem:[%s199 + $0x88] sm:$0xff] %v2730
        %2859 = vst [vmem:[%s199 + $0x90] sm:$0xff] %v2731
        %2860 = vst [vmem:[%s199 + $0x98] sm:$0xff] %v2732
        %2861 = vst [vmem:[%s199 + $0xa0] sm:$0xff] %v2733
        %2862 = vst [vmem:[%s199 + $0xa8] sm:$0xff] %v2734
        %2863 = vst [vmem:[%s199 + $0xb0] sm:$0xff] %v2735
        %2864 = vst [vmem:[%s199 + $0xb8] sm:$0xff] %v2736
        %2865 = vst [vmem:[%s199 + $0xc0] sm:$0xff] %v2737
        %2866 = vst [vmem:[%s199 + $0xc8] sm:$0xff] %v2738
        %2867 = vst [vmem:[%s199 + $0xd0] sm:$0xff] %v2739
        %2868 = vst [vmem:[%s199 + $0xd8] sm:$0xff] %v2740
        %2869 = vst [vmem:[%s199 + $0xe0] sm:$0xff] %v2741
        %2870 = vst [vmem:[%s199 + $0xe8] sm:$0xff] %v2742
        %2871 = vst [vmem:[%s199 + $0xf0] sm:$0xff] %v2743
        %2872 = vst [vmem:[%s199 + $0xf8] sm:$0xff] %v2744
        %2873 = vst [vmem:[%s199 + $0x100] sm:$0xff] %v2745
        %2874 = vst [vmem:[%s199 + $0x108] sm:$0xff] %v2746
        %2875 = vst [vmem:[%s199 + $0x110] sm:$0xff] %v2747
        %2876 = vst [vmem:[%s199 + $0x118] sm:$0xff] %v2748
        %2877 = vst [vmem:[%s199 + $0x120] sm:$0xff] %v2749
        %2878 = vst [vmem:[%s199 + $0x128] sm:$0xff] %v2750
        %2879 = vst [vmem:[%s199 + $0x130] sm:$0xff] %v2751
        %2880 = vst [vmem:[%s199 + $0x138] sm:$0xff] %v2752
        %2881 = vst [vmem:[%s199 + $0x140] sm:$0xff] %v2753
        %2882 = vst [vmem:[%s199 + $0x148] sm:$0xff] %v2754
        %2883 = vst [vmem:[%s199 + $0x150] sm:$0xff] %v2755
        %2884 = vst [vmem:[%s199 + $0x158] sm:$0xff] %v2756
        %2885 = vst [vmem:[%s199 + $0x160] sm:$0xff] %v2757
        %2886 = vst [vmem:[%s199 + $0x168] sm:$0xff] %v2758
        %2887 = vst [vmem:[%s199 + $0x170] sm:$0xff] %v2759
        %2888 = vst [vmem:[%s199 + $0x178] sm:$0xff] %v2760
        %2889 = vst [vmem:[%s199 + $0x180] sm:$0xff] %v2761
        %2890 = vst [vmem:[%s199 + $0x188] sm:$0xff] %v2762
        %2891 = vst [vmem:[%s199 + $0x190] sm:$0xff] %v2763
        %2892 = vst [vmem:[%s199 + $0x198] sm:$0xff] %v2764
        %2893 = vst [vmem:[%s199 + $0x1a0] sm:$0xff] %v2765
        %2894 = vst [vmem:[%s199 + $0x1a8] sm:$0xff] %v2766
        %2895 = vst [vmem:[%s199 + $0x1b0] sm:$0xff] %v2767
        %2896 = vst [vmem:[%s199 + $0x1b8] sm:$0xff] %v2768
        %2897 = vst [vmem:[%s199 + $0x1c0] sm:$0xff] %v2769
        %2898 = vst [vmem:[%s199 + $0x1c8] sm:$0xff] %v2770
        %2899 = vst [vmem:[%s199 + $0x1d0] sm:$0xff] %v2771
        %2900 = vst [vmem:[%s199 + $0x1d8] sm:$0xff] %v2772
        %2901 = vst [vmem:[%s199 + $0x1e0] sm:$0xff] %v2773
        %2902 = vst [vmem:[%s199 + $0x1e8] sm:$0xff] %v2774
        %2903 = vst [vmem:[%s199 + $0x1f0] sm:$0xff] %v2775
        %2904 = vst [vmem:[%s199 + $0x1f8] sm:$0xff] %v2776
        %2905 = vst [vmem:[%s199 + $0x200] sm:$0xff] %v2777
        %2906 = vst [vmem:[%s199 + $0x208] sm:$0xff] %v2778
        %2907 = vst [vmem:[%s199 + $0x210] sm:$0xff] %v2779
        %2908 = vst [vmem:[%s199 + $0x218] sm:$0xff] %v2780
        %2909 = vst [vmem:[%s199 + $0x220] sm:$0xff] %v2781
        %2910 = vst [vmem:[%s199 + $0x228] sm:$0xff] %v2782
        %2911 = vst [vmem:[%s199 + $0x230] sm:$0xff] %v2783
        %2912 = vst [vmem:[%s199 + $0x238] sm:$0xff] %v2784
        %2913 = vst [vmem:[%s199 + $0x240] sm:$0xff] %v2785
        %2914 = vst [vmem:[%s199 + $0x248] sm:$0xff] %v2786
        %2915 = vst [vmem:[%s199 + $0x250] sm:$0xff] %v2787
        %2916 = vst [vmem:[%s199 + $0x258] sm:$0xff] %v2788
        %2917 = vst [vmem:[%s199 + $0x260] sm:$0xff] %v2789
        %2918 = vst [vmem:[%s199 + $0x268] sm:$0xff] %v2790
        %2919 = vst [vmem:[%s199 + $0x270] sm:$0xff] %v2791
        %2920 = vst [vmem:[%s199 + $0x278] sm:$0xff] %v2792
        %2921 = vst [vmem:[%s199 + $0x280] sm:$0xff] %v2793
        %2922 = vst [vmem:[%s199 + $0x288] sm:$0xff] %v2794
        %2923 = vst [vmem:[%s199 + $0x290] sm:$0xff] %v2795
        %2924 = vst [vmem:[%s199 + $0x298] sm:$0xff] %v2796
        %2925 = vst [vmem:[%s199 + $0x2a0] sm:$0xff] %v2797
        %2926 = vst [vmem:[%s199 + $0x2a8] sm:$0xff] %v2798
        %2927 = vst [vmem:[%s199 + $0x2b0] sm:$0xff] %v2799
        %2928 = vst [vmem:[%s199 + $0x2b8] sm:$0xff] %v2800
        %2929 = vst [vmem:[%s199 + $0x2c0] sm:$0xff] %v2801
        %2930 = vst [vmem:[%s199 + $0x2c8] sm:$0xff] %v2802
        %2931 = vst [vmem:[%s199 + $0x2d0] sm:$0xff] %v2803
        %2932 = vst [vmem:[%s199 + $0x2d8] sm:$0xff] %v2804
        %2933 = vst [vmem:[%s199 + $0x2e0] sm:$0xff] %v2805
        %2934 = vst [vmem:[%s199 + $0x2e8] sm:$0xff] %v2806
        %2935 = vst [vmem:[%s199 + $0x2f0] sm:$0xff] %v2807
        %2936 = vst [vmem:[%s199 + $0x2f8] sm:$0xff] %v2808
        %2937 = vst [vmem:[%s199 + $0x300] sm:$0xff] %v2809
        %2938 = vst [vmem:[%s199 + $0x308] sm:$0xff] %v2810
        %2939 = vst [vmem:[%s199 + $0x310] sm:$0xff] %v2811
        %2940 = vst [vmem:[%s199 + $0x318] sm:$0xff] %v2812
        %2941 = vst [vmem:[%s199 + $0x320] sm:$0xff] %v2813
        %2942 = vst [vmem:[%s199 + $0x328] sm:$0xff] %v2814
        %2943 = vst [vmem:[%s199 + $0x330] sm:$0xff] %v2815
        %2944 = vst [vmem:[%s199 + $0x338] sm:$0xff] %v2816
        %2945 = vst [vmem:[%s199 + $0x340] sm:$0xff] %v2817
        %2946 = vst [vmem:[%s199 + $0x348] sm:$0xff] %v2818
        %2947 = vst [vmem:[%s199 + $0x350] sm:$0xff] %v2819
        %2948 = vst [vmem:[%s199 + $0x358] sm:$0xff] %v2820
        %2949 = vst [vmem:[%s199 + $0x360] sm:$0xff] %v2821
        %2950 = vst [vmem:[%s199 + $0x368] sm:$0xff] %v2822
        %2951 = vst [vmem:[%s199 + $0x370] sm:$0xff] %v2823
        %2952 = vst [vmem:[%s199 + $0x378] sm:$0xff] %v2824
        %2953 = vst [vmem:[%s199 + $0x380] sm:$0xff] %v2825
        %2954 = vst [vmem:[%s199 + $0x388] sm:$0xff] %v2826
        %2955 = vst [vmem:[%s199 + $0x390] sm:$0xff] %v2827
        %2956 = vst [vmem:[%s199 + $0x398] sm:$0xff] %v2828
        %2957 = vst [vmem:[%s199 + $0x3a0] sm:$0xff] %v2829
        %2958 = vst [vmem:[%s199 + $0x3a8] sm:$0xff] %v2830
        %2959 = vst [vmem:[%s199 + $0x3b0] sm:$0xff] %v2831
        %2960 = vst [vmem:[%s199 + $0x3b8] sm:$0xff] %v2832
        %2961 = vst [vmem:[%s199 + $0x3c0] sm:$0xff] %v2833
        %2962 = vst [vmem:[%s199 + $0x3c8] sm:$0xff] %v2834
        %2963 = vst [vmem:[%s199 + $0x3d0] sm:$0xff] %v2835
        %2964 = vst [vmem:[%s199 + $0x3d8] sm:$0xff] %v2836
        %2965 = vst [vmem:[%s199 + $0x3e0] sm:$0xff] %v2837
        %2966 = vst [vmem:[%s199 + $0x3e8] sm:$0xff] %v2838
        %2967 = vst [vmem:[%s199 + $0x3f0] sm:$0xff] %v2839
        %2968 = vst [vmem:[%s199 + $0x3f8] sm:$0xff] %v2840
        %s2969 = sand.u32 %s112, 1
        %s2970 = sand.u32 %s112, 1
        %s2971 = smul.addr %s2970, 1024
        %s2972 = scalar_lea.vmem [#allocation2], %s2971
        // Predicated region
        $region37: #{_lambda_.1} parent=35 // pred_check
          %p2973 = pneg %p122
        $region38: #{_lambda_.1} parent=35 // pred_check_branch
          %2975 = sbr.rel (%p2973) target = $region40
        $region39: #{_lambda_.1} parent=35 // pred_region
          %s2976 = smul.u32 128, %s15
          %s2977 = ssub.s32 313, %s2976
          %p2978 = scmp.lt.s32.totalorder %s2977, 128
          %s2979 = scalar_select %p2978, %s2977, 128
          %s2980 = smul.u32 128, %s2979
          %p2981 = scmp.ne.s32.totalorder 0, %s2980
          %s2982 = smul.addr %s2976, 8
          %s2983 = scalar_lea.vmem %s4, %s2982
          // Predicated region
          $region41: #{_lambda_.1} parent=39 // pred_check
            %p2984 = pneg %p2981
          $region42: #{_lambda_.1} parent=39 // pred_check_branch
            %2986 = sbr.rel (%p2984) target = $region44
          $region43: #{_lambda_.1} parent=39 // pred_region
            // Predicated region
            $region45: #{_lambda_.1} parent=43 // pred_check
              _
            $region46: #{_lambda_.1} parent=43 // pred_check_branch
              %2988 = sbr.rel (0) target = $region48
            $region47: #{_lambda_.1} parent=43 // pred_region
              // Predicated region
              $region67: #{_lambda_.1} parent=47 // pred_check
                _
              $region68: #{_lambda_.1} parent=47 // pred_check_branch
                %3163 = sbr.rel (0) target = $region70
              $region69: #{_lambda_.1} parent=47 // pred_region
                %s3164 = sshrl.u32 %s2979, 6
                // While loop
                $region71: #{_lambda_.1} parent=69 // loop_pre_header
                  _
                $region72: #{_lambda_.1} parent=69 // loop_header
                  %s3166 = sphi 0, %s3168
                  %p3167 = scmp.ge.s32.totalorder %s3166, %s3164
                  %s3171 = sphi 0, %s3304
                  %s3172 = sphi %s2972, %s3307
                  %s3173 = sphi %s2983, %s3308
                $region73: #{_lambda_.1} parent=69 // loop_header_branch
                  %3170 = sbr.rel (%p3167) target = $region77
                $region74: #{_lambda_.1} parent=69 // loop_body
                  %v3174 = vld [vmem:[%s3172] sm:$0xff]
                  %3175 = vst [vmem:[%s3173] sm:$0xff] %v3174
                  %v3176 = vld [vmem:[%s3172 + $0x8] sm:$0xff]
                  %3177 = vst [vmem:[%s3173 + $0x8] sm:$0xff] %v3176
                  %v3178 = vld [vmem:[%s3172 + $0x10] sm:$0xff]
                  %3179 = vst [vmem:[%s3173 + $0x10] sm:$0xff] %v3178
                  %v3180 = vld [vmem:[%s3172 + $0x18] sm:$0xff]
                  %3181 = vst [vmem:[%s3173 + $0x18] sm:$0xff] %v3180
                  %v3182 = vld [vmem:[%s3172 + $0x20] sm:$0xff]
                  %3183 = vst [vmem:[%s3173 + $0x20] sm:$0xff] %v3182
                  %v3184 = vld [vmem:[%s3172 + $0x28] sm:$0xff]
                  %3185 = vst [vmem:[%s3173 + $0x28] sm:$0xff] %v3184
                  %v3186 = vld [vmem:[%s3172 + $0x30] sm:$0xff]
                  %3187 = vst [vmem:[%s3173 + $0x30] sm:$0xff] %v3186
                  %v3188 = vld [vmem:[%s3172 + $0x38] sm:$0xff]
                  %3189 = vst [vmem:[%s3173 + $0x38] sm:$0xff] %v3188
                  %v3190 = vld [vmem:[%s3172 + $0x40] sm:$0xff]
                  %3191 = vst [vmem:[%s3173 + $0x40] sm:$0xff] %v3190
                  %v3192 = vld [vmem:[%s3172 + $0x48] sm:$0xff]
                  %3193 = vst [vmem:[%s3173 + $0x48] sm:$0xff] %v3192
                  %v3194 = vld [vmem:[%s3172 + $0x50] sm:$0xff]
                  %3195 = vst [vmem:[%s3173 + $0x50] sm:$0xff] %v3194
                  %v3196 = vld [vmem:[%s3172 + $0x58] sm:$0xff]
                  %3197 = vst [vmem:[%s3173 + $0x58] sm:$0xff] %v3196
                  %v3198 = vld [vmem:[%s3172 + $0x60] sm:$0xff]
                  %3199 = vst [vmem:[%s3173 + $0x60] sm:$0xff] %v3198
                  %v3200 = vld [vmem:[%s3172 + $0x68] sm:$0xff]
                  %3201 = vst [vmem:[%s3173 + $0x68] sm:$0xff] %v3200
                  %v3202 = vld [vmem:[%s3172 + $0x70] sm:$0xff]
                  %3203 = vst [vmem:[%s3173 + $0x70] sm:$0xff] %v3202
                  %v3204 = vld [vmem:[%s3172 + $0x78] sm:$0xff]
                  %3205 = vst [vmem:[%s3173 + $0x78] sm:$0xff] %v3204
                  %v3206 = vld [vmem:[%s3172 + $0x80] sm:$0xff]
                  %3207 = vst [vmem:[%s3173 + $0x80] sm:$0xff] %v3206
                  %v3208 = vld [vmem:[%s3172 + $0x88] sm:$0xff]
                  %3209 = vst [vmem:[%s3173 + $0x88] sm:$0xff] %v3208
                  %v3210 = vld [vmem:[%s3172 + $0x90] sm:$0xff]
                  %3211 = vst [vmem:[%s3173 + $0x90] sm:$0xff] %v3210
                  %v3212 = vld [vmem:[%s3172 + $0x98] sm:$0xff]
                  %3213 = vst [vmem:[%s3173 + $0x98] sm:$0xff] %v3212
                  %v3214 = vld [vmem:[%s3172 + $0xa0] sm:$0xff]
                  %3215 = vst [vmem:[%s3173 + $0xa0] sm:$0xff] %v3214
                  %v3216 = vld [vmem:[%s3172 + $0xa8] sm:$0xff]
                  %3217 = vst [vmem:[%s3173 + $0xa8] sm:$0xff] %v3216
                  %v3218 = vld [vmem:[%s3172 + $0xb0] sm:$0xff]
                  %3219 = vst [vmem:[%s3173 + $0xb0] sm:$0xff] %v3218
                  %v3220 = vld [vmem:[%s3172 + $0xb8] sm:$0xff]
                  %3221 = vst [vmem:[%s3173 + $0xb8] sm:$0xff] %v3220
                  %v3222 = vld [vmem:[%s3172 + $0xc0] sm:$0xff]
                  %3223 = vst [vmem:[%s3173 + $0xc0] sm:$0xff] %v3222
                  %v3224 = vld [vmem:[%s3172 + $0xc8] sm:$0xff]
                  %3225 = vst [vmem:[%s3173 + $0xc8] sm:$0xff] %v3224
                  %v3226 = vld [vmem:[%s3172 + $0xd0] sm:$0xff]
                  %3227 = vst [vmem:[%s3173 + $0xd0] sm:$0xff] %v3226
                  %v3228 = vld [vmem:[%s3172 + $0xd8] sm:$0xff]
                  %3229 = vst [vmem:[%s3173 + $0xd8] sm:$0xff] %v3228
                  %v3230 = vld [vmem:[%s3172 + $0xe0] sm:$0xff]
                  %3231 = vst [vmem:[%s3173 + $0xe0] sm:$0xff] %v3230
                  %v3232 = vld [vmem:[%s3172 + $0xe8] sm:$0xff]
                  %3233 = vst [vmem:[%s3173 + $0xe8] sm:$0xff] %v3232
                  %v3234 = vld [vmem:[%s3172 + $0xf0] sm:$0xff]
                  %3235 = vst [vmem:[%s3173 + $0xf0] sm:$0xff] %v3234
                  %v3236 = vld [vmem:[%s3172 + $0xf8] sm:$0xff]
                  %3237 = vst [vmem:[%s3173 + $0xf8] sm:$0xff] %v3236
                  %v3238 = vld [vmem:[%s3172 + $0x100] sm:$0xff]
                  %3239 = vst [vmem:[%s3173 + $0x100] sm:$0xff] %v3238
                  %v3240 = vld [vmem:[%s3172 + $0x108] sm:$0xff]
                  %3241 = vst [vmem:[%s3173 + $0x108] sm:$0xff] %v3240
                  %v3242 = vld [vmem:[%s3172 + $0x110] sm:$0xff]
                  %3243 = vst [vmem:[%s3173 + $0x110] sm:$0xff] %v3242
                  %v3244 = vld [vmem:[%s3172 + $0x118] sm:$0xff]
                  %3245 = vst [vmem:[%s3173 + $0x118] sm:$0xff] %v3244
                  %v3246 = vld [vmem:[%s3172 + $0x120] sm:$0xff]
                  %3247 = vst [vmem:[%s3173 + $0x120] sm:$0xff] %v3246
                  %v3248 = vld [vmem:[%s3172 + $0x128] sm:$0xff]
                  %3249 = vst [vmem:[%s3173 + $0x128] sm:$0xff] %v3248
                  %v3250 = vld [vmem:[%s3172 + $0x130] sm:$0xff]
                  %3251 = vst [vmem:[%s3173 + $0x130] sm:$0xff] %v3250
                  %v3252 = vld [vmem:[%s3172 + $0x138] sm:$0xff]
                  %3253 = vst [vmem:[%s3173 + $0x138] sm:$0xff] %v3252
                  %v3254 = vld [vmem:[%s3172 + $0x140] sm:$0xff]
                  %3255 = vst [vmem:[%s3173 + $0x140] sm:$0xff] %v3254
                  %v3256 = vld [vmem:[%s3172 + $0x148] sm:$0xff]
                  %3257 = vst [vmem:[%s3173 + $0x148] sm:$0xff] %v3256
                  %v3258 = vld [vmem:[%s3172 + $0x150] sm:$0xff]
                  %3259 = vst [vmem:[%s3173 + $0x150] sm:$0xff] %v3258
                  %v3260 = vld [vmem:[%s3172 + $0x158] sm:$0xff]
                  %3261 = vst [vmem:[%s3173 + $0x158] sm:$0xff] %v3260
                  %v3262 = vld [vmem:[%s3172 + $0x160] sm:$0xff]
                  %3263 = vst [vmem:[%s3173 + $0x160] sm:$0xff] %v3262
                  %v3264 = vld [vmem:[%s3172 + $0x168] sm:$0xff]
                  %3265 = vst [vmem:[%s3173 + $0x168] sm:$0xff] %v3264
                  %v3266 = vld [vmem:[%s3172 + $0x170] sm:$0xff]
                  %3267 = vst [vmem:[%s3173 + $0x170] sm:$0xff] %v3266
                  %v3268 = vld [vmem:[%s3172 + $0x178] sm:$0xff]
                  %3269 = vst [vmem:[%s3173 + $0x178] sm:$0xff] %v3268
                  %v3270 = vld [vmem:[%s3172 + $0x180] sm:$0xff]
                  %3271 = vst [vmem:[%s3173 + $0x180] sm:$0xff] %v3270
                  %v3272 = vld [vmem:[%s3172 + $0x188] sm:$0xff]
                  %3273 = vst [vmem:[%s3173 + $0x188] sm:$0xff] %v3272
                  %v3274 = vld [vmem:[%s3172 + $0x190] sm:$0xff]
                  %3275 = vst [vmem:[%s3173 + $0x190] sm:$0xff] %v3274
                  %v3276 = vld [vmem:[%s3172 + $0x198] sm:$0xff]
                  %3277 = vst [vmem:[%s3173 + $0x198] sm:$0xff] %v3276
                  %v3278 = vld [vmem:[%s3172 + $0x1a0] sm:$0xff]
                  %3279 = vst [vmem:[%s3173 + $0x1a0] sm:$0xff] %v3278
                  %v3280 = vld [vmem:[%s3172 + $0x1a8] sm:$0xff]
                  %3281 = vst [vmem:[%s3173 + $0x1a8] sm:$0xff] %v3280
                  %v3282 = vld [vmem:[%s3172 + $0x1b0] sm:$0xff]
                  %3283 = vst [vmem:[%s3173 + $0x1b0] sm:$0xff] %v3282
                  %v3284 = vld [vmem:[%s3172 + $0x1b8] sm:$0xff]
                  %3285 = vst [vmem:[%s3173 + $0x1b8] sm:$0xff] %v3284
                  %v3286 = vld [vmem:[%s3172 + $0x1c0] sm:$0xff]
                  %3287 = vst [vmem:[%s3173 + $0x1c0] sm:$0xff] %v3286
                  %v3288 = vld [vmem:[%s3172 + $0x1c8] sm:$0xff]
                  %3289 = vst [vmem:[%s3173 + $0x1c8] sm:$0xff] %v3288
                  %v3290 = vld [vmem:[%s3172 + $0x1d0] sm:$0xff]
                  %3291 = vst [vmem:[%s3173 + $0x1d0] sm:$0xff] %v3290
                  %v3292 = vld [vmem:[%s3172 + $0x1d8] sm:$0xff]
                  %3293 = vst [vmem:[%s3173 + $0x1d8] sm:$0xff] %v3292
                  %v3294 = vld [vmem:[%s3172 + $0x1e0] sm:$0xff]
                  %3295 = vst [vmem:[%s3173 + $0x1e0] sm:$0xff] %v3294
                  %v3296 = vld [vmem:[%s3172 + $0x1e8] sm:$0xff]
                  %3297 = vst [vmem:[%s3173 + $0x1e8] sm:$0xff] %v3296
                  %v3298 = vld [vmem:[%s3172 + $0x1f0] sm:$0xff]
                  %3299 = vst [vmem:[%s3173 + $0x1f0] sm:$0xff] %v3298
                  %v3300 = vld [vmem:[%s3172 + $0x1f8] sm:$0xff]
                  %3301 = vst [vmem:[%s3173 + $0x1f8] sm:$0xff] %v3300
                  %s3302 = sadd.s32 1, %s3171
                  %p3303 = scmp.ge.s32.totalorder %s3302, %s3164
                  %s3304 = scalar_select %p3303, 0, %s3302
                  %s3305 = smul.u32 %s3304, 512
                  %s3306 = smul.u32 %s3304, 512
                  %s3307 = scalar_lea.vmem %s2972, %s3305 [#allocation2]
                  %s3308 = scalar_lea.vmem %s2983, %s3306
                $region75: #{_lambda_.1} parent=69 // loop_footer
                  %s3168 = sadd.s32 %s3166, 1
                $region76: #{_lambda_.1} parent=69 // loop_footer_branch
                  %3165 = sbr.rel target = $region72
                $region77: #{_lambda_.1} parent=69 // loop_exit
                  _
                %s3309 = sshrl.u32 %s2979, 6
                %s3310 = sand.u32 %s2979, 63
                %s3311 = smul.u32 %s3309, 64
                %s3312 = smul.u32 8, %s3311
                %s3313 = scalar_lea.vmem %s2972, %s3312 [#allocation2]
                %s3314 = smul.u32 8, %s3311
                %s3315 = scalar_lea.vmem %s2983, %s3314
                // While loop
                $region78: #{_lambda_.1} parent=69 // loop_pre_header
                  _
                $region79: #{_lambda_.1} parent=69 // loop_header
                  %s3317 = sphi 0, %s3319
                  %p3318 = scmp.ge.s32.totalorder %s3317, %s3310
                  %s3322 = sphi 0, %s3329
                  %s3323 = sphi %s3313, %s3332
                  %s3324 = sphi %s3315, %s3333
                $region80: #{_lambda_.1} parent=69 // loop_header_branch
                  %3321 = sbr.rel (%p3318) target = $region84
                $region81: #{_lambda_.1} parent=69 // loop_body
                  %v3325 = vld [vmem:[%s3323] sm:$0xff]
                  %3326 = vst [vmem:[%s3324] sm:$0xff] %v3325
                  %s3327 = sadd.s32 1, %s3322
                  %p3328 = scmp.ge.s32.totalorder %s3327, %s3310
                  %s3329 = scalar_select %p3328, 0, %s3327
                  %s3330 = smul.u32 %s3329, 8
                  %s3331 = smul.u32 %s3329, 8
                  %s3332 = scalar_lea.vmem %s3313, %s3330 [#allocation2]
                  %s3333 = scalar_lea.vmem %s3315, %s3331
                $region82: #{_lambda_.1} parent=69 // loop_footer
                  %s3319 = sadd.s32 %s3317, 1
                $region83: #{_lambda_.1} parent=69 // loop_footer_branch
                  %3316 = sbr.rel target = $region79
                $region84: #{_lambda_.1} parent=69 // loop_exit
                  _
              $region70: #{_lambda_.1} parent=47 // pred_fallthru
                _
              // Predicated region
              $region85: #{_lambda_.1} parent=47 // pred_check
                _
              $region86: #{_lambda_.1} parent=47 // pred_check_branch
                %3335 = sbr.rel target = $region88
              $region87: #{_lambda_.1} parent=47 // pred_region
                _
              $region88: #{_lambda_.1} parent=47 // pred_fallthru
                _
            $region48: #{_lambda_.1} parent=43 // pred_fallthru
              _
            // Predicated region
            $region49: #{_lambda_.1} parent=43 // pred_check
              _
            $region50: #{_lambda_.1} parent=43 // pred_check_branch
              %2990 = sbr.rel target = $region52
            $region51: #{_lambda_.1} parent=43 // pred_region
              %s2992 = sshrl.u32 %s2979, 6
              // While loop
              $region53: #{_lambda_.1} parent=51 // loop_pre_header
                _
              $region54: #{_lambda_.1} parent=51 // loop_header
                %s2994 = sphi 0, %s2996
                %p2995 = scmp.ge.s32.totalorder %s2994, %s2992
                %s2999 = sphi 0, %s3132
                %s3000 = sphi %s2972, %s3135
                %s3001 = sphi %s2983, %s3136
              $region55: #{_lambda_.1} parent=51 // loop_header_branch
                %2998 = sbr.rel (%p2995) target = $region59
              $region56: #{_lambda_.1} parent=51 // loop_body
                %v3002 = vld [vmem:[%s3000] sm:$0xff]
                %3003 = vst [vmem:[%s3001] sm:$0xff] %v3002
                %v3004 = vld [vmem:[%s3000 + $0x8] sm:$0xff]
                %3005 = vst [vmem:[%s3001 + $0x8] sm:$0xff] %v3004
                %v3006 = vld [vmem:[%s3000 + $0x10] sm:$0xff]
                %3007 = vst [vmem:[%s3001 + $0x10] sm:$0xff] %v3006
                %v3008 = vld [vmem:[%s3000 + $0x18] sm:$0xff]
                %3009 = vst [vmem:[%s3001 + $0x18] sm:$0xff] %v3008
                %v3010 = vld [vmem:[%s3000 + $0x20] sm:$0xff]
                %3011 = vst [vmem:[%s3001 + $0x20] sm:$0xff] %v3010
                %v3012 = vld [vmem:[%s3000 + $0x28] sm:$0xff]
                %3013 = vst [vmem:[%s3001 + $0x28] sm:$0xff] %v3012
                %v3014 = vld [vmem:[%s3000 + $0x30] sm:$0xff]
                %3015 = vst [vmem:[%s3001 + $0x30] sm:$0xff] %v3014
                %v3016 = vld [vmem:[%s3000 + $0x38] sm:$0xff]
                %3017 = vst [vmem:[%s3001 + $0x38] sm:$0xff] %v3016
                %v3018 = vld [vmem:[%s3000 + $0x40] sm:$0xff]
                %3019 = vst [vmem:[%s3001 + $0x40] sm:$0xff] %v3018
                %v3020 = vld [vmem:[%s3000 + $0x48] sm:$0xff]
                %3021 = vst [vmem:[%s3001 + $0x48] sm:$0xff] %v3020
                %v3022 = vld [vmem:[%s3000 + $0x50] sm:$0xff]
                %3023 = vst [vmem:[%s3001 + $0x50] sm:$0xff] %v3022
                %v3024 = vld [vmem:[%s3000 + $0x58] sm:$0xff]
                %3025 = vst [vmem:[%s3001 + $0x58] sm:$0xff] %v3024
                %v3026 = vld [vmem:[%s3000 + $0x60] sm:$0xff]
                %3027 = vst [vmem:[%s3001 + $0x60] sm:$0xff] %v3026
                %v3028 = vld [vmem:[%s3000 + $0x68] sm:$0xff]
                %3029 = vst [vmem:[%s3001 + $0x68] sm:$0xff] %v3028
                %v3030 = vld [vmem:[%s3000 + $0x70] sm:$0xff]
                %3031 = vst [vmem:[%s3001 + $0x70] sm:$0xff] %v3030
                %v3032 = vld [vmem:[%s3000 + $0x78] sm:$0xff]
                %3033 = vst [vmem:[%s3001 + $0x78] sm:$0xff] %v3032
                %v3034 = vld [vmem:[%s3000 + $0x80] sm:$0xff]
                %3035 = vst [vmem:[%s3001 + $0x80] sm:$0xff] %v3034
                %v3036 = vld [vmem:[%s3000 + $0x88] sm:$0xff]
                %3037 = vst [vmem:[%s3001 + $0x88] sm:$0xff] %v3036
                %v3038 = vld [vmem:[%s3000 + $0x90] sm:$0xff]
                %3039 = vst [vmem:[%s3001 + $0x90] sm:$0xff] %v3038
                %v3040 = vld [vmem:[%s3000 + $0x98] sm:$0xff]
                %3041 = vst [vmem:[%s3001 + $0x98] sm:$0xff] %v3040
                %v3042 = vld [vmem:[%s3000 + $0xa0] sm:$0xff]
                %3043 = vst [vmem:[%s3001 + $0xa0] sm:$0xff] %v3042
                %v3044 = vld [vmem:[%s3000 + $0xa8] sm:$0xff]
                %3045 = vst [vmem:[%s3001 + $0xa8] sm:$0xff] %v3044
                %v3046 = vld [vmem:[%s3000 + $0xb0] sm:$0xff]
                %3047 = vst [vmem:[%s3001 + $0xb0] sm:$0xff] %v3046
                %v3048 = vld [vmem:[%s3000 + $0xb8] sm:$0xff]
                %3049 = vst [vmem:[%s3001 + $0xb8] sm:$0xff] %v3048
                %v3050 = vld [vmem:[%s3000 + $0xc0] sm:$0xff]
                %3051 = vst [vmem:[%s3001 + $0xc0] sm:$0xff] %v3050
                %v3052 = vld [vmem:[%s3000 + $0xc8] sm:$0xff]
                %3053 = vst [vmem:[%s3001 + $0xc8] sm:$0xff] %v3052
                %v3054 = vld [vmem:[%s3000 + $0xd0] sm:$0xff]
                %3055 = vst [vmem:[%s3001 + $0xd0] sm:$0xff] %v3054
                %v3056 = vld [vmem:[%s3000 + $0xd8] sm:$0xff]
                %3057 = vst [vmem:[%s3001 + $0xd8] sm:$0xff] %v3056
                %v3058 = vld [vmem:[%s3000 + $0xe0] sm:$0xff]
                %3059 = vst [vmem:[%s3001 + $0xe0] sm:$0xff] %v3058
                %v3060 = vld [vmem:[%s3000 + $0xe8] sm:$0xff]
                %3061 = vst [vmem:[%s3001 + $0xe8] sm:$0xff] %v3060
                %v3062 = vld [vmem:[%s3000 + $0xf0] sm:$0xff]
                %3063 = vst [vmem:[%s3001 + $0xf0] sm:$0xff] %v3062
                %v3064 = vld [vmem:[%s3000 + $0xf8] sm:$0xff]
                %3065 = vst [vmem:[%s3001 + $0xf8] sm:$0xff] %v3064
                %v3066 = vld [vmem:[%s3000 + $0x100] sm:$0xff]
                %3067 = vst [vmem:[%s3001 + $0x100] sm:$0xff] %v3066
                %v3068 = vld [vmem:[%s3000 + $0x108] sm:$0xff]
                %3069 = vst [vmem:[%s3001 + $0x108] sm:$0xff] %v3068
                %v3070 = vld [vmem:[%s3000 + $0x110] sm:$0xff]
                %3071 = vst [vmem:[%s3001 + $0x110] sm:$0xff] %v3070
                %v3072 = vld [vmem:[%s3000 + $0x118] sm:$0xff]
                %3073 = vst [vmem:[%s3001 + $0x118] sm:$0xff] %v3072
                %v3074 = vld [vmem:[%s3000 + $0x120] sm:$0xff]
                %3075 = vst [vmem:[%s3001 + $0x120] sm:$0xff] %v3074
                %v3076 = vld [vmem:[%s3000 + $0x128] sm:$0xff]
                %3077 = vst [vmem:[%s3001 + $0x128] sm:$0xff] %v3076
                %v3078 = vld [vmem:[%s3000 + $0x130] sm:$0xff]
                %3079 = vst [vmem:[%s3001 + $0x130] sm:$0xff] %v3078
                %v3080 = vld [vmem:[%s3000 + $0x138] sm:$0xff]
                %3081 = vst [vmem:[%s3001 + $0x138] sm:$0xff] %v3080
                %v3082 = vld [vmem:[%s3000 + $0x140] sm:$0xff]
                %3083 = vst [vmem:[%s3001 + $0x140] sm:$0xff] %v3082
                %v3084 = vld [vmem:[%s3000 + $0x148] sm:$0xff]
                %3085 = vst [vmem:[%s3001 + $0x148] sm:$0xff] %v3084
                %v3086 = vld [vmem:[%s3000 + $0x150] sm:$0xff]
                %3087 = vst [vmem:[%s3001 + $0x150] sm:$0xff] %v3086
                %v3088 = vld [vmem:[%s3000 + $0x158] sm:$0xff]
                %3089 = vst [vmem:[%s3001 + $0x158] sm:$0xff] %v3088
                %v3090 = vld [vmem:[%s3000 + $0x160] sm:$0xff]
                %3091 = vst [vmem:[%s3001 + $0x160] sm:$0xff] %v3090
                %v3092 = vld [vmem:[%s3000 + $0x168] sm:$0xff]
                %3093 = vst [vmem:[%s3001 + $0x168] sm:$0xff] %v3092
                %v3094 = vld [vmem:[%s3000 + $0x170] sm:$0xff]
                %3095 = vst [vmem:[%s3001 + $0x170] sm:$0xff] %v3094
                %v3096 = vld [vmem:[%s3000 + $0x178] sm:$0xff]
                %3097 = vst [vmem:[%s3001 + $0x178] sm:$0xff] %v3096
                %v3098 = vld [vmem:[%s3000 + $0x180] sm:$0xff]
                %3099 = vst [vmem:[%s3001 + $0x180] sm:$0xff] %v3098
                %v3100 = vld [vmem:[%s3000 + $0x188] sm:$0xff]
                %3101 = vst [vmem:[%s3001 + $0x188] sm:$0xff] %v3100
                %v3102 = vld [vmem:[%s3000 + $0x190] sm:$0xff]
                %3103 = vst [vmem:[%s3001 + $0x190] sm:$0xff] %v3102
                %v3104 = vld [vmem:[%s3000 + $0x198] sm:$0xff]
                %3105 = vst [vmem:[%s3001 + $0x198] sm:$0xff] %v3104
                %v3106 = vld [vmem:[%s3000 + $0x1a0] sm:$0xff]
                %3107 = vst [vmem:[%s3001 + $0x1a0] sm:$0xff] %v3106
                %v3108 = vld [vmem:[%s3000 + $0x1a8] sm:$0xff]
                %3109 = vst [vmem:[%s3001 + $0x1a8] sm:$0xff] %v3108
                %v3110 = vld [vmem:[%s3000 + $0x1b0] sm:$0xff]
                %3111 = vst [vmem:[%s3001 + $0x1b0] sm:$0xff] %v3110
                %v3112 = vld [vmem:[%s3000 + $0x1b8] sm:$0xff]
                %3113 = vst [vmem:[%s3001 + $0x1b8] sm:$0xff] %v3112
                %v3114 = vld [vmem:[%s3000 + $0x1c0] sm:$0xff]
                %3115 = vst [vmem:[%s3001 + $0x1c0] sm:$0xff] %v3114
                %v3116 = vld [vmem:[%s3000 + $0x1c8] sm:$0xff]
                %3117 = vst [vmem:[%s3001 + $0x1c8] sm:$0xff] %v3116
                %v3118 = vld [vmem:[%s3000 + $0x1d0] sm:$0xff]
                %3119 = vst [vmem:[%s3001 + $0x1d0] sm:$0xff] %v3118
                %v3120 = vld [vmem:[%s3000 + $0x1d8] sm:$0xff]
                %3121 = vst [vmem:[%s3001 + $0x1d8] sm:$0xff] %v3120
                %v3122 = vld [vmem:[%s3000 + $0x1e0] sm:$0xff]
                %3123 = vst [vmem:[%s3001 + $0x1e0] sm:$0xff] %v3122
                %v3124 = vld [vmem:[%s3000 + $0x1e8] sm:$0xff]
                %3125 = vst [vmem:[%s3001 + $0x1e8] sm:$0xff] %v3124
                %v3126 = vld [vmem:[%s3000 + $0x1f0] sm:$0xff]
                %3127 = vst [vmem:[%s3001 + $0x1f0] sm:$0xff] %v3126
                %v3128 = vld [vmem:[%s3000 + $0x1f8] sm:$0xff]
                %3129 = vst [vmem:[%s3001 + $0x1f8] sm:$0xff] %v3128
                %s3130 = sadd.s32 1, %s2999
                %p3131 = scmp.ge.s32.totalorder %s3130, %s2992
                %s3132 = scalar_select %p3131, 0, %s3130
                %s3133 = smul.u32 %s3132, 512
                %s3134 = smul.u32 %s3132, 512
                %s3135 = scalar_lea.vmem %s2972, %s3133 [#allocation2]
                %s3136 = scalar_lea.vmem %s2983, %s3134
              $region57: #{_lambda_.1} parent=51 // loop_footer
                %s2996 = sadd.s32 %s2994, 1
              $region58: #{_lambda_.1} parent=51 // loop_footer_branch
                %2993 = sbr.rel target = $region54
              $region59: #{_lambda_.1} parent=51 // loop_exit
                _
              %s3137 = sshrl.u32 %s2979, 6
              %s3138 = sand.u32 %s2979, 63
              %s3139 = smul.u32 %s3137, 64
              %s3140 = smul.u32 8, %s3139
              %s3141 = scalar_lea.vmem %s2972, %s3140 [#allocation2]
              %s3142 = smul.u32 8, %s3139
              %s3143 = scalar_lea.vmem %s2983, %s3142
              // While loop
              $region60: #{_lambda_.1} parent=51 // loop_pre_header
                _
              $region61: #{_lambda_.1} parent=51 // loop_header
                %s3145 = sphi 0, %s3147
                %p3146 = scmp.ge.s32.totalorder %s3145, %s3138
                %s3150 = sphi 0, %s3157
                %s3151 = sphi %s3141, %s3160
                %s3152 = sphi %s3143, %s3161
              $region62: #{_lambda_.1} parent=51 // loop_header_branch
                %3149 = sbr.rel (%p3146) target = $region66
              $region63: #{_lambda_.1} parent=51 // loop_body
                %v3153 = vld [vmem:[%s3151] sm:$0xff]
                %3154 = vst [vmem:[%s3152] sm:$0xff] %v3153
                %s3155 = sadd.s32 1, %s3150
                %p3156 = scmp.ge.s32.totalorder %s3155, %s3138
                %s3157 = scalar_select %p3156, 0, %s3155
                %s3158 = smul.u32 %s3157, 8
                %s3159 = smul.u32 %s3157, 8
                %s3160 = scalar_lea.vmem %s3141, %s3158 [#allocation2]
                %s3161 = scalar_lea.vmem %s3143, %s3159
              $region64: #{_lambda_.1} parent=51 // loop_footer
                %s3147 = sadd.s32 %s3145, 1
              $region65: #{_lambda_.1} parent=51 // loop_footer_branch
                %3144 = sbr.rel target = $region61
              $region66: #{_lambda_.1} parent=51 // loop_exit
                _
            $region52: #{_lambda_.1} parent=43 // pred_fallthru
              _
          $region44: #{_lambda_.1} parent=39 // pred_fallthru
            _
          %3336 = vnop
        $region40: #{_lambda_.1} parent=35 // pred_fallthru
          _
      $region36: #{_lambda_.1} parent=5 // pred_fallthru
        _
      %p3337 = scmp.le.s32.totalorder 2, %s10
      // Predicated region
      $region89: #{_lambda_.1} parent=5 // pred_check
        %p3338 = pneg %p3337
      $region90: #{_lambda_.1} parent=5 // pred_check_branch
        %3340 = sbr.rel (%p3338) target = $region92
      $region91: #{_lambda_.1} parent=5 // pred_region
        %s3341 = ssub.s32 %s10, 2
        // Predicated region
        $region93: #{_lambda_.1} parent=91 // pred_check
          %p3342 = pneg %p128
        $region94: #{_lambda_.1} parent=91 // pred_check_branch
          %3344 = sbr.rel (%p3342) target = $region96
        $region95: #{_lambda_.1} parent=91 // pred_region
          %s3345 = sand.u32 %s113, 1
          %s3346 = sand.u32 %s113, 1
          %s3347 = smul.addr %s3346, 1024
          %s3348 = scalar_lea.vmem [#allocation2], %s3347
        $region96: #{_lambda_.1} parent=91 // pred_fallthru
          _
      $region92: #{_lambda_.1} parent=5 // pred_fallthru
        _
    $region6: #{_lambda_.1} parent=1 // loop_footer
      %s14 = sadd.s32 1, %s10
    $region7: #{_lambda_.1} parent=1 // loop_footer_branch
      %9 = sbr.rel target = $region3
    $region8: #{_lambda_.1} parent=1 // loop_exit
      _

</llo_original>
